<compile_context>
chip_gen: v7x
topology: tpu7x:2x2x1
jax: 0.10.0
libtpu: 0.0.40
codegen_flags: <defaults>
</compile_context>

<pallas_src>
import functools

import jax
import jax.numpy as jnp
import numpy as np
from jax.experimental import pallas as pl
from jax.experimental.pallas import tpu as pltpu

FILTER_SIZES = (2, 3, 4)
EMBED = 300
NUM_FILTERS = 256
NUM_CLASSES = 2

E_PAD = 384        # 300 rounded up to a lane multiple (128)
OUT_PAD = 128      # lane-dense logits block; real classes live at [:, :2]


def _round_up(x, m):
    return (x + m - 1) // m * m


# --------------------------------------------------------------------------- #
# Kernel
# --------------------------------------------------------------------------- #
def textcnn_kernel(emb_ref, w2_ref, w3_ref, w4_ref, bconv_ref, wfc_ref, bfc_ref,
                   out_ref, *, s_orig):
    """One batch tile per grid step.

    emb_ref   : (TB, S_pad, E_PAD)   bf16  gathered embeddings
    wK_ref    : (E_PAD, K*F)         bf16  per-filter-size fused shift weights
    bconv_ref : (1, 3*F)             f32   conv biases (order k=2,3,4)
    wfc_ref   : (3*F, OUT_PAD)       bf16  final FC weight (padded)
    bfc_ref   : (1, OUT_PAD)         f32   final FC bias (padded)
    out_ref   : (TB, OUT_PAD)        f32   logits block
    """
    TB, S_pad, E_pad = emb_ref.shape
    F = NUM_FILTERS
    flat = emb_ref[...].reshape(TB * S_pad, E_pad)

    pooled = []
    for k, w_ref in zip(FILTER_SIZES, (w2_ref, w3_ref, w4_ref)):
        L = s_orig - k + 1                       # valid conv output length
        # One MXU matmul per filter size -> only this group's f32 scores live.
        scores = jnp.dot(flat, w_ref[...], preferred_element_type=jnp.float32)
        scores = scores.reshape(TB, S_pad, k * F)
        # TODO(synk): pltpu.roll-based shift-combine would move these sublane
        # slice copies onto the XLU slot; static slices kept for simplicity.
        acc = scores[:, 0:L, 0:F]
        for i in range(1, k):
            acc = acc + scores[:, i:i + L, i * F:(i + 1) * F]
        pooled.append(jnp.max(acc, axis=1))                      # (TB, F)

    feat = jnp.concatenate(pooled, axis=-1)                      # (TB, 3F) f32
    # Bias + ReLU after the pool: max_t relu(x_t + b) == relu(max_t x_t + b).
    feat = jnp.maximum(feat + bconv_ref[...], 0.0)
    # Dropout == identity (eval mode).  Final FC in bf16, f32 accumulation.
    out_ref[...] = (jnp.dot(feat.astype(jnp.bfloat16), wfc_ref[...],
                            preferred_element_type=jnp.float32) + bfc_ref[...])


# --------------------------------------------------------------------------- #
# Tiling / VMEM heuristics
# --------------------------------------------------------------------------- #
def _vmem_capacity_bytes():
    try:
        return int(pltpu.get_tpu_info().vmem_capacity_bytes)
    except Exception:
        return 64 * 1024 * 1024        # conservative default (v7x-sized VMEM)


def _choose_batch_tile(batch, s_pad, vmem_bytes):
    # Rough per-(batch*time)-row VMEM cost inside one grid step:
    #   bf16 input block, double-buffered      : 2 * E_PAD * 2
    #   largest per-group f32 scores (k=4, 4F) : 4 * F * 4
    #   shift-combine accumulator + slice copy : 2 * F * 4
    #   headroom (retiling copies, spills)     : ~2 KiB
    per_row = 2 * E_PAD * 2 + 4 * NUM_FILTERS * 4 + 2 * NUM_FILTERS * 4 + 2048
    fixed = 4 * 1024 * 1024            # single-buffered weights, biases, outputs
    budget = max(int(vmem_bytes * 0.55) - fixed, per_row * 8 * s_pad)
    rows = min(budget // per_row, 4096)            # cap MXU M rows per step
    tb = max(8, (rows // s_pad) // 8 * 8)
    if batch >= 16:
        # Keep >= 2 grid steps so the "parallel" batch axis can be sharded
        # across both TensorCores on v7x.
        tb = min(tb, max(8, _round_up(batch, 16) // 2))
    if tb >= batch:
        return batch
    return tb


# --------------------------------------------------------------------------- #
# Forward
# --------------------------------------------------------------------------- #
@jax.jit
def textcnn_forward(tokens, kparams):
    """tokens: int32 (seq_len, batch) -- same convention as the torch module."""
    tok_bs = tokens.T                               # (B, S)
    B, S = tok_bs.shape
    assert S >= max(FILTER_SIZES), "sequence shorter than the largest filter"
    F, C = NUM_FILTERS, NUM_CLASSES

    S_pad = _round_up(S, 16)                        # bf16 sublane packing
    vmem_bytes = _vmem_capacity_bytes()
    TB = _choose_batch_tile(B, S_pad, vmem_bytes)
    B_pad = _round_up(B, TB)

    # Pad the *token ids*; the table is already padded/cast at init, so the only
    # pre-kernel pass over activations is the gather itself.
    # TODO(synk): in-kernel DMA gather (scalar-prefetched ids + pl.ANY table)
    # would remove this gather's HBM round trip as well.
    tok_pad = jnp.pad(tok_bs, ((0, B_pad - B), (0, S_pad - S)))
    emb = kparams["emb_table"][tok_pad]             # (B_pad, S_pad, E_PAD) bf16

    def const(shape):
        # Constant blocks: index never changes -> single-buffer to save VMEM.
        return pl.BlockSpec(shape, lambda b: (0,) * len(shape),
                            pipeline_mode=pl.Buffered(buffer_count=1))

    out = pl.pallas_call(
        functools.partial(textcnn_kernel, s_orig=S),
        out_shape=jax.ShapeDtypeStruct((B_pad, OUT_PAD), jnp.float32),
        grid_spec=pltpu.PrefetchScalarGridSpec(
            num_scalar_prefetch=0,
            grid=(B_pad // TB,),
            in_specs=[
                pl.BlockSpec((TB, S_pad, E_PAD), lambda b: (b, 0, 0)),  # embeddings
                const((E_PAD, 2 * F)),                                  # conv W, k=2
                const((E_PAD, 3 * F)),                                  # conv W, k=3
                const((E_PAD, 4 * F)),                                  # conv W, k=4
                const((1, len(FILTER_SIZES) * F)),                      # conv biases
                const((len(FILTER_SIZES) * F, OUT_PAD)),                # fc W (padded)
                const((1, OUT_PAD)),                                    # fc b (padded)
            ],
            out_specs=pl.BlockSpec((TB, OUT_PAD), lambda b: (b, 0)),
        ),
        compiler_params=pltpu.CompilerParams(
            dimension_semantics=("parallel",),        # both TensorCores on v7x
            vmem_limit_bytes=int(vmem_bytes * 0.85)),
    )(emb, kparams["wconv2"], kparams["wconv3"], kparams["wconv4"],
      kparams["bconv"], kparams["wfc"], kparams["bfc"])

    return out[:B, :C]


# --------------------------------------------------------------------------- #
# Parameters
# --------------------------------------------------------------------------- #
def init_params(key, vocab_size):
    """f32 parameters matching the torch module's shapes / init scheme."""
    ks = jax.random.split(key, 9)
    params = {
        "embedding": jax.random.normal(ks[0], (vocab_size, EMBED), jnp.float32),
    }
    for i, k in enumerate(FILTER_SIZES):
        fan_in = k * EMBED
        bound = 1.0 / np.sqrt(fan_in)
        params[f"w{k}"] = jax.random.uniform(
            ks[1 + i], (k, EMBED, NUM_FILTERS), jnp.float32, -bound, bound)
        params[f"b{k}"] = jax.random.uniform(
            ks[4 + i], (1, NUM_FILTERS), jnp.float32, -bound, bound)
    fan_in = NUM_FILTERS * len(FILTER_SIZES)
    bound = 1.0 / np.sqrt(fan_in)
    params["wfc"] = jax.random.uniform(
        ks[7], (fan_in, NUM_CLASSES), jnp.float32, -bound, bound)
    params["bfc"] = jax.random.uniform(
        ks[8], (1, NUM_CLASSES), jnp.float32, -bound, bound)
    return params


def prepare_params(params):
    """One-time kernel-ready views: padded / fused / cast to bf16 where used."""
    kp = {
        "emb_table": jnp.pad(params["embedding"],
                             ((0, 0), (0, E_PAD - EMBED))).astype(jnp.bfloat16),
    }
    b_cols = []
    for k in FILTER_SIZES:
        wk = params[f"w{k}"]                                      # (k, E, F)
        w = jnp.concatenate([wk[i] for i in range(k)], axis=1)    # (E, k*F)
        kp[f"wconv{k}"] = jnp.pad(
            w, ((0, E_PAD - EMBED), (0, 0))).astype(jnp.bfloat16)
        b_cols.append(params[f"b{k}"])
    kp["bconv"] = jnp.concatenate(b_cols, axis=1)                 # (1, 3F) f32
    kp["wfc"] = jnp.pad(params["wfc"],
                        ((0, 0), (0, OUT_PAD - NUM_CLASSES))).astype(jnp.bfloat16)
    kp["bfc"] = jnp.pad(params["bfc"], ((0, 0), (0, OUT_PAD - NUM_CLASSES)))
    return kp


# --------------------------------------------------------------------------- #
# Plain-JAX reference (torch forward, eval mode, at the kernel's precision)
# --------------------------------------------------------------------------- #
def reference_forward(tokens, params):
    emb = params["embedding"][tokens.T].astype(jnp.bfloat16)      # (B, S, E)
    B, S, _ = emb.shape
    feats = []
    for k in FILTER_SIZES:
        wk = params[f"w{k}"].astype(jnp.bfloat16)                 # (k, E, F)
        L = S - k + 1
        scores = jnp.zeros((B, L, NUM_FILTERS), jnp.float32)
        for i in range(k):
            scores = scores + jnp.einsum(
                "ble,ef->blf", emb[:, i:i + L, :], wk[i],
                preferred_element_type=jnp.float32)
        scores = jnp.maximum(scores + params[f"b{k}"][:, None, :], 0.0)
        feats.append(jnp.max(scores, axis=1))                     # (B, F)
    feat = jnp.concatenate(feats, axis=1)                         # (B, 3F)
    return (jnp.dot(feat.astype(jnp.bfloat16),
                    params["wfc"].astype(jnp.bfloat16),
                    preferred_element_type=jnp.float32) + params["bfc"])


if __name__ == "__main__":
    key = jax.random.PRNGKey(0)
    vocab_size = 64
    seq_len, batch = 16, 2

    kp_key, kt_key = jax.random.split(key)
    params = init_params(kp_key, vocab_size)
    kparams = prepare_params(params)
    tokens = jax.random.randint(kt_key, (seq_len, batch), 0, vocab_size, jnp.int32)

    logits = jax.block_until_ready(textcnn_forward(tokens, kparams))
    ref = jax.block_until_ready(reference_forward(tokens, params))

    assert logits.shape == (batch, NUM_CLASSES)
    np.testing.assert_allclose(np.asarray(logits), np.asarray(ref),
                               rtol=1e-2, atol=1e-2)
    print("KERNEL_OK")
</pallas_src>

<mosaic_0001>
module attributes {stable_mosaic.version = 11 : i64} {
  func.func @textcnn_kernel(%arg0: i32, %arg1: memref<2x16x384xbf16, #tpu.memory_space<vmem>>, %arg2: memref<384x512xbf16, #tpu.memory_space<vmem>>, %arg3: memref<384x768xbf16, #tpu.memory_space<vmem>>, %arg4: memref<384x1024xbf16, #tpu.memory_space<vmem>>, %arg5: memref<1x768xf32, #tpu.memory_space<vmem>>, %arg6: memref<768x128xbf16, #tpu.memory_space<vmem>>, %arg7: memref<1x128xf32, #tpu.memory_space<vmem>>, %arg8: memref<2x128xf32, #tpu.memory_space<vmem>>) attributes {dimension_semantics = [#tpu.dimension_semantics<parallel>], iteration_bounds = array<i64: 1>, scalar_prefetch = 0 : i64, scratch_operands = 0 : i64, tpu.core_type = #tpu.core_type<tc>, window_params = [{transform_indices = @transform_0, window_bounds = array<i64: 2, 16, 384>}, {pipeline_mode = #tpu.pipeline_mode<synchronous>, transform_indices = @transform_1, window_bounds = array<i64: 384, 512>}, {pipeline_mode = #tpu.pipeline_mode<synchronous>, transform_indices = @transform_2, window_bounds = array<i64: 384, 768>}, {pipeline_mode = #tpu.pipeline_mode<synchronous>, transform_indices = @transform_3, window_bounds = array<i64: 384, 1024>}, {pipeline_mode = #tpu.pipeline_mode<synchronous>, transform_indices = @transform_4, window_bounds = array<i64: 1, 768>}, {pipeline_mode = #tpu.pipeline_mode<synchronous>, transform_indices = @transform_5, window_bounds = array<i64: 768, 128>}, {pipeline_mode = #tpu.pipeline_mode<synchronous>, transform_indices = @transform_6, window_bounds = array<i64: 1, 128>}, {transform_indices = @transform_7, window_bounds = array<i64: 2, 128>}]} {
    %c0 = arith.constant 0 : index
    %c0_0 = arith.constant 0 : index
    %c0_1 = arith.constant 0 : index
    %0 = vector.load %arg1[%c0, %c0_0, %c0_1] : memref<2x16x384xbf16, #tpu.memory_space<vmem>>, vector<2x16x384xbf16>
    %1 = vector.shape_cast %0 : vector<2x16x384xbf16> to vector<32x384xbf16>
    %c0_2 = arith.constant 0 : index
    %c0_3 = arith.constant 0 : index
    %2 = vector.load %arg2[%c0_2, %c0_3] : memref<384x512xbf16, #tpu.memory_space<vmem>>, vector<384x512xbf16>
    %cst = arith.constant dense<0.000000e+00> : vector<32x512xf32>
    %3 = tpu.matmul %1, %2, %cst {dimension_numbers = #tpu.dot_dimension_numbers<[1], [0], [0], [1], [0, 0, 1, 1], [], []>} : vector<32x384xbf16>, vector<384x512xbf16>, vector<32x512xf32> -> vector<32x512xf32>
    %4 = vector.shape_cast %3 : vector<32x512xf32> to vector<2x16x512xf32>
    %5 = vector.extract_strided_slice %4 {offsets = [0, 0, 0], sizes = [2, 15, 256], strides = [1, 1, 1]} : vector<2x16x512xf32> to vector<2x15x256xf32>
    %6 = vector.extract_strided_slice %4 {offsets = [0, 1, 256], sizes = [2, 15, 256], strides = [1, 1, 1]} : vector<2x16x512xf32> to vector<2x15x256xf32>
    %7 = arith.addf %5, %6 : vector<2x15x256xf32>
    %cst_4 = arith.constant dense<0xFF800000> : vector<2x256xf32>
    %8 = vector.multi_reduction <maximumf>, %7, %cst_4 [1] : vector<2x15x256xf32> to vector<2x256xf32>
    %c0_5 = arith.constant 0 : index
    %c0_6 = arith.constant 0 : index
    %9 = vector.load %arg3[%c0_5, %c0_6] : memref<384x768xbf16, #tpu.memory_space<vmem>>, vector<384x768xbf16>
    %cst_7 = arith.constant dense<0.000000e+00> : vector<32x768xf32>
    %10 = tpu.matmul %1, %9, %cst_7 {dimension_numbers = #tpu.dot_dimension_numbers<[1], [0], [0], [1], [0, 0, 1, 1], [], []>} : vector<32x384xbf16>, vector<384x768xbf16>, vector<32x768xf32> -> vector<32x768xf32>
    %11 = vector.shape_cast %10 : vector<32x768xf32> to vector<2x16x768xf32>
    %12 = vector.extract_strided_slice %11 {offsets = [0, 0, 0], sizes = [2, 14, 256], strides = [1, 1, 1]} : vector<2x16x768xf32> to vector<2x14x256xf32>
    %13 = vector.extract_strided_slice %11 {offsets = [0, 1, 256], sizes = [2, 14, 256], strides = [1, 1, 1]} : vector<2x16x768xf32> to vector<2x14x256xf32>
    %14 = arith.addf %12, %13 : vector<2x14x256xf32>
    %15 = vector.extract_strided_slice %11 {offsets = [0, 2, 512], sizes = [2, 14, 256], strides = [1, 1, 1]} : vector<2x16x768xf32> to vector<2x14x256xf32>
    %16 = arith.addf %14, %15 : vector<2x14x256xf32>
    %cst_8 = arith.constant dense<0xFF800000> : vector<2x256xf32>
    %17 = vector.multi_reduction <maximumf>, %16, %cst_8 [1] : vector<2x14x256xf32> to vector<2x256xf32>
    %c0_9 = arith.constant 0 : index
    %c0_10 = arith.constant 0 : index
    %18 = vector.load %arg4[%c0_9, %c0_10] : memref<384x1024xbf16, #tpu.memory_space<vmem>>, vector<384x1024xbf16>
    %cst_11 = arith.constant dense<0.000000e+00> : vector<32x1024xf32>
    %19 = tpu.matmul %1, %18, %cst_11 {dimension_numbers = #tpu.dot_dimension_numbers<[1], [0], [0], [1], [0, 0, 1, 1], [], []>} : vector<32x384xbf16>, vector<384x1024xbf16>, vector<32x1024xf32> -> vector<32x1024xf32>
    %20 = vector.shape_cast %19 : vector<32x1024xf32> to vector<2x16x1024xf32>
    %21 = vector.extract_strided_slice %20 {offsets = [0, 0, 0], sizes = [2, 13, 256], strides = [1, 1, 1]} : vector<2x16x1024xf32> to vector<2x13x256xf32>
    %22 = vector.extract_strided_slice %20 {offsets = [0, 1, 256], sizes = [2, 13, 256], strides = [1, 1, 1]} : vector<2x16x1024xf32> to vector<2x13x256xf32>
    %23 = arith.addf %21, %22 : vector<2x13x256xf32>
    %24 = vector.extract_strided_slice %20 {offsets = [0, 2, 512], sizes = [2, 13, 256], strides = [1, 1, 1]} : vector<2x16x1024xf32> to vector<2x13x256xf32>
    %25 = arith.addf %23, %24 : vector<2x13x256xf32>
    %26 = vector.extract_strided_slice %20 {offsets = [0, 3, 768], sizes = [2, 13, 256], strides = [1, 1, 1]} : vector<2x16x1024xf32> to vector<2x13x256xf32>
    %27 = arith.addf %25, %26 : vector<2x13x256xf32>
    %cst_12 = arith.constant dense<0xFF800000> : vector<2x256xf32>
    %28 = vector.multi_reduction <maximumf>, %27, %cst_12 [1] : vector<2x13x256xf32> to vector<2x256xf32>
    %29 = tpu.concatenate %8, %17, %28 in 1 : vector<2x256xf32>, vector<2x256xf32>, vector<2x256xf32> -> vector<2x768xf32>
    %c0_13 = arith.constant 0 : index
    %c0_14 = arith.constant 0 : index
    %30 = vector.load %arg5[%c0_13, %c0_14] : memref<1x768xf32, #tpu.memory_space<vmem>>, vector<1x768xf32>
    %31 = vector.broadcast %30 : vector<1x768xf32> to vector<2x768xf32>
    %32 = arith.addf %29, %31 : vector<2x768xf32>
    %cst_15 = arith.constant 0.000000e+00 : f32
    %33 = vector.broadcast %cst_15 : f32 to vector<2x768xf32>
    %34 = arith.maximumf %32, %33 : vector<2x768xf32>
    %35 = arith.truncf %34 : vector<2x768xf32> to vector<2x768xbf16>
    %c0_16 = arith.constant 0 : index
    %c0_17 = arith.constant 0 : index
    %36 = vector.load %arg6[%c0_16, %c0_17] : memref<768x128xbf16, #tpu.memory_space<vmem>>, vector<768x128xbf16>
    %cst_18 = arith.constant dense<0.000000e+00> : vector<2x128xf32>
    %37 = tpu.matmul %35, %36, %cst_18 {dimension_numbers = #tpu.dot_dimension_numbers<[1], [0], [0], [1], [0, 0, 1, 1], [], []>} : vector<2x768xbf16>, vector<768x128xbf16>, vector<2x128xf32> -> vector<2x128xf32>
    %c0_19 = arith.constant 0 : index
    %c0_20 = arith.constant 0 : index
    %38 = vector.load %arg7[%c0_19, %c0_20] : memref<1x128xf32, #tpu.memory_space<vmem>>, vector<1x128xf32>
    %39 = vector.broadcast %38 : vector<1x128xf32> to vector<2x128xf32>
    %40 = arith.addf %37, %39 : vector<2x128xf32>
    %c0_21 = arith.constant 0 : index
    %c0_22 = arith.constant 0 : index
    %41 = vector.load %arg8[%c0_21, %c0_22] : memref<2x128xf32, #tpu.memory_space<vmem>>, vector<2x128xf32>
    tpu.vector_store %arg8[%c0_21, %c0_22], %40 {strides = array<i32>} : memref<2x128xf32, #tpu.memory_space<vmem>>, vector<2x128xf32>,
    return
  }
  func.func @transform_0(%arg0: i32) -> (i32, i32, i32) {
    %c0_i32 = arith.constant 0 : i32
    %c0_i32_0 = arith.constant 0 : i32
    %c0_i32_1 = arith.constant 0 : i32
    return %arg0, %c0_i32, %c0_i32_0 : i32, i32, i32
  }
  func.func @transform_1(%arg0: i32) -> (i32, i32) {
    %c0_i32 = arith.constant 0 : i32
    %c0_i32_0 = arith.constant 0 : i32
    %c0_i32_1 = arith.constant 0 : i32
    return %c0_i32, %c0_i32_0 : i32, i32
  }
  func.func @transform_2(%arg0: i32) -> (i32, i32) {
    %c0_i32 = arith.constant 0 : i32
    %c0_i32_0 = arith.constant 0 : i32
    %c0_i32_1 = arith.constant 0 : i32
    return %c0_i32, %c0_i32_0 : i32, i32
  }
  func.func @transform_3(%arg0: i32) -> (i32, i32) {
    %c0_i32 = arith.constant 0 : i32
    %c0_i32_0 = arith.constant 0 : i32
    %c0_i32_1 = arith.constant 0 : i32
    return %c0_i32, %c0_i32_0 : i32, i32
  }
  func.func @transform_4(%arg0: i32) -> (i32, i32) {
    %c0_i32 = arith.constant 0 : i32
    %c0_i32_0 = arith.constant 0 : i32
    %c0_i32_1 = arith.constant 0 : i32
    return %c0_i32, %c0_i32_0 : i32, i32
  }
  func.func @transform_5(%arg0: i32) -> (i32, i32) {
    %c0_i32 = arith.constant 0 : i32
    %c0_i32_0 = arith.constant 0 : i32
    %c0_i32_1 = arith.constant 0 : i32
    return %c0_i32, %c0_i32_0 : i32, i32
  }
  func.func @transform_6(%arg0: i32) -> (i32, i32) {
    %c0_i32 = arith.constant 0 : i32
    %c0_i32_0 = arith.constant 0 : i32
    %c0_i32_1 = arith.constant 0 : i32
    return %c0_i32, %c0_i32_0 : i32, i32
  }
  func.func @transform_7(%arg0: i32) -> (i32, i32) {
    %c0_i32 = arith.constant 0 : i32
    %c0_i32_0 = arith.constant 0 : i32
    return %arg0, %c0_i32 : i32, i32
  }
}

</mosaic_0001>

<llo_original>
// kernel: textcnn_forward.1
$region0: #{textcnn_forward.1}
  #allocation0 [shape = 'u32[]', space=smem, size = 0x4, offset = 0x4, fixed_abs, tag = 'smem constant byte address 0x4 - core index']
  #allocation1 [shape = 'u32[144,128]{1,0:T(1,128)}', space=vmem, size = 0x12000, scoped, tag = 'internal scratch']
  %s0 = inlined_call_operand.vmem [shape: bf16[2,16,384], index: 0, kind: input, shape index: {}]
  %s1 = inlined_call_operand.hbm [shape: bf16[384,512], index: 1, kind: input, shape index: {}]
  %s2 = inlined_call_operand.hbm [shape: bf16[384,768], index: 2, kind: input, shape index: {}]
  %s3 = inlined_call_operand.hbm [shape: bf16[384,1024], index: 3, kind: input, shape index: {}]
  %s4 = inlined_call_operand.vmem [shape: f32[1,768], index: 4, kind: input, shape index: {}]
  %s5 = inlined_call_operand.vmem [shape: bf16[768,128], index: 5, kind: input, shape index: {}]
  %s6 = inlined_call_operand.vmem [shape: f32[1,128], index: 6, kind: input, shape index: {}]
  %s7 = inlined_call_operand.hbm [shape: f32[2,128], index: 7, kind: output, shape index: {}]
  %s8 = sld [smem:[#allocation0]]
  $region50: #{textcnn_forward.1} parent=0
    _
  %s10 = ssub.s32 1, %s8
  %s11 = scalar_select 0, %s10, %s8
  $region1: #{textcnn_forward.1} parent=0
    #allocation2 [shape = 'u8[393216]{0}', space=vmem, size = 0x60000, scoped, tag = 'input window, operand 1, single buffered']
    #allocation3 [shape = 's32[1]{0}', space=sflag, size = 0x4, scoped, tag = 'scoped memory for textcnn_forward.1']
    #allocation4 [shape = 's32[1]{0}', space=sflag, size = 0x4, scoped, tag = 'scoped memory for textcnn_forward.1']
    #allocation5 [shape = 'u8[589824]{0}', space=vmem, size = 0x90000, scoped, tag = 'input window, operand 2, single buffered']
    #allocation6 [shape = 's32[1]{0}', space=sflag, size = 0x4, scoped, tag = 'scoped memory for textcnn_forward.1']
    #allocation7 [shape = 'u8[786432]{0}', space=vmem, size = 0xc0000, scoped, tag = 'input window, operand 3, single buffered']
    #allocation8 [shape = 'u8[1024]{0}', space=vmem, size = 0x400, scoped, tag = 'output window, operand 0, single buffered']
    %12 = vsyncpa [#allocation3], 0
    %13 = vsyncpa [#allocation6], 0
    %14 = vsyncpa [#allocation4], 0
    // Predicated region
    $region2: #{textcnn_forward.1} parent=1 // pred_check
      _
    $region3: #{textcnn_forward.1} parent=1 // pred_check_branch
      %16 = sbr.rel (0) target = $region5
    $region4: #{textcnn_forward.1} parent=1 // pred_region
      _
    $region5: #{textcnn_forward.1} parent=1 // pred_fallthru
      _
    // Predicated region
    $region6: #{textcnn_forward.1} parent=1 // pred_check
      _
    $region7: #{textcnn_forward.1} parent=1 // pred_check_branch
      %18 = sbr.rel (0) target = $region9
    $region8: #{textcnn_forward.1} parent=1 // pred_region
      %s20 = ssub.s32 12288, 12288
      %21 = vsyncadd [#allocation3], %s20
      %s22 = sshll.u32 [#allocation2], 4
      %s23 = int_to_ptr.vmem [resolvable:$true] %s22
      %28 = dma.hbm_to_vmem [thread:$0]  %s1, 12288, %s23, [#allocation3], 256, 256, 16
    $region9: #{textcnn_forward.1} parent=1 // pred_fallthru
      _
    // Predicated region
    $region10: #{textcnn_forward.1} parent=1 // pred_check
      _
    $region11: #{textcnn_forward.1} parent=1 // pred_check_branch
      %30 = sbr.rel (0) target = $region13
    $region12: #{textcnn_forward.1} parent=1 // pred_region
      %s32 = ssub.s32 18432, 18432
      %33 = vsyncadd [#allocation6], %s32
      %s34 = sshll.u32 [#allocation5], 4
      %s35 = int_to_ptr.vmem [resolvable:$true] %s34
      %40 = dma.hbm_to_vmem [thread:$0]  %s2, 18432, %s35, [#allocation6], 384, 384, 24
    $region13: #{textcnn_forward.1} parent=1 // pred_fallthru
      _
    // Predicated region
    $region14: #{textcnn_forward.1} parent=1 // pred_check
      _
    $region15: #{textcnn_forward.1} parent=1 // pred_check_branch
      %42 = sbr.rel (0) target = $region17
    $region16: #{textcnn_forward.1} parent=1 // pred_region
      %s44 = ssub.s32 24576, 24576
      %45 = vsyncadd [#allocation6], %s44
      %s46 = sshll.u32 [#allocation7], 4
      %s47 = int_to_ptr.vmem [resolvable:$true] %s46
      %52 = dma.hbm_to_vmem [thread:$0]  %s3, 24576, %s47, [#allocation6], 512, 512, 32
    $region17: #{textcnn_forward.1} parent=1 // pred_fallthru
      _
    // Predicated region
    $region18: #{textcnn_forward.1} parent=1 // pred_check
      _
    $region19: #{textcnn_forward.1} parent=1 // pred_check_branch
      %54 = sbr.rel (0) target = $region21
    $region20: #{textcnn_forward.1} parent=1 // pred_region
      _
    $region21: #{textcnn_forward.1} parent=1 // pred_fallthru
      _
    // Predicated region
    $region22: #{textcnn_forward.1} parent=1 // pred_check
      _
    $region23: #{textcnn_forward.1} parent=1 // pred_check_branch
      %56 = sbr.rel (0) target = $region25
    $region24: #{textcnn_forward.1} parent=1 // pred_region
      _
    $region25: #{textcnn_forward.1} parent=1 // pred_fallthru
      _
    // Predicated region
    $region26: #{textcnn_forward.1} parent=1 // pred_check
      _
    $region27: #{textcnn_forward.1} parent=1 // pred_check_branch
      %58 = sbr.rel (0) target = $region29
    $region28: #{textcnn_forward.1} parent=1 // pred_region
      _
    $region29: #{textcnn_forward.1} parent=1 // pred_fallthru
      _
    // Predicated region
    $region30: #{textcnn_forward.1} parent=1 // pred_check
      _
    $region31: #{textcnn_forward.1} parent=1 // pred_check_branch
      %60 = sbr.rel (0) target = $region33
    $region32: #{textcnn_forward.1} parent=1 // pred_region
      %61 = dma.done [#allocation3], 12288
    $region33: #{textcnn_forward.1} parent=1 // pred_fallthru
      _
    // Predicated region
    $region34: #{textcnn_forward.1} parent=1 // pred_check
      _
    $region35: #{textcnn_forward.1} parent=1 // pred_check_branch
      %63 = sbr.rel (0) target = $region37
    $region36: #{textcnn_forward.1} parent=1 // pred_region
      %64 = dma.done [#allocation6], 18432
    $region37: #{textcnn_forward.1} parent=1 // pred_fallthru
      _
    // Predicated region
    $region38: #{textcnn_forward.1} parent=1 // pred_check
      _
    $region39: #{textcnn_forward.1} parent=1 // pred_check_branch
      %66 = sbr.rel (0) target = $region41
    $region40: #{textcnn_forward.1} parent=1 // pred_region
      %67 = dma.done [#allocation6], 24576
    $region41: #{textcnn_forward.1} parent=1 // pred_fallthru
      _
    %v69 = vld [vmem:[%s0] sm:$0xff]
    %v70 = vld [vmem:[%s0 + $0x8] sm:$0xf]
    %v71 = vld [vmem:[%s0 + $0xc] sm:$0xff]
    %v72 = vld [vmem:[%s0 + $0x14] sm:$0xf]
    %v73 = vld [vmem:[%s0 + $0x18] sm:$0xff]
    %v74 = vld [vmem:[%s0 + $0x20] sm:$0xf]
    %v75 = vld [vmem:[%s0 + $0x24] sm:$0xff]
    %v76 = vld [vmem:[%s0 + $0x2c] sm:$0xf]
    %v77 = vld [vmem:[#allocation2] sm:$0xff]
    %v78 = vld [vmem:[#allocation2 + $0x8] sm:$0xff]
    %v79 = vld [vmem:[#allocation2 + $0x10] sm:$0xff]
    %v80 = vld [vmem:[#allocation2 + $0x18] sm:$0xff]
    %v81 = vld [vmem:[#allocation2 + $0x20] sm:$0xff]
    %v82 = vld [vmem:[#allocation2 + $0x28] sm:$0xff]
    %v83 = vld [vmem:[#allocation2 + $0x30] sm:$0xff]
    %v84 = vld [vmem:[#allocation2 + $0x38] sm:$0xff]
    %v85 = vld [vmem:[#allocation2 + $0x40] sm:$0xff]
    %v86 = vld [vmem:[#allocation2 + $0x48] sm:$0xff]
    %v87 = vld [vmem:[#allocation2 + $0x50] sm:$0xff]
    %v88 = vld [vmem:[#allocation2 + $0x58] sm:$0xff]
    %v89 = vld [vmem:[#allocation2 + $0x60] sm:$0xff]
    %v90 = vld [vmem:[#allocation2 + $0x68] sm:$0xff]
    %v91 = vld [vmem:[#allocation2 + $0x70] sm:$0xff]
    %v92 = vld [vmem:[#allocation2 + $0x78] sm:$0xff]
    %v93 = vld [vmem:[#allocation2 + $0x80] sm:$0xff]
    %v94 = vld [vmem:[#allocation2 + $0x88] sm:$0xff]
    %v95 = vld [vmem:[#allocation2 + $0x90] sm:$0xff]
    %v96 = vld [vmem:[#allocation2 + $0x98] sm:$0xff]
    %v97 = vld [vmem:[#allocation2 + $0xa0] sm:$0xff]
    %v98 = vld [vmem:[#allocation2 + $0xa8] sm:$0xff]
    %v99 = vld [vmem:[#allocation2 + $0xb0] sm:$0xff]
    %v100 = vld [vmem:[#allocation2 + $0xb8] sm:$0xff]
    %v101 = vld [vmem:[#allocation2 + $0xc0] sm:$0xff]
    %v102 = vld [vmem:[#allocation2 + $0xc8] sm:$0xff]
    %v103 = vld [vmem:[#allocation2 + $0xd0] sm:$0xff]
    %v104 = vld [vmem:[#allocation2 + $0xd8] sm:$0xff]
    %v105 = vld [vmem:[#allocation2 + $0xe0] sm:$0xff]
    %v106 = vld [vmem:[#allocation2 + $0xe8] sm:$0xff]
    %v107 = vld [vmem:[#allocation2 + $0xf0] sm:$0xff]
    %v108 = vld [vmem:[#allocation2 + $0xf8] sm:$0xff]
    %v109 = vld [vmem:[#allocation2 + $0x100] sm:$0xff]
    %v110 = vld [vmem:[#allocation2 + $0x108] sm:$0xff]
    %v111 = vld [vmem:[#allocation2 + $0x110] sm:$0xff]
    %v112 = vld [vmem:[#allocation2 + $0x118] sm:$0xff]
    %v113 = vld [vmem:[#allocation2 + $0x120] sm:$0xff]
    %v114 = vld [vmem:[#allocation2 + $0x128] sm:$0xff]
    %v115 = vld [vmem:[#allocation2 + $0x130] sm:$0xff]
    %v116 = vld [vmem:[#allocation2 + $0x138] sm:$0xff]
    %v117 = vld [vmem:[#allocation2 + $0x140] sm:$0xff]
    %v118 = vld [vmem:[#allocation2 + $0x148] sm:$0xff]
    %v119 = vld [vmem:[#allocation2 + $0x150] sm:$0xff]
    %v120 = vld [vmem:[#allocation2 + $0x158] sm:$0xff]
    %v121 = vld [vmem:[#allocation2 + $0x160] sm:$0xff]
    %v122 = vld [vmem:[#allocation2 + $0x168] sm:$0xff]
    %v123 = vld [vmem:[#allocation2 + $0x170] sm:$0xff]
    %v124 = vld [vmem:[#allocation2 + $0x178] sm:$0xff]
    %v125 = vld [vmem:[#allocation2 + $0x180] sm:$0xff]
    %v126 = vld [vmem:[#allocation2 + $0x188] sm:$0xff]
    %v127 = vld [vmem:[#allocation2 + $0x190] sm:$0xff]
    %v128 = vld [vmem:[#allocation2 + $0x198] sm:$0xff]
    %v129 = vld [vmem:[#allocation2 + $0x1a0] sm:$0xff]
    %v130 = vld [vmem:[#allocation2 + $0x1a8] sm:$0xff]
    %v131 = vld [vmem:[#allocation2 + $0x1b0] sm:$0xff]
    %v132 = vld [vmem:[#allocation2 + $0x1b8] sm:$0xff]
    %v133 = vld [vmem:[#allocation2 + $0x1c0] sm:$0xff]
    %v134 = vld [vmem:[#allocation2 + $0x1c8] sm:$0xff]
    %v135 = vld [vmem:[#allocation2 + $0x1d0] sm:$0xff]
    %v136 = vld [vmem:[#allocation2 + $0x1d8] sm:$0xff]
    %v137 = vld [vmem:[#allocation2 + $0x1e0] sm:$0xff]
    %v138 = vld [vmem:[#allocation2 + $0x1e8] sm:$0xff]
    %v139 = vld [vmem:[#allocation2 + $0x1f0] sm:$0xff]
    %v140 = vld [vmem:[#allocation2 + $0x1f8] sm:$0xff]
    %v141 = vld [vmem:[#allocation2 + $0x200] sm:$0xff]
    %v142 = vld [vmem:[#allocation2 + $0x208] sm:$0xff]
    %v143 = vld [vmem:[#allocation2 + $0x210] sm:$0xff]
    %v144 = vld [vmem:[#allocation2 + $0x218] sm:$0xff]
    %v145 = vld [vmem:[#allocation2 + $0x220] sm:$0xff]
    %v146 = vld [vmem:[#allocation2 + $0x228] sm:$0xff]
    %v147 = vld [vmem:[#allocation2 + $0x230] sm:$0xff]
    %v148 = vld [vmem:[#allocation2 + $0x238] sm:$0xff]
    %v149 = vld [vmem:[#allocation2 + $0x240] sm:$0xff]
    %v150 = vld [vmem:[#allocation2 + $0x248] sm:$0xff]
    %v151 = vld [vmem:[#allocation2 + $0x250] sm:$0xff]
    %v152 = vld [vmem:[#allocation2 + $0x258] sm:$0xff]
    %v153 = vld [vmem:[#allocation2 + $0x260] sm:$0xff]
    %v154 = vld [vmem:[#allocation2 + $0x268] sm:$0xff]
    %v155 = vld [vmem:[#allocation2 + $0x270] sm:$0xff]
    %v156 = vld [vmem:[#allocation2 + $0x278] sm:$0xff]
    %v157 = vld [vmem:[#allocation2 + $0x280] sm:$0xff]
    %v158 = vld [vmem:[#allocation2 + $0x288] sm:$0xff]
    %v159 = vld [vmem:[#allocation2 + $0x290] sm:$0xff]
    %v160 = vld [vmem:[#allocation2 + $0x298] sm:$0xff]
    %v161 = vld [vmem:[#allocation2 + $0x2a0] sm:$0xff]
    %v162 = vld [vmem:[#allocation2 + $0x2a8] sm:$0xff]
    %v163 = vld [vmem:[#allocation2 + $0x2b0] sm:$0xff]
    %v164 = vld [vmem:[#allocation2 + $0x2b8] sm:$0xff]
    %v165 = vld [vmem:[#allocation2 + $0x2c0] sm:$0xff]
    %v166 = vld [vmem:[#allocation2 + $0x2c8] sm:$0xff]
    %v167 = vld [vmem:[#allocation2 + $0x2d0] sm:$0xff]
    %v168 = vld [vmem:[#allocation2 + $0x2d8] sm:$0xff]
    %v169 = vld [vmem:[#allocation2 + $0x2e0] sm:$0xff]
    %v170 = vld [vmem:[#allocation2 + $0x2e8] sm:$0xff]
    %v171 = vld [vmem:[#allocation2 + $0x2f0] sm:$0xff]
    %v172 = vld [vmem:[#allocation2 + $0x2f8] sm:$0xff]
    %v181 = vunpack.c.l.b16 %v69
    %v182 = vunpack.c.h.b16 %v69
    %v183 = vunpack.c.l.b16 %v70
    %v184 = vunpack.c.l.b16 %v71
    %v185 = vunpack.c.h.b16 %v71
    %v186 = vunpack.c.l.b16 %v72
    %v187 = vunpack.c.l.b16 %v73
    %v188 = vunpack.c.h.b16 %v73
    %v189 = vunpack.c.l.b16 %v74
    %v190 = vunpack.c.l.b16 %v75
    %v191 = vunpack.c.h.b16 %v75
    %v192 = vunpack.c.l.b16 %v76
    %v193 = vpack.c.b16 %v184, %v181
    %v194 = vpack.c.b16 %v185, %v182
    %v195 = vpack.c.b16 %v186, %v183
    %v196 = vpack.c.b16 %v190, %v187
    %v197 = vpack.c.b16 %v191, %v188
    %v198 = vpack.c.b16 %v192, %v189
    %v301 = vunpack.c.l.b16 %v77
    %v302 = vunpack.c.h.b16 %v77
    %v303 = vunpack.c.l.b16 %v78
    %v304 = vunpack.c.h.b16 %v78
    %v305 = vunpack.c.l.b16 %v79
    %v306 = vunpack.c.h.b16 %v79
    %v307 = vunpack.c.l.b16 %v80
    %v308 = vunpack.c.h.b16 %v80
    %v309 = vunpack.c.l.b16 %v81
    %v310 = vunpack.c.h.b16 %v81
    %v311 = vunpack.c.l.b16 %v82
    %v312 = vunpack.c.h.b16 %v82
    %v313 = vunpack.c.l.b16 %v83
    %v314 = vunpack.c.h.b16 %v83
    %v315 = vunpack.c.l.b16 %v84
    %v316 = vunpack.c.h.b16 %v84
    %v317 = vunpack.c.l.b16 %v85
    %v318 = vunpack.c.h.b16 %v85
    %v319 = vunpack.c.l.b16 %v86
    %v320 = vunpack.c.h.b16 %v86
    %v321 = vunpack.c.l.b16 %v87
    %v322 = vunpack.c.h.b16 %v87
    %v323 = vunpack.c.l.b16 %v88
    %v324 = vunpack.c.h.b16 %v88
    %v325 = vunpack.c.l.b16 %v89
    %v326 = vunpack.c.h.b16 %v89
    %v327 = vunpack.c.l.b16 %v90
    %v328 = vunpack.c.h.b16 %v90
    %v329 = vunpack.c.l.b16 %v91
    %v330 = vunpack.c.h.b16 %v91
    %v331 = vunpack.c.l.b16 %v92
    %v332 = vunpack.c.h.b16 %v92
    %v333 = vunpack.c.l.b16 %v93
    %v334 = vunpack.c.h.b16 %v93
    %v335 = vunpack.c.l.b16 %v94
    %v336 = vunpack.c.h.b16 %v94
    %v337 = vunpack.c.l.b16 %v95
    %v338 = vunpack.c.h.b16 %v95
    %v339 = vunpack.c.l.b16 %v96
    %v340 = vunpack.c.h.b16 %v96
    %v341 = vunpack.c.l.b16 %v97
    %v342 = vunpack.c.h.b16 %v97
    %v343 = vunpack.c.l.b16 %v98
    %v344 = vunpack.c.h.b16 %v98
    %v345 = vunpack.c.l.b16 %v99
    %v346 = vunpack.c.h.b16 %v99
    %v347 = vunpack.c.l.b16 %v100
    %v348 = vunpack.c.h.b16 %v100
    %v349 = vunpack.c.l.b16 %v101
    %v350 = vunpack.c.h.b16 %v101
    %v351 = vunpack.c.l.b16 %v102
    %v352 = vunpack.c.h.b16 %v102
    %v353 = vunpack.c.l.b16 %v103
    %v354 = vunpack.c.h.b16 %v103
    %v355 = vunpack.c.l.b16 %v104
    %v356 = vunpack.c.h.b16 %v104
    %v357 = vunpack.c.l.b16 %v105
    %v358 = vunpack.c.h.b16 %v105
    %v359 = vunpack.c.l.b16 %v106
    %v360 = vunpack.c.h.b16 %v106
    %v361 = vunpack.c.l.b16 %v107
    %v362 = vunpack.c.h.b16 %v107
    %v363 = vunpack.c.l.b16 %v108
    %v364 = vunpack.c.h.b16 %v108
    %v365 = vunpack.c.l.b16 %v109
    %v366 = vunpack.c.h.b16 %v109
    %v367 = vunpack.c.l.b16 %v110
    %v368 = vunpack.c.h.b16 %v110
    %v369 = vunpack.c.l.b16 %v111
    %v370 = vunpack.c.h.b16 %v111
    %v371 = vunpack.c.l.b16 %v112
    %v372 = vunpack.c.h.b16 %v112
    %v373 = vunpack.c.l.b16 %v113
    %v374 = vunpack.c.h.b16 %v113
    %v375 = vunpack.c.l.b16 %v114
    %v376 = vunpack.c.h.b16 %v114
    %v377 = vunpack.c.l.b16 %v115
    %v378 = vunpack.c.h.b16 %v115
    %v379 = vunpack.c.l.b16 %v116
    %v380 = vunpack.c.h.b16 %v116
    %v381 = vunpack.c.l.b16 %v117
    %v382 = vunpack.c.h.b16 %v117
    %v383 = vunpack.c.l.b16 %v118
    %v384 = vunpack.c.h.b16 %v118
    %v385 = vunpack.c.l.b16 %v119
    %v386 = vunpack.c.h.b16 %v119
    %v387 = vunpack.c.l.b16 %v120
    %v388 = vunpack.c.h.b16 %v120
    %v389 = vunpack.c.l.b16 %v121
    %v390 = vunpack.c.h.b16 %v121
    %v391 = vunpack.c.l.b16 %v122
    %v392 = vunpack.c.h.b16 %v122
    %v393 = vunpack.c.l.b16 %v123
    %v394 = vunpack.c.h.b16 %v123
    %v395 = vunpack.c.l.b16 %v124
    %v396 = vunpack.c.h.b16 %v124
    %v397 = vunpack.c.l.b16 %v125
    %v398 = vunpack.c.h.b16 %v125
    %v399 = vunpack.c.l.b16 %v126
    %v400 = vunpack.c.h.b16 %v126
    %v401 = vunpack.c.l.b16 %v127
    %v402 = vunpack.c.h.b16 %v127
    %v403 = vunpack.c.l.b16 %v128
    %v404 = vunpack.c.h.b16 %v128
    %v405 = vunpack.c.l.b16 %v129
    %v406 = vunpack.c.h.b16 %v129
    %v407 = vunpack.c.l.b16 %v130
    %v408 = vunpack.c.h.b16 %v130
    %v409 = vunpack.c.l.b16 %v131
    %v410 = vunpack.c.h.b16 %v131
    %v411 = vunpack.c.l.b16 %v132
    %v412 = vunpack.c.h.b16 %v132
    %v413 = vunpack.c.l.b16 %v133
    %v414 = vunpack.c.h.b16 %v133
    %v415 = vunpack.c.l.b16 %v134
    %v416 = vunpack.c.h.b16 %v134
    %v417 = vunpack.c.l.b16 %v135
    %v418 = vunpack.c.h.b16 %v135
    %v419 = vunpack.c.l.b16 %v136
    %v420 = vunpack.c.h.b16 %v136
    %v421 = vunpack.c.l.b16 %v137
    %v422 = vunpack.c.h.b16 %v137
    %v423 = vunpack.c.l.b16 %v138
    %v424 = vunpack.c.h.b16 %v138
    %v425 = vunpack.c.l.b16 %v139
    %v426 = vunpack.c.h.b16 %v139
    %v427 = vunpack.c.l.b16 %v140
    %v428 = vunpack.c.h.b16 %v140
    %v429 = vunpack.c.l.b16 %v141
    %v430 = vunpack.c.h.b16 %v141
    %v431 = vunpack.c.l.b16 %v142
    %v432 = vunpack.c.h.b16 %v142
    %v433 = vunpack.c.l.b16 %v143
    %v434 = vunpack.c.h.b16 %v143
    %v435 = vunpack.c.l.b16 %v144
    %v436 = vunpack.c.h.b16 %v144
    %v437 = vunpack.c.l.b16 %v145
    %v438 = vunpack.c.h.b16 %v145
    %v439 = vunpack.c.l.b16 %v146
    %v440 = vunpack.c.h.b16 %v146
    %v441 = vunpack.c.l.b16 %v147
    %v442 = vunpack.c.h.b16 %v147
    %v443 = vunpack.c.l.b16 %v148
    %v444 = vunpack.c.h.b16 %v148
    %v445 = vunpack.c.l.b16 %v149
    %v446 = vunpack.c.h.b16 %v149
    %v447 = vunpack.c.l.b16 %v150
    %v448 = vunpack.c.h.b16 %v150
    %v449 = vunpack.c.l.b16 %v151
    %v450 = vunpack.c.h.b16 %v151
    %v451 = vunpack.c.l.b16 %v152
    %v452 = vunpack.c.h.b16 %v152
    %v453 = vunpack.c.l.b16 %v153
    %v454 = vunpack.c.h.b16 %v153
    %v455 = vunpack.c.l.b16 %v154
    %v456 = vunpack.c.h.b16 %v154
    %v457 = vunpack.c.l.b16 %v155
    %v458 = vunpack.c.h.b16 %v155
    %v459 = vunpack.c.l.b16 %v156
    %v460 = vunpack.c.h.b16 %v156
    %v461 = vunpack.c.l.b16 %v157
    %v462 = vunpack.c.h.b16 %v157
    %v463 = vunpack.c.l.b16 %v158
    %v464 = vunpack.c.h.b16 %v158
    %v465 = vunpack.c.l.b16 %v159
    %v466 = vunpack.c.h.b16 %v159
    %v467 = vunpack.c.l.b16 %v160
    %v468 = vunpack.c.h.b16 %v160
    %v469 = vunpack.c.l.b16 %v161
    %v470 = vunpack.c.h.b16 %v161
    %v471 = vunpack.c.l.b16 %v162
    %v472 = vunpack.c.h.b16 %v162
    %v473 = vunpack.c.l.b16 %v163
    %v474 = vunpack.c.h.b16 %v163
    %v475 = vunpack.c.l.b16 %v164
    %v476 = vunpack.c.h.b16 %v164
    %v477 = vunpack.c.l.b16 %v165
    %v478 = vunpack.c.h.b16 %v165
    %v479 = vunpack.c.l.b16 %v166
    %v480 = vunpack.c.h.b16 %v166
    %v481 = vunpack.c.l.b16 %v167
    %v482 = vunpack.c.h.b16 %v167
    %v483 = vunpack.c.l.b16 %v168
    %v484 = vunpack.c.h.b16 %v168
    %v485 = vunpack.c.l.b16 %v169
    %v486 = vunpack.c.h.b16 %v169
    %v487 = vunpack.c.l.b16 %v170
    %v488 = vunpack.c.h.b16 %v170
    %v489 = vunpack.c.l.b16 %v171
    %v490 = vunpack.c.h.b16 %v171
    %v491 = vunpack.c.l.b16 %v172
    %v492 = vunpack.c.h.b16 %v172
    %v493 = vpack.c.b16 %v305, %v301
    %v494 = vpack.c.b16 %v306, %v302
    %v495 = vpack.c.b16 %v307, %v303
    %v496 = vpack.c.b16 %v308, %v304
    %v497 = vpack.c.b16 %v313, %v309
    %v498 = vpack.c.b16 %v314, %v310
    %v499 = vpack.c.b16 %v315, %v311
    %v500 = vpack.c.b16 %v316, %v312
    %v501 = vpack.c.b16 %v321, %v317
    %v502 = vpack.c.b16 %v322, %v318
    %v503 = vpack.c.b16 %v323, %v319
    %v504 = vpack.c.b16 %v324, %v320
    %v505 = vpack.c.b16 %v329, %v325
    %v506 = vpack.c.b16 %v330, %v326
    %v507 = vpack.c.b16 %v331, %v327
    %v508 = vpack.c.b16 %v332, %v328
    %v509 = vpack.c.b16 %v337, %v333
    %v510 = vpack.c.b16 %v338, %v334
    %v511 = vpack.c.b16 %v339, %v335
    %v512 = vpack.c.b16 %v340, %v336
    %v513 = vpack.c.b16 %v345, %v341
    %v514 = vpack.c.b16 %v346, %v342
    %v515 = vpack.c.b16 %v347, %v343
    %v516 = vpack.c.b16 %v348, %v344
    %v517 = vpack.c.b16 %v353, %v349
    %v518 = vpack.c.b16 %v354, %v350
    %v519 = vpack.c.b16 %v355, %v351
    %v520 = vpack.c.b16 %v356, %v352
    %v521 = vpack.c.b16 %v361, %v357
    %v522 = vpack.c.b16 %v362, %v358
    %v523 = vpack.c.b16 %v363, %v359
    %v524 = vpack.c.b16 %v364, %v360
    %v525 = vpack.c.b16 %v369, %v365
    %v526 = vpack.c.b16 %v370, %v366
    %v527 = vpack.c.b16 %v371, %v367
    %v528 = vpack.c.b16 %v372, %v368
    %v529 = vpack.c.b16 %v377, %v373
    %v530 = vpack.c.b16 %v378, %v374
    %v531 = vpack.c.b16 %v379, %v375
    %v532 = vpack.c.b16 %v380, %v376
    %v533 = vpack.c.b16 %v385, %v381
    %v534 = vpack.c.b16 %v386, %v382
    %v535 = vpack.c.b16 %v387, %v383
    %v536 = vpack.c.b16 %v388, %v384
    %v537 = vpack.c.b16 %v393, %v389
    %v538 = vpack.c.b16 %v394, %v390
    %v539 = vpack.c.b16 %v395, %v391
    %v540 = vpack.c.b16 %v396, %v392
    %v541 = vpack.c.b16 %v401, %v397
    %v542 = vpack.c.b16 %v402, %v398
    %v543 = vpack.c.b16 %v403, %v399
    %v544 = vpack.c.b16 %v404, %v400
    %v545 = vpack.c.b16 %v409, %v405
    %v546 = vpack.c.b16 %v410, %v406
    %v547 = vpack.c.b16 %v411, %v407
    %v548 = vpack.c.b16 %v412, %v408
    %v549 = vpack.c.b16 %v417, %v413
    %v550 = vpack.c.b16 %v418, %v414
    %v551 = vpack.c.b16 %v419, %v415
    %v552 = vpack.c.b16 %v420, %v416
    %v553 = vpack.c.b16 %v425, %v421
    %v554 = vpack.c.b16 %v426, %v422
    %v555 = vpack.c.b16 %v427, %v423
    %v556 = vpack.c.b16 %v428, %v424
    %v557 = vpack.c.b16 %v433, %v429
    %v558 = vpack.c.b16 %v434, %v430
    %v559 = vpack.c.b16 %v435, %v431
    %v560 = vpack.c.b16 %v436, %v432
    %v561 = vpack.c.b16 %v441, %v437
    %v562 = vpack.c.b16 %v442, %v438
    %v563 = vpack.c.b16 %v443, %v439
    %v564 = vpack.c.b16 %v444, %v440
    %v565 = vpack.c.b16 %v449, %v445
    %v566 = vpack.c.b16 %v450, %v446
    %v567 = vpack.c.b16 %v451, %v447
    %v568 = vpack.c.b16 %v452, %v448
    %v569 = vpack.c.b16 %v457, %v453
    %v570 = vpack.c.b16 %v458, %v454
    %v571 = vpack.c.b16 %v459, %v455
    %v572 = vpack.c.b16 %v460, %v456
    %v573 = vpack.c.b16 %v465, %v461
    %v574 = vpack.c.b16 %v466, %v462
    %v575 = vpack.c.b16 %v467, %v463
    %v576 = vpack.c.b16 %v468, %v464
    %v577 = vpack.c.b16 %v473, %v469
    %v578 = vpack.c.b16 %v474, %v470
    %v579 = vpack.c.b16 %v475, %v471
    %v580 = vpack.c.b16 %v476, %v472
    %v581 = vpack.c.b16 %v481, %v477
    %v582 = vpack.c.b16 %v482, %v478
    %v583 = vpack.c.b16 %v483, %v479
    %v584 = vpack.c.b16 %v484, %v480
    %v585 = vpack.c.b16 %v489, %v485
    %v586 = vpack.c.b16 %v490, %v486
    %v587 = vpack.c.b16 %v491, %v487
    %v588 = vpack.c.b16 %v492, %v488
    %685 = vmatprep.subr.bf16.mxu0 %v494
    %686 = vmatpush1.bf16.msra.mxu0 %v493
    %687 = vmatprep.subr.bf16.mxu0 %v498
    %688 = vmatpush1.bf16.msra.mxu0 %v497
    %689 = vmatprep.subr.bf16.mxu0 %v502
    %690 = vmatpush1.bf16.msra.mxu0 %v501
    %691 = vmatprep.subr.bf16.mxu0 %v506
    %692 = vmatpush1.bf16.msra.mxu0 %v505
    %693 = vmatprep.subr.bf16.mxu0 %v510
    %694 = vmatpush1.bf16.msra.mxu0 %v509
    %695 = vmatprep.subr.bf16.mxu0 %v514
    %696 = vmatpush1.bf16.msra.mxu0 %v513
    %697 = vmatprep.subr.bf16.mxu0 %v518
    %698 = vmatpush1.bf16.msra.mxu0 %v517
    %699 = vmatprep.subr.bf16.mxu0 %v522
    %700 = vmatpush1.bf16.msra.mxu0 %v521
    %701 = vmatprep.subr.bf16.mxu0 %v526
    %702 = vmatpush1.bf16.msra.mxu0 %v525
    %703 = vmatprep.subr.bf16.mxu0 %v530
    %704 = vmatpush1.bf16.msra.mxu0 %v529
    %705 = vmatprep.subr.bf16.mxu0 %v534
    %706 = vmatpush1.bf16.msra.mxu0 %v533
    %707 = vmatprep.subr.bf16.mxu0 %v538
    %708 = vmatpush1.bf16.msra.mxu0 %v537
    %709 = vmatprep.subr.bf16.mxu0 %v542
    %710 = vmatpush1.bf16.msra.mxu0 %v541
    %711 = vmatprep.subr.bf16.mxu0 %v546
    %712 = vmatpush1.bf16.msra.mxu0 %v545
    %713 = vmatprep.subr.bf16.mxu0 %v550
    %714 = vmatpush1.bf16.msra.mxu0 %v549
    %715 = vmatprep.subr.bf16.mxu0 %v554
    %716 = vmatpush1.bf16.msra.mxu0 %v553
    %717 = vmatprep.mubr.bf16.mxu0 %v194
    %718 = vmatmul.mubr.bf16.gmra.mrb[0].mxu0 %v193
    %v719 = vpop.f32.mrb[0].mxu0
    %v720 = vadd.f32 0.0, %v719
    %v721 = vpop.f32.mrb[0].mxu0
    %v722 = vadd.f32 0.0, %v721
    %v723 = vpop.f32.mrb[0].mxu0
    %v724 = vadd.f32 0.0, %v723
    %v725 = vpop.f32.mrb[0].mxu0
    %v726 = vadd.f32 0.0, %v725
    %727 = vmatprep.mubr.bf16.mxu0 %v197
    %728 = vmatmul.mubr.bf16.gmra.mrb[0].mxu0 %v196
    %v729 = vpop.f32.mrb[0].mxu0
    %v730 = vadd.f32 0.0, %v729
    %v731 = vpop.f32.mrb[0].mxu0
    %v732 = vadd.f32 0.0, %v731
    %v733 = vpop.f32.mrb[0].mxu0
    %v734 = vadd.f32 0.0, %v733
    %v735 = vpop.f32.mrb[0].mxu0
    %v736 = vadd.f32 0.0, %v735
    %737 = vdwg.mxu0
    %738 = vmatprep.subr.bf16.mxu0 %v558
    %739 = vmatpush1.bf16.msra.mxu0 %v557
    %740 = vmatprep.subr.bf16.mxu0 %v562
    %741 = vmatpush1.bf16.msra.mxu0 %v561
    %742 = vmatprep.subr.bf16.mxu0 %v566
    %743 = vmatpush1.bf16.msra.mxu0 %v565
    %744 = vmatprep.subr.bf16.mxu0 %v570
    %745 = vmatpush1.bf16.msra.mxu0 %v569
    %746 = vmatprep.subr.bf16.mxu0 %v574
    %747 = vmatpush1.bf16.msra.mxu0 %v573
    %748 = vmatprep.subr.bf16.mxu0 %v578
    %749 = vmatpush1.bf16.msra.mxu0 %v577
    %750 = vmatprep.subr.bf16.mxu0 %v582
    %751 = vmatpush1.bf16.msra.mxu0 %v581
    %752 = vmatprep.subr.bf16.mxu0 %v586
    %753 = vmatpush1.bf16.msra.mxu0 %v585
    %754 = vmatprep.subr.bf16.mxu0 0
    %755 = vmatpush1.bf16.msra.mxu0 0
    %756 = vmatprep.subr.bf16.mxu0 0
    %757 = vmatpush1.bf16.msra.mxu0 0
    %758 = vmatprep.subr.bf16.mxu0 0
    %759 = vmatpush1.bf16.msra.mxu0 0
    %760 = vmatprep.subr.bf16.mxu0 0
    %761 = vmatpush1.bf16.msra.mxu0 0
    %762 = vmatprep.subr.bf16.mxu0 0
    %763 = vmatpush1.bf16.msra.mxu0 0
    %764 = vmatprep.subr.bf16.mxu0 0
    %765 = vmatpush1.bf16.msra.mxu0 0
    %766 = vmatprep.subr.bf16.mxu0 0
    %767 = vmatpush1.bf16.msra.mxu0 0
    %768 = vmatprep.subr.bf16.mxu0 0
    %769 = vmatpush1.bf16.msra.mxu0 0
    %770 = vmatprep.mubr.bf16.mxu0 0
    %771 = vmatmul.mubr.bf16.gmra.mrb[0].mxu0 %v195
    %v772 = vpop.f32.mrb[0].mxu0
    %v773 = vadd.f32 %v720, %v772
    %v774 = vpop.f32.mrb[0].mxu0
    %v775 = vadd.f32 %v722, %v774
    %v776 = vpop.f32.mrb[0].mxu0
    %v777 = vadd.f32 %v724, %v776
    %v778 = vpop.f32.mrb[0].mxu0
    %v779 = vadd.f32 %v726, %v778
    %780 = vmatprep.mubr.bf16.mxu0 0
    %781 = vmatmul.mubr.bf16.gmra.mrb[0].mxu0 %v198
    %v782 = vpop.f32.mrb[0].mxu0
    %v783 = vadd.f32 %v730, %v782
    %v784 = vpop.f32.mrb[0].mxu0
    %v785 = vadd.f32 %v732, %v784
    %v786 = vpop.f32.mrb[0].mxu0
    %v787 = vadd.f32 %v734, %v786
    %v788 = vpop.f32.mrb[0].mxu0
    %v789 = vadd.f32 %v736, %v788
    %790 = vdwg.mxu0
    %791 = vmatprep.subr.bf16.mxu0 %v496
    %792 = vmatpush1.bf16.msra.mxu0 %v495
    %793 = vmatprep.subr.bf16.mxu0 %v500
    %794 = vmatpush1.bf16.msra.mxu0 %v499
    %795 = vmatprep.subr.bf16.mxu0 %v504
    %796 = vmatpush1.bf16.msra.mxu0 %v503
    %797 = vmatprep.subr.bf16.mxu0 %v508
    %798 = vmatpush1.bf16.msra.mxu0 %v507
    %799 = vmatprep.subr.bf16.mxu0 %v512
    %800 = vmatpush1.bf16.msra.mxu0 %v511
    %801 = vmatprep.subr.bf16.mxu0 %v516
    %802 = vmatpush1.bf16.msra.mxu0 %v515
    %803 = vmatprep.subr.bf16.mxu0 %v520
    %804 = vmatpush1.bf16.msra.mxu0 %v519
    %805 = vmatprep.subr.bf16.mxu0 %v524
    %806 = vmatpush1.bf16.msra.mxu0 %v523
    %807 = vmatprep.subr.bf16.mxu0 %v528
    %808 = vmatpush1.bf16.msra.mxu0 %v527
    %809 = vmatprep.subr.bf16.mxu0 %v532
    %810 = vmatpush1.bf16.msra.mxu0 %v531
    %811 = vmatprep.subr.bf16.mxu0 %v536
    %812 = vmatpush1.bf16.msra.mxu0 %v535
    %813 = vmatprep.subr.bf16.mxu0 %v540
    %814 = vmatpush1.bf16.msra.mxu0 %v539
    %815 = vmatprep.subr.bf16.mxu0 %v544
    %816 = vmatpush1.bf16.msra.mxu0 %v543
    %817 = vmatprep.subr.bf16.mxu0 %v548
    %818 = vmatpush1.bf16.msra.mxu0 %v547
    %819 = vmatprep.subr.bf16.mxu0 %v552
    %820 = vmatpush1.bf16.msra.mxu0 %v551
    %821 = vmatprep.subr.bf16.mxu0 %v556
    %822 = vmatpush1.bf16.msra.mxu0 %v555
    %823 = vmatprep.mubr.bf16.mxu0 %v194
    %824 = vmatmul.mubr.bf16.gmra.mrb[0].mxu0 %v193
    %v825 = vpop.f32.mrb[0].mxu0
    %v826 = vadd.f32 0.0, %v825
    %v827 = vpop.f32.mrb[0].mxu0
    %v828 = vadd.f32 0.0, %v827
    %v829 = vpop.f32.mrb[0].mxu0
    %v830 = vadd.f32 0.0, %v829
    %v831 = vpop.f32.mrb[0].mxu0
    %v832 = vadd.f32 0.0, %v831
    %833 = vmatprep.mubr.bf16.mxu0 %v197
    %834 = vmatmul.mubr.bf16.gmra.mrb[0].mxu0 %v196
    %v835 = vpop.f32.mrb[0].mxu0
    %v836 = vadd.f32 0.0, %v835
    %v837 = vpop.f32.mrb[0].mxu0
    %v838 = vadd.f32 0.0, %v837
    %v839 = vpop.f32.mrb[0].mxu0
    %v840 = vadd.f32 0.0, %v839
    %v841 = vpop.f32.mrb[0].mxu0
    %v842 = vadd.f32 0.0, %v841
    %843 = vdwg.mxu0
    %844 = vmatprep.subr.bf16.mxu0 %v560
    %845 = vmatpush1.bf16.msra.mxu0 %v559
    %846 = vmatprep.subr.bf16.mxu0 %v564
    %847 = vmatpush1.bf16.msra.mxu0 %v563
    %848 = vmatprep.subr.bf16.mxu0 %v568
    %849 = vmatpush1.bf16.msra.mxu0 %v567
    %850 = vmatprep.subr.bf16.mxu0 %v572
    %851 = vmatpush1.bf16.msra.mxu0 %v571
    %852 = vmatprep.subr.bf16.mxu0 %v576
    %853 = vmatpush1.bf16.msra.mxu0 %v575
    %854 = vmatprep.subr.bf16.mxu0 %v580
    %855 = vmatpush1.bf16.msra.mxu0 %v579
    %856 = vmatprep.subr.bf16.mxu0 %v584
    %857 = vmatpush1.bf16.msra.mxu0 %v583
    %858 = vmatprep.subr.bf16.mxu0 %v588
    %859 = vmatpush1.bf16.msra.mxu0 %v587
    %860 = vmatprep.subr.bf16.mxu0 0
    %861 = vmatpush1.bf16.msra.mxu0 0
    %862 = vmatprep.subr.bf16.mxu0 0
    %863 = vmatpush1.bf16.msra.mxu0 0
    %864 = vmatprep.subr.bf16.mxu0 0
    %865 = vmatpush1.bf16.msra.mxu0 0
    %866 = vmatprep.subr.bf16.mxu0 0
    %867 = vmatpush1.bf16.msra.mxu0 0
    %868 = vmatprep.subr.bf16.mxu0 0
    %869 = vmatpush1.bf16.msra.mxu0 0
    %870 = vmatprep.subr.bf16.mxu0 0
    %871 = vmatpush1.bf16.msra.mxu0 0
    %872 = vmatprep.subr.bf16.mxu0 0
    %873 = vmatpush1.bf16.msra.mxu0 0
    %874 = vmatprep.subr.bf16.mxu0 0
    %875 = vmatpush1.bf16.msra.mxu0 0
    %876 = vmatprep.mubr.bf16.mxu0 0
    %877 = vmatmul.mubr.bf16.gmra.mrb[0].mxu0 %v195
    %v878 = vpop.f32.mrb[0].mxu0
    %v879 = vadd.f32 %v826, %v878
    %v880 = vpop.f32.mrb[0].mxu0
    %v881 = vadd.f32 %v828, %v880
    %v882 = vpop.f32.mrb[0].mxu0
    %v883 = vadd.f32 %v830, %v882
    %v884 = vpop.f32.mrb[0].mxu0
    %v885 = vadd.f32 %v832, %v884
    %886 = vmatprep.mubr.bf16.mxu0 0
    %887 = vmatmul.mubr.bf16.gmra.mrb[0].mxu0 %v198
    %v888 = vpop.f32.mrb[0].mxu0
    %v889 = vadd.f32 %v836, %v888
    %v890 = vpop.f32.mrb[0].mxu0
    %v891 = vadd.f32 %v838, %v890
    %v892 = vpop.f32.mrb[0].mxu0
    %v893 = vadd.f32 %v840, %v892
    %v894 = vpop.f32.mrb[0].mxu0
    %v895 = vadd.f32 %v842, %v894
    %896 = vdwg.mxu0
    %vm905 = vcmask 1046528
    %v906 = vrot.slane %v879, 1
    %v907 = vrot.slane %v883, 1
    %v908 = vsel %vm905, %v906, %v907
    %v909 = vrot.slane %v881, 1
    %v910 = vrot.slane %v885, 1
    %v911 = vsel %vm905, %v909, %v910
    %v912 = vrot.slane %v889, 1
    %v913 = vrot.slane %v893, 1
    %v914 = vsel %vm905, %v912, %v913
    %v915 = vrot.slane %v891, 1
    %v916 = vrot.slane %v895, 1
    %v917 = vsel %vm905, %v915, %v916
    %v926 = vadd.f32 %v773, %v908
    %v927 = vadd.f32 %v775, %v911
    %v928 = vadd.f32 %v777, %v907
    %v929 = vadd.f32 %v779, %v910
    %v930 = vadd.f32 %v783, %v914
    %v931 = vadd.f32 %v785, %v917
    %v932 = vadd.f32 %v787, %v913
    %v933 = vadd.f32 %v789, %v916
    %v934 = vsel %vm905, %v928, -inf
    %v935 = vmax.f32 %v926, %v934
    %v936 = vrot.slane %v935, 4
    %v937 = vmax.f32 %v935, %v936
    %v938 = vrot.slane %v937, 2
    %v939 = vmax.f32 %v937, %v938
    %v940 = vrot.slane %v939, 1
    %v941 = vmax.f32 %v939, %v940
    %v942 = vsel %vm905, %v929, -inf
    %v943 = vmax.f32 %v927, %v942
    %v944 = vrot.slane %v943, 4
    %v945 = vmax.f32 %v943, %v944
    %v946 = vrot.slane %v945, 2
    %v947 = vmax.f32 %v945, %v946
    %v948 = vrot.slane %v947, 1
    %v949 = vmax.f32 %v947, %v948
    %v950 = vsel %vm905, %v932, -inf
    %v951 = vmax.f32 %v930, %v950
    %v952 = vrot.slane %v951, 4
    %v953 = vmax.f32 %v951, %v952
    %v954 = vrot.slane %v953, 2
    %v955 = vmax.f32 %v953, %v954
    %v956 = vrot.slane %v955, 1
    %v957 = vmax.f32 %v955, %v956
    %v958 = vsel %vm905, %v933, -inf
    %v959 = vmax.f32 %v931, %v958
    %v960 = vrot.slane %v959, 4
    %v961 = vmax.f32 %v959, %v960
    %v962 = vrot.slane %v961, 2
    %v963 = vmax.f32 %v961, %v962
    %v964 = vrot.slane %v963, 1
    %v965 = vmax.f32 %v963, %v964
    %v966 = vld [vmem:[#allocation5] sm:$0xff]
    %v967 = vld [vmem:[#allocation5 + $0x8] sm:$0xff]
    %v968 = vld [vmem:[#allocation5 + $0x10] sm:$0xff]
    %v969 = vld [vmem:[#allocation5 + $0x18] sm:$0xff]
    %v970 = vld [vmem:[#allocation5 + $0x20] sm:$0xff]
    %v971 = vld [vmem:[#allocation5 + $0x28] sm:$0xff]
    %v972 = vld [vmem:[#allocation5 + $0x30] sm:$0xff]
    %v973 = vld [vmem:[#allocation5 + $0x38] sm:$0xff]
    %v974 = vld [vmem:[#allocation5 + $0x40] sm:$0xff]
    %v975 = vld [vmem:[#allocation5 + $0x48] sm:$0xff]
    %v976 = vld [vmem:[#allocation5 + $0x50] sm:$0xff]
    %v977 = vld [vmem:[#allocation5 + $0x58] sm:$0xff]
    %v978 = vld [vmem:[#allocation5 + $0x60] sm:$0xff]
    %v979 = vld [vmem:[#allocation5 + $0x68] sm:$0xff]
    %v980 = vld [vmem:[#allocation5 + $0x70] sm:$0xff]
    %v981 = vld [vmem:[#allocation5 + $0x78] sm:$0xff]
    %v982 = vld [vmem:[#allocation5 + $0x80] sm:$0xff]
    %v983 = vld [vmem:[#allocation5 + $0x88] sm:$0xff]
    %v984 = vld [vmem:[#allocation5 + $0x90] sm:$0xff]
    %v985 = vld [vmem:[#allocation5 + $0x98] sm:$0xff]
    %v986 = vld [vmem:[#allocation5 + $0xa0] sm:$0xff]
    %v987 = vld [vmem:[#allocation5 + $0xa8] sm:$0xff]
    %v988 = vld [vmem:[#allocation5 + $0xb0] sm:$0xff]
    %v989 = vld [vmem:[#allocation5 + $0xb8] sm:$0xff]
    %v990 = vld [vmem:[#allocation5 + $0xc0] sm:$0xff]
    %v991 = vld [vmem:[#allocation5 + $0xc8] sm:$0xff]
    %v992 = vld [vmem:[#allocation5 + $0xd0] sm:$0xff]
    %v993 = vld [vmem:[#allocation5 + $0xd8] sm:$0xff]
    %v994 = vld [vmem:[#allocation5 + $0xe0] sm:$0xff]
    %v995 = vld [vmem:[#allocation5 + $0xe8] sm:$0xff]
    %v996 = vld [vmem:[#allocation5 + $0xf0] sm:$0xff]
    %v997 = vld [vmem:[#allocation5 + $0xf8] sm:$0xff]
    %v998 = vld [vmem:[#allocation5 + $0x100] sm:$0xff]
    %v999 = vld [vmem:[#allocation5 + $0x108] sm:$0xff]
    %v1000 = vld [vmem:[#allocation5 + $0x110] sm:$0xff]
    %v1001 = vld [vmem:[#allocation5 + $0x118] sm:$0xff]
    %v1002 = vld [vmem:[#allocation5 + $0x120] sm:$0xff]
    %v1003 = vld [vmem:[#allocation5 + $0x128] sm:$0xff]
    %v1004 = vld [vmem:[#allocation5 + $0x130] sm:$0xff]
    %v1005 = vld [vmem:[#allocation5 + $0x138] sm:$0xff]
    %v1006 = vld [vmem:[#allocation5 + $0x140] sm:$0xff]
    %v1007 = vld [vmem:[#allocation5 + $0x148] sm:$0xff]
    %v1008 = vld [vmem:[#allocation5 + $0x150] sm:$0xff]
    %v1009 = vld [vmem:[#allocation5 + $0x158] sm:$0xff]
    %v1010 = vld [vmem:[#allocation5 + $0x160] sm:$0xff]
    %v1011 = vld [vmem:[#allocation5 + $0x168] sm:$0xff]
    %v1012 = vld [vmem:[#allocation5 + $0x170] sm:$0xff]
    %v1013 = vld [vmem:[#allocation5 + $0x178] sm:$0xff]
    %v1014 = vld [vmem:[#allocation5 + $0x180] sm:$0xff]
    %v1015 = vld [vmem:[#allocation5 + $0x188] sm:$0xff]
    %v1016 = vld [vmem:[#allocation5 + $0x190] sm:$0xff]
    %v1017 = vld [vmem:[#allocation5 + $0x198] sm:$0xff]
    %v1018 = vld [vmem:[#allocation5 + $0x1a0] sm:$0xff]
    %v1019 = vld [vmem:[#allocation5 + $0x1a8] sm:$0xff]
    %v1020 = vld [vmem:[#allocation5 + $0x1b0] sm:$0xff]
    %v1021 = vld [vmem:[#allocation5 + $0x1b8] sm:$0xff]
    %v1022 = vld [vmem:[#allocation5 + $0x1c0] sm:$0xff]
    %v1023 = vld [vmem:[#allocation5 + $0x1c8] sm:$0xff]
    %v1024 = vld [vmem:[#allocation5 + $0x1d0] sm:$0xff]
    %v1025 = vld [vmem:[#allocation5 + $0x1d8] sm:$0xff]
    %v1026 = vld [vmem:[#allocation5 + $0x1e0] sm:$0xff]
    %v1027 = vld [vmem:[#allocation5 + $0x1e8] sm:$0xff]
    %v1028 = vld [vmem:[#allocation5 + $0x1f0] sm:$0xff]
    %v1029 = vld [vmem:[#allocation5 + $0x1f8] sm:$0xff]
    %v1030 = vld [vmem:[#allocation5 + $0x200] sm:$0xff]
    %v1031 = vld [vmem:[#allocation5 + $0x208] sm:$0xff]
    %v1032 = vld [vmem:[#allocation5 + $0x210] sm:$0xff]
    %v1033 = vld [vmem:[#allocation5 + $0x218] sm:$0xff]
    %v1034 = vld [vmem:[#allocation5 + $0x220] sm:$0xff]
    %v1035 = vld [vmem:[#allocation5 + $0x228] sm:$0xff]
    %v1036 = vld [vmem:[#allocation5 + $0x230] sm:$0xff]
    %v1037 = vld [vmem:[#allocation5 + $0x238] sm:$0xff]
    %v1038 = vld [vmem:[#allocation5 + $0x240] sm:$0xff]
    %v1039 = vld [vmem:[#allocation5 + $0x248] sm:$0xff]
    %v1040 = vld [vmem:[#allocation5 + $0x250] sm:$0xff]
    %v1041 = vld [vmem:[#allocation5 + $0x258] sm:$0xff]
    %v1042 = vld [vmem:[#allocation5 + $0x260] sm:$0xff]
    %v1043 = vld [vmem:[#allocation5 + $0x268] sm:$0xff]
    %v1044 = vld [vmem:[#allocation5 + $0x270] sm:$0xff]
    %v1045 = vld [vmem:[#allocation5 + $0x278] sm:$0xff]
    %v1046 = vld [vmem:[#allocation5 + $0x280] sm:$0xff]
    %v1047 = vld [vmem:[#allocation5 + $0x288] sm:$0xff]
    %v1048 = vld [vmem:[#allocation5 + $0x290] sm:$0xff]
    %v1049 = vld [vmem:[#allocation5 + $0x298] sm:$0xff]
    %v1050 = vld [vmem:[#allocation5 + $0x2a0] sm:$0xff]
    %v1051 = vld [vmem:[#allocation5 + $0x2a8] sm:$0xff]
    %v1052 = vld [vmem:[#allocation5 + $0x2b0] sm:$0xff]
    %v1053 = vld [vmem:[#allocation5 + $0x2b8] sm:$0xff]
    %v1054 = vld [vmem:[#allocation5 + $0x2c0] sm:$0xff]
    %v1055 = vld [vmem:[#allocation5 + $0x2c8] sm:$0xff]
    %v1056 = vld [vmem:[#allocation5 + $0x2d0] sm:$0xff]
    %v1057 = vld [vmem:[#allocation5 + $0x2d8] sm:$0xff]
    %v1058 = vld [vmem:[#allocation5 + $0x2e0] sm:$0xff]
    %v1059 = vld [vmem:[#allocation5 + $0x2e8] sm:$0xff]
    %v1060 = vld [vmem:[#allocation5 + $0x2f0] sm:$0xff]
    %v1061 = vld [vmem:[#allocation5 + $0x2f8] sm:$0xff]
    %v1062 = vld [vmem:[#allocation5 + $0x300] sm:$0xff]
    %v1063 = vld [vmem:[#allocation5 + $0x308] sm:$0xff]
    %v1064 = vld [vmem:[#allocation5 + $0x310] sm:$0xff]
    %v1065 = vld [vmem:[#allocation5 + $0x318] sm:$0xff]
    %v1066 = vld [vmem:[#allocation5 + $0x320] sm:$0xff]
    %v1067 = vld [vmem:[#allocation5 + $0x328] sm:$0xff]
    %v1068 = vld [vmem:[#allocation5 + $0x330] sm:$0xff]
    %v1069 = vld [vmem:[#allocation5 + $0x338] sm:$0xff]
    %v1070 = vld [vmem:[#allocation5 + $0x340] sm:$0xff]
    %v1071 = vld [vmem:[#allocation5 + $0x348] sm:$0xff]
    %v1072 = vld [vmem:[#allocation5 + $0x350] sm:$0xff]
    %v1073 = vld [vmem:[#allocation5 + $0x358] sm:$0xff]
    %v1074 = vld [vmem:[#allocation5 + $0x360] sm:$0xff]
    %v1075 = vld [vmem:[#allocation5 + $0x368] sm:$0xff]
    %v1076 = vld [vmem:[#allocation5 + $0x370] sm:$0xff]
    %v1077 = vld [vmem:[#allocation5 + $0x378] sm:$0xff]
    %v1078 = vld [vmem:[#allocation5 + $0x380] sm:$0xff]
    %v1079 = vld [vmem:[#allocation5 + $0x388] sm:$0xff]
    %v1080 = vld [vmem:[#allocation5 + $0x390] sm:$0xff]
    %v1081 = vld [vmem:[#allocation5 + $0x398] sm:$0xff]
    %v1082 = vld [vmem:[#allocation5 + $0x3a0] sm:$0xff]
    %v1083 = vld [vmem:[#allocation5 + $0x3a8] sm:$0xff]
    %v1084 = vld [vmem:[#allocation5 + $0x3b0] sm:$0xff]
    %v1085 = vld [vmem:[#allocation5 + $0x3b8] sm:$0xff]
    %v1086 = vld [vmem:[#allocation5 + $0x3c0] sm:$0xff]
    %v1087 = vld [vmem:[#allocation5 + $0x3c8] sm:$0xff]
    %v1088 = vld [vmem:[#allocation5 + $0x3d0] sm:$0xff]
    %v1089 = vld [vmem:[#allocation5 + $0x3d8] sm:$0xff]
    %v1090 = vld [vmem:[#allocation5 + $0x3e0] sm:$0xff]
    %v1091 = vld [vmem:[#allocation5 + $0x3e8] sm:$0xff]
    %v1092 = vld [vmem:[#allocation5 + $0x3f0] sm:$0xff]
    %v1093 = vld [vmem:[#allocation5 + $0x3f8] sm:$0xff]
    %v1094 = vld [vmem:[#allocation5 + $0x400] sm:$0xff]
    %v1095 = vld [vmem:[#allocation5 + $0x408] sm:$0xff]
    %v1096 = vld [vmem:[#allocation5 + $0x410] sm:$0xff]
    %v1097 = vld [vmem:[#allocation5 + $0x418] sm:$0xff]
    %v1098 = vld [vmem:[#allocation5 + $0x420] sm:$0xff]
    %v1099 = vld [vmem:[#allocation5 + $0x428] sm:$0xff]
    %v1100 = vld [vmem:[#allocation5 + $0x430] sm:$0xff]
    %v1101 = vld [vmem:[#allocation5 + $0x438] sm:$0xff]
    %v1102 = vld [vmem:[#allocation5 + $0x440] sm:$0xff]
    %v1103 = vld [vmem:[#allocation5 + $0x448] sm:$0xff]
    %v1104 = vld [vmem:[#allocation5 + $0x450] sm:$0xff]
    %v1105 = vld [vmem:[#allocation5 + $0x458] sm:$0xff]
    %v1106 = vld [vmem:[#allocation5 + $0x460] sm:$0xff]
    %v1107 = vld [vmem:[#allocation5 + $0x468] sm:$0xff]
    %v1108 = vld [vmem:[#allocation5 + $0x470] sm:$0xff]
    %v1109 = vld [vmem:[#allocation5 + $0x478] sm:$0xff]
    %v1254 = vunpack.c.l.b16 %v966
    %v1255 = vunpack.c.h.b16 %v966
    %v1256 = vunpack.c.l.b16 %v967
    %v1257 = vunpack.c.h.b16 %v967
    %v1258 = vunpack.c.l.b16 %v968
    %v1259 = vunpack.c.h.b16 %v968
    %v1260 = vunpack.c.l.b16 %v969
    %v1261 = vunpack.c.h.b16 %v969
    %v1262 = vunpack.c.l.b16 %v970
    %v1263 = vunpack.c.h.b16 %v970
    %v1264 = vunpack.c.l.b16 %v971
    %v1265 = vunpack.c.h.b16 %v971
    %v1266 = vunpack.c.l.b16 %v972
    %v1267 = vunpack.c.h.b16 %v972
    %v1268 = vunpack.c.l.b16 %v973
    %v1269 = vunpack.c.h.b16 %v973
    %v1270 = vunpack.c.l.b16 %v974
    %v1271 = vunpack.c.h.b16 %v974
    %v1272 = vunpack.c.l.b16 %v975
    %v1273 = vunpack.c.h.b16 %v975
    %v1274 = vunpack.c.l.b16 %v976
    %v1275 = vunpack.c.h.b16 %v976
    %v1276 = vunpack.c.l.b16 %v977
    %v1277 = vunpack.c.h.b16 %v977
    %v1278 = vunpack.c.l.b16 %v978
    %v1279 = vunpack.c.h.b16 %v978
    %v1280 = vunpack.c.l.b16 %v979
    %v1281 = vunpack.c.h.b16 %v979
    %v1282 = vunpack.c.l.b16 %v980
    %v1283 = vunpack.c.h.b16 %v980
    %v1284 = vunpack.c.l.b16 %v981
    %v1285 = vunpack.c.h.b16 %v981
    %v1286 = vunpack.c.l.b16 %v982
    %v1287 = vunpack.c.h.b16 %v982
    %v1288 = vunpack.c.l.b16 %v983
    %v1289 = vunpack.c.h.b16 %v983
    %v1290 = vunpack.c.l.b16 %v984
    %v1291 = vunpack.c.h.b16 %v984
    %v1292 = vunpack.c.l.b16 %v985
    %v1293 = vunpack.c.h.b16 %v985
    %v1294 = vunpack.c.l.b16 %v986
    %v1295 = vunpack.c.h.b16 %v986
    %v1296 = vunpack.c.l.b16 %v987
    %v1297 = vunpack.c.h.b16 %v987
    %v1298 = vunpack.c.l.b16 %v988
    %v1299 = vunpack.c.h.b16 %v988
    %v1300 = vunpack.c.l.b16 %v989
    %v1301 = vunpack.c.h.b16 %v989
    %v1302 = vunpack.c.l.b16 %v990
    %v1303 = vunpack.c.h.b16 %v990
    %v1304 = vunpack.c.l.b16 %v991
    %v1305 = vunpack.c.h.b16 %v991
    %v1306 = vunpack.c.l.b16 %v992
    %v1307 = vunpack.c.h.b16 %v992
    %v1308 = vunpack.c.l.b16 %v993
    %v1309 = vunpack.c.h.b16 %v993
    %v1310 = vunpack.c.l.b16 %v994
    %v1311 = vunpack.c.h.b16 %v994
    %v1312 = vunpack.c.l.b16 %v995
    %v1313 = vunpack.c.h.b16 %v995
    %v1314 = vunpack.c.l.b16 %v996
    %v1315 = vunpack.c.h.b16 %v996
    %v1316 = vunpack.c.l.b16 %v997
    %v1317 = vunpack.c.h.b16 %v997
    %v1318 = vunpack.c.l.b16 %v998
    %v1319 = vunpack.c.h.b16 %v998
    %v1320 = vunpack.c.l.b16 %v999
    %v1321 = vunpack.c.h.b16 %v999
    %v1322 = vunpack.c.l.b16 %v1000
    %v1323 = vunpack.c.h.b16 %v1000
    %v1324 = vunpack.c.l.b16 %v1001
    %v1325 = vunpack.c.h.b16 %v1001
    %v1326 = vunpack.c.l.b16 %v1002
    %v1327 = vunpack.c.h.b16 %v1002
    %v1328 = vunpack.c.l.b16 %v1003
    %v1329 = vunpack.c.h.b16 %v1003
    %v1330 = vunpack.c.l.b16 %v1004
    %v1331 = vunpack.c.h.b16 %v1004
    %v1332 = vunpack.c.l.b16 %v1005
    %v1333 = vunpack.c.h.b16 %v1005
    %v1334 = vunpack.c.l.b16 %v1006
    %v1335 = vunpack.c.h.b16 %v1006
    %v1336 = vunpack.c.l.b16 %v1007
    %v1337 = vunpack.c.h.b16 %v1007
    %v1338 = vunpack.c.l.b16 %v1008
    %v1339 = vunpack.c.h.b16 %v1008
    %v1340 = vunpack.c.l.b16 %v1009
    %v1341 = vunpack.c.h.b16 %v1009
    %v1342 = vunpack.c.l.b16 %v1010
    %v1343 = vunpack.c.h.b16 %v1010
    %v1344 = vunpack.c.l.b16 %v1011
    %v1345 = vunpack.c.h.b16 %v1011
    %v1346 = vunpack.c.l.b16 %v1012
    %v1347 = vunpack.c.h.b16 %v1012
    %v1348 = vunpack.c.l.b16 %v1013
    %v1349 = vunpack.c.h.b16 %v1013
    %v1350 = vunpack.c.l.b16 %v1014
    %v1351 = vunpack.c.h.b16 %v1014
    %v1352 = vunpack.c.l.b16 %v1015
    %v1353 = vunpack.c.h.b16 %v1015
    %v1354 = vunpack.c.l.b16 %v1016
    %v1355 = vunpack.c.h.b16 %v1016
    %v1356 = vunpack.c.l.b16 %v1017
    %v1357 = vunpack.c.h.b16 %v1017
    %v1358 = vunpack.c.l.b16 %v1018
    %v1359 = vunpack.c.h.b16 %v1018
    %v1360 = vunpack.c.l.b16 %v1019
    %v1361 = vunpack.c.h.b16 %v1019
    %v1362 = vunpack.c.l.b16 %v1020
    %v1363 = vunpack.c.h.b16 %v1020
    %v1364 = vunpack.c.l.b16 %v1021
    %v1365 = vunpack.c.h.b16 %v1021
    %v1366 = vunpack.c.l.b16 %v1022
    %v1367 = vunpack.c.h.b16 %v1022
    %v1368 = vunpack.c.l.b16 %v1023
    %v1369 = vunpack.c.h.b16 %v1023
    %v1370 = vunpack.c.l.b16 %v1024
    %v1371 = vunpack.c.h.b16 %v1024
    %v1372 = vunpack.c.l.b16 %v1025
    %v1373 = vunpack.c.h.b16 %v1025
    %v1374 = vunpack.c.l.b16 %v1026
    %v1375 = vunpack.c.h.b16 %v1026
    %v1376 = vunpack.c.l.b16 %v1027
    %v1377 = vunpack.c.h.b16 %v1027
    %v1378 = vunpack.c.l.b16 %v1028
    %v1379 = vunpack.c.h.b16 %v1028
    %v1380 = vunpack.c.l.b16 %v1029
    %v1381 = vunpack.c.h.b16 %v1029
    %v1382 = vunpack.c.l.b16 %v1030
    %v1383 = vunpack.c.h.b16 %v1030
    %v1384 = vunpack.c.l.b16 %v1031
    %v1385 = vunpack.c.h.b16 %v1031
    %v1386 = vunpack.c.l.b16 %v1032
    %v1387 = vunpack.c.h.b16 %v1032
    %v1388 = vunpack.c.l.b16 %v1033
    %v1389 = vunpack.c.h.b16 %v1033
    %v1390 = vunpack.c.l.b16 %v1034
    %v1391 = vunpack.c.h.b16 %v1034
    %v1392 = vunpack.c.l.b16 %v1035
    %v1393 = vunpack.c.h.b16 %v1035
    %v1394 = vunpack.c.l.b16 %v1036
    %v1395 = vunpack.c.h.b16 %v1036
    %v1396 = vunpack.c.l.b16 %v1037
    %v1397 = vunpack.c.h.b16 %v1037
    %v1398 = vunpack.c.l.b16 %v1038
    %v1399 = vunpack.c.h.b16 %v1038
    %v1400 = vunpack.c.l.b16 %v1039
    %v1401 = vunpack.c.h.b16 %v1039
    %v1402 = vunpack.c.l.b16 %v1040
    %v1403 = vunpack.c.h.b16 %v1040
    %v1404 = vunpack.c.l.b16 %v1041
    %v1405 = vunpack.c.h.b16 %v1041
    %v1406 = vunpack.c.l.b16 %v1042
    %v1407 = vunpack.c.h.b16 %v1042
    %v1408 = vunpack.c.l.b16 %v1043
    %v1409 = vunpack.c.h.b16 %v1043
    %v1410 = vunpack.c.l.b16 %v1044
    %v1411 = vunpack.c.h.b16 %v1044
    %v1412 = vunpack.c.l.b16 %v1045
    %v1413 = vunpack.c.h.b16 %v1045
    %v1414 = vunpack.c.l.b16 %v1046
    %v1415 = vunpack.c.h.b16 %v1046
    %v1416 = vunpack.c.l.b16 %v1047
    %v1417 = vunpack.c.h.b16 %v1047
    %v1418 = vunpack.c.l.b16 %v1048
    %v1419 = vunpack.c.h.b16 %v1048
    %v1420 = vunpack.c.l.b16 %v1049
    %v1421 = vunpack.c.h.b16 %v1049
    %v1422 = vunpack.c.l.b16 %v1050
    %v1423 = vunpack.c.h.b16 %v1050
    %v1424 = vunpack.c.l.b16 %v1051
    %v1425 = vunpack.c.h.b16 %v1051
    %v1426 = vunpack.c.l.b16 %v1052
    %v1427 = vunpack.c.h.b16 %v1052
    %v1428 = vunpack.c.l.b16 %v1053
    %v1429 = vunpack.c.h.b16 %v1053
    %v1430 = vunpack.c.l.b16 %v1054
    %v1431 = vunpack.c.h.b16 %v1054
    %v1432 = vunpack.c.l.b16 %v1055
    %v1433 = vunpack.c.h.b16 %v1055
    %v1434 = vunpack.c.l.b16 %v1056
    %v1435 = vunpack.c.h.b16 %v1056
    %v1436 = vunpack.c.l.b16 %v1057
    %v1437 = vunpack.c.h.b16 %v1057
    %v1438 = vunpack.c.l.b16 %v1058
    %v1439 = vunpack.c.h.b16 %v1058
    %v1440 = vunpack.c.l.b16 %v1059
    %v1441 = vunpack.c.h.b16 %v1059
    %v1442 = vunpack.c.l.b16 %v1060
    %v1443 = vunpack.c.h.b16 %v1060
    %v1444 = vunpack.c.l.b16 %v1061
    %v1445 = vunpack.c.h.b16 %v1061
    %v1446 = vunpack.c.l.b16 %v1062
    %v1447 = vunpack.c.h.b16 %v1062
    %v1448 = vunpack.c.l.b16 %v1063
    %v1449 = vunpack.c.h.b16 %v1063
    %v1450 = vunpack.c.l.b16 %v1064
    %v1451 = vunpack.c.h.b16 %v1064
    %v1452 = vunpack.c.l.b16 %v1065
    %v1453 = vunpack.c.h.b16 %v1065
    %v1454 = vunpack.c.l.b16 %v1066
    %v1455 = vunpack.c.h.b16 %v1066
    %v1456 = vunpack.c.l.b16 %v1067
    %v1457 = vunpack.c.h.b16 %v1067
    %v1458 = vunpack.c.l.b16 %v1068
    %v1459 = vunpack.c.h.b16 %v1068
    %v1460 = vunpack.c.l.b16 %v1069
    %v1461 = vunpack.c.h.b16 %v1069
    %v1462 = vunpack.c.l.b16 %v1070
    %v1463 = vunpack.c.h.b16 %v1070
    %v1464 = vunpack.c.l.b16 %v1071
    %v1465 = vunpack.c.h.b16 %v1071
    %v1466 = vunpack.c.l.b16 %v1072
    %v1467 = vunpack.c.h.b16 %v1072
    %v1468 = vunpack.c.l.b16 %v1073
    %v1469 = vunpack.c.h.b16 %v1073
    %v1470 = vunpack.c.l.b16 %v1074
    %v1471 = vunpack.c.h.b16 %v1074
    %v1472 = vunpack.c.l.b16 %v1075
    %v1473 = vunpack.c.h.b16 %v1075
    %v1474 = vunpack.c.l.b16 %v1076
    %v1475 = vunpack.c.h.b16 %v1076
    %v1476 = vunpack.c.l.b16 %v1077
    %v1477 = vunpack.c.h.b16 %v1077
    %v1478 = vunpack.c.l.b16 %v1078
    %v1479 = vunpack.c.h.b16 %v1078
    %v1480 = vunpack.c.l.b16 %v1079
    %v1481 = vunpack.c.h.b16 %v1079
    %v1482 = vunpack.c.l.b16 %v1080
    %v1483 = vunpack.c.h.b16 %v1080
    %v1484 = vunpack.c.l.b16 %v1081
    %v1485 = vunpack.c.h.b16 %v1081
    %v1486 = vunpack.c.l.b16 %v1082
    %v1487 = vunpack.c.h.b16 %v1082
    %v1488 = vunpack.c.l.b16 %v1083
    %v1489 = vunpack.c.h.b16 %v1083
    %v1490 = vunpack.c.l.b16 %v1084
    %v1491 = vunpack.c.h.b16 %v1084
    %v1492 = vunpack.c.l.b16 %v1085
    %v1493 = vunpack.c.h.b16 %v1085
    %v1494 = vunpack.c.l.b16 %v1086
    %v1495 = vunpack.c.h.b16 %v1086
    %v1496 = vunpack.c.l.b16 %v1087
    %v1497 = vunpack.c.h.b16 %v1087
    %v1498 = vunpack.c.l.b16 %v1088
    %v1499 = vunpack.c.h.b16 %v1088
    %v1500 = vunpack.c.l.b16 %v1089
    %v1501 = vunpack.c.h.b16 %v1089
    %v1502 = vunpack.c.l.b16 %v1090
    %v1503 = vunpack.c.h.b16 %v1090
    %v1504 = vunpack.c.l.b16 %v1091
    %v1505 = vunpack.c.h.b16 %v1091
    %v1506 = vunpack.c.l.b16 %v1092
    %v1507 = vunpack.c.h.b16 %v1092
    %v1508 = vunpack.c.l.b16 %v1093
    %v1509 = vunpack.c.h.b16 %v1093
    %v1510 = vunpack.c.l.b16 %v1094
    %v1511 = vunpack.c.h.b16 %v1094
    %v1512 = vunpack.c.l.b16 %v1095
    %v1513 = vunpack.c.h.b16 %v1095
    %v1514 = vunpack.c.l.b16 %v1096
    %v1515 = vunpack.c.h.b16 %v1096
    %v1516 = vunpack.c.l.b16 %v1097
    %v1517 = vunpack.c.h.b16 %v1097
    %v1518 = vunpack.c.l.b16 %v1098
    %v1519 = vunpack.c.h.b16 %v1098
    %v1520 = vunpack.c.l.b16 %v1099
    %v1521 = vunpack.c.h.b16 %v1099
    %v1522 = vunpack.c.l.b16 %v1100
    %v1523 = vunpack.c.h.b16 %v1100
    %v1524 = vunpack.c.l.b16 %v1101
    %v1525 = vunpack.c.h.b16 %v1101
    %v1526 = vunpack.c.l.b16 %v1102
    %v1527 = vunpack.c.h.b16 %v1102
    %v1528 = vunpack.c.l.b16 %v1103
    %v1529 = vunpack.c.h.b16 %v1103
    %v1530 = vunpack.c.l.b16 %v1104
    %v1531 = vunpack.c.h.b16 %v1104
    %v1532 = vunpack.c.l.b16 %v1105
    %v1533 = vunpack.c.h.b16 %v1105
    %v1534 = vunpack.c.l.b16 %v1106
    %v1535 = vunpack.c.h.b16 %v1106
    %v1536 = vunpack.c.l.b16 %v1107
    %v1537 = vunpack.c.h.b16 %v1107
    %v1538 = vunpack.c.l.b16 %v1108
    %v1539 = vunpack.c.h.b16 %v1108
    %v1540 = vunpack.c.l.b16 %v1109
    %v1541 = vunpack.c.h.b16 %v1109
    %v1542 = vpack.c.b16 %v1260, %v1254
    %v1543 = vpack.c.b16 %v1261, %v1255
    %v1544 = vpack.c.b16 %v1262, %v1256
    %v1545 = vpack.c.b16 %v1263, %v1257
    %v1546 = vpack.c.b16 %v1264, %v1258
    %v1547 = vpack.c.b16 %v1265, %v1259
    %v1548 = vpack.c.b16 %v1272, %v1266
    %v1549 = vpack.c.b16 %v1273, %v1267
    %v1550 = vpack.c.b16 %v1274, %v1268
    %v1551 = vpack.c.b16 %v1275, %v1269
    %v1552 = vpack.c.b16 %v1276, %v1270
    %v1553 = vpack.c.b16 %v1277, %v1271
    %v1554 = vpack.c.b16 %v1284, %v1278
    %v1555 = vpack.c.b16 %v1285, %v1279
    %v1556 = vpack.c.b16 %v1286, %v1280
    %v1557 = vpack.c.b16 %v1287, %v1281
    %v1558 = vpack.c.b16 %v1288, %v1282
    %v1559 = vpack.c.b16 %v1289, %v1283
    %v1560 = vpack.c.b16 %v1296, %v1290
    %v1561 = vpack.c.b16 %v1297, %v1291
    %v1562 = vpack.c.b16 %v1298, %v1292
    %v1563 = vpack.c.b16 %v1299, %v1293
    %v1564 = vpack.c.b16 %v1300, %v1294
    %v1565 = vpack.c.b16 %v1301, %v1295
    %v1566 = vpack.c.b16 %v1308, %v1302
    %v1567 = vpack.c.b16 %v1309, %v1303
    %v1568 = vpack.c.b16 %v1310, %v1304
    %v1569 = vpack.c.b16 %v1311, %v1305
    %v1570 = vpack.c.b16 %v1312, %v1306
    %v1571 = vpack.c.b16 %v1313, %v1307
    %v1572 = vpack.c.b16 %v1320, %v1314
    %v1573 = vpack.c.b16 %v1321, %v1315
    %v1574 = vpack.c.b16 %v1322, %v1316
    %v1575 = vpack.c.b16 %v1323, %v1317
    %v1576 = vpack.c.b16 %v1324, %v1318
    %v1577 = vpack.c.b16 %v1325, %v1319
    %v1578 = vpack.c.b16 %v1332, %v1326
    %v1579 = vpack.c.b16 %v1333, %v1327
    %v1580 = vpack.c.b16 %v1334, %v1328
    %v1581 = vpack.c.b16 %v1335, %v1329
    %v1582 = vpack.c.b16 %v1336, %v1330
    %v1583 = vpack.c.b16 %v1337, %v1331
    %v1584 = vpack.c.b16 %v1344, %v1338
    %v1585 = vpack.c.b16 %v1345, %v1339
    %v1586 = vpack.c.b16 %v1346, %v1340
    %v1587 = vpack.c.b16 %v1347, %v1341
    %v1588 = vpack.c.b16 %v1348, %v1342
    %v1589 = vpack.c.b16 %v1349, %v1343
    %v1590 = vpack.c.b16 %v1356, %v1350
    %v1591 = vpack.c.b16 %v1357, %v1351
    %v1592 = vpack.c.b16 %v1358, %v1352
    %v1593 = vpack.c.b16 %v1359, %v1353
    %v1594 = vpack.c.b16 %v1360, %v1354
    %v1595 = vpack.c.b16 %v1361, %v1355
    %v1596 = vpack.c.b16 %v1368, %v1362
    %v1597 = vpack.c.b16 %v1369, %v1363
    %v1598 = vpack.c.b16 %v1370, %v1364
    %v1599 = vpack.c.b16 %v1371, %v1365
    %v1600 = vpack.c.b16 %v1372, %v1366
    %v1601 = vpack.c.b16 %v1373, %v1367
    %v1602 = vpack.c.b16 %v1380, %v1374
    %v1603 = vpack.c.b16 %v1381, %v1375
    %v1604 = vpack.c.b16 %v1382, %v1376
    %v1605 = vpack.c.b16 %v1383, %v1377
    %v1606 = vpack.c.b16 %v1384, %v1378
    %v1607 = vpack.c.b16 %v1385, %v1379
    %v1608 = vpack.c.b16 %v1392, %v1386
    %v1609 = vpack.c.b16 %v1393, %v1387
    %v1610 = vpack.c.b16 %v1394, %v1388
    %v1611 = vpack.c.b16 %v1395, %v1389
    %v1612 = vpack.c.b16 %v1396, %v1390
    %v1613 = vpack.c.b16 %v1397, %v1391
    %v1614 = vpack.c.b16 %v1404, %v1398
    %v1615 = vpack.c.b16 %v1405, %v1399
    %v1616 = vpack.c.b16 %v1406, %v1400
    %v1617 = vpack.c.b16 %v1407, %v1401
    %v1618 = vpack.c.b16 %v1408, %v1402
    %v1619 = vpack.c.b16 %v1409, %v1403
    %v1620 = vpack.c.b16 %v1416, %v1410
    %v1621 = vpack.c.b16 %v1417, %v1411
    %v1622 = vpack.c.b16 %v1418, %v1412
    %v1623 = vpack.c.b16 %v1419, %v1413
    %v1624 = vpack.c.b16 %v1420, %v1414
    %v1625 = vpack.c.b16 %v1421, %v1415
    %v1626 = vpack.c.b16 %v1428, %v1422
    %v1627 = vpack.c.b16 %v1429, %v1423
    %v1628 = vpack.c.b16 %v1430, %v1424
    %v1629 = vpack.c.b16 %v1431, %v1425
    %v1630 = vpack.c.b16 %v1432, %v1426
    %v1631 = vpack.c.b16 %v1433, %v1427
    %v1632 = vpack.c.b16 %v1440, %v1434
    %v1633 = vpack.c.b16 %v1441, %v1435
    %v1634 = vpack.c.b16 %v1442, %v1436
    %v1635 = vpack.c.b16 %v1443, %v1437
    %v1636 = vpack.c.b16 %v1444, %v1438
    %v1637 = vpack.c.b16 %v1445, %v1439
    %v1638 = vpack.c.b16 %v1452, %v1446
    %v1639 = vpack.c.b16 %v1453, %v1447
    %v1640 = vpack.c.b16 %v1454, %v1448
    %v1641 = vpack.c.b16 %v1455, %v1449
    %v1642 = vpack.c.b16 %v1456, %v1450
    %v1643 = vpack.c.b16 %v1457, %v1451
    %v1644 = vpack.c.b16 %v1464, %v1458
    %v1645 = vpack.c.b16 %v1465, %v1459
    %v1646 = vpack.c.b16 %v1466, %v1460
    %v1647 = vpack.c.b16 %v1467, %v1461
    %v1648 = vpack.c.b16 %v1468, %v1462
    %v1649 = vpack.c.b16 %v1469, %v1463
    %v1650 = vpack.c.b16 %v1476, %v1470
    %v1651 = vpack.c.b16 %v1477, %v1471
    %v1652 = vpack.c.b16 %v1478, %v1472
    %v1653 = vpack.c.b16 %v1479, %v1473
    %v1654 = vpack.c.b16 %v1480, %v1474
    %v1655 = vpack.c.b16 %v1481, %v1475
    %v1656 = vpack.c.b16 %v1488, %v1482
    %v1657 = vpack.c.b16 %v1489, %v1483
    %v1658 = vpack.c.b16 %v1490, %v1484
    %v1659 = vpack.c.b16 %v1491, %v1485
    %v1660 = vpack.c.b16 %v1492, %v1486
    %v1661 = vpack.c.b16 %v1493, %v1487
    %v1662 = vpack.c.b16 %v1500, %v1494
    %v1663 = vpack.c.b16 %v1501, %v1495
    %v1664 = vpack.c.b16 %v1502, %v1496
    %v1665 = vpack.c.b16 %v1503, %v1497
    %v1666 = vpack.c.b16 %v1504, %v1498
    %v1667 = vpack.c.b16 %v1505, %v1499
    %v1668 = vpack.c.b16 %v1512, %v1506
    %v1669 = vpack.c.b16 %v1513, %v1507
    %v1670 = vpack.c.b16 %v1514, %v1508
    %v1671 = vpack.c.b16 %v1515, %v1509
    %v1672 = vpack.c.b16 %v1516, %v1510
    %v1673 = vpack.c.b16 %v1517, %v1511
    %v1674 = vpack.c.b16 %v1524, %v1518
    %v1675 = vpack.c.b16 %v1525, %v1519
    %v1676 = vpack.c.b16 %v1526, %v1520
    %v1677 = vpack.c.b16 %v1527, %v1521
    %v1678 = vpack.c.b16 %v1528, %v1522
    %v1679 = vpack.c.b16 %v1529, %v1523
    %v1680 = vpack.c.b16 %v1536, %v1530
    %v1681 = vpack.c.b16 %v1537, %v1531
    %v1682 = vpack.c.b16 %v1538, %v1532
    %v1683 = vpack.c.b16 %v1539, %v1533
    %v1684 = vpack.c.b16 %v1540, %v1534
    %v1685 = vpack.c.b16 %v1541, %v1535
    %1830 = vmatprep.subr.bf16.mxu0 %v1543
    %1831 = vmatpush1.bf16.msra.mxu0 %v1542
    %1832 = vmatprep.subr.bf16.mxu0 %v1549
    %1833 = vmatpush1.bf16.msra.mxu0 %v1548
    %1834 = vmatprep.subr.bf16.mxu0 %v1555
    %1835 = vmatpush1.bf16.msra.mxu0 %v1554
    %1836 = vmatprep.subr.bf16.mxu0 %v1561
    %1837 = vmatpush1.bf16.msra.mxu0 %v1560
    %1838 = vmatprep.subr.bf16.mxu0 %v1567
    %1839 = vmatpush1.bf16.msra.mxu0 %v1566
    %1840 = vmatprep.subr.bf16.mxu0 %v1573
    %1841 = vmatpush1.bf16.msra.mxu0 %v1572
    %1842 = vmatprep.subr.bf16.mxu0 %v1579
    %1843 = vmatpush1.bf16.msra.mxu0 %v1578
    %1844 = vmatprep.subr.bf16.mxu0 %v1585
    %1845 = vmatpush1.bf16.msra.mxu0 %v1584
    %1846 = vmatprep.subr.bf16.mxu0 %v1591
    %1847 = vmatpush1.bf16.msra.mxu0 %v1590
    %1848 = vmatprep.subr.bf16.mxu0 %v1597
    %1849 = vmatpush1.bf16.msra.mxu0 %v1596
    %1850 = vmatprep.subr.bf16.mxu0 %v1603
    %1851 = vmatpush1.bf16.msra.mxu0 %v1602
    %1852 = vmatprep.subr.bf16.mxu0 %v1609
    %1853 = vmatpush1.bf16.msra.mxu0 %v1608
    %1854 = vmatprep.subr.bf16.mxu0 %v1615
    %1855 = vmatpush1.bf16.msra.mxu0 %v1614
    %1856 = vmatprep.subr.bf16.mxu0 %v1621
    %1857 = vmatpush1.bf16.msra.mxu0 %v1620
    %1858 = vmatprep.subr.bf16.mxu0 %v1627
    %1859 = vmatpush1.bf16.msra.mxu0 %v1626
    %1860 = vmatprep.subr.bf16.mxu0 %v1633
    %1861 = vmatpush1.bf16.msra.mxu0 %v1632
    %1862 = vmatprep.mubr.bf16.mxu0 %v194
    %1863 = vmatmul.mubr.bf16.gmra.mrb[0].mxu0 %v193
    %v1864 = vpop.f32.mrb[0].mxu0
    %v1865 = vadd.f32 0.0, %v1864
    %v1866 = vpop.f32.mrb[0].mxu0
    %v1867 = vadd.f32 0.0, %v1866
    %v1868 = vpop.f32.mrb[0].mxu0
    %v1869 = vadd.f32 0.0, %v1868
    %v1870 = vpop.f32.mrb[0].mxu0
    %v1871 = vadd.f32 0.0, %v1870
    %1872 = vmatprep.mubr.bf16.mxu0 %v197
    %1873 = vmatmul.mubr.bf16.gmra.mrb[0].mxu0 %v196
    %v1874 = vpop.f32.mrb[0].mxu0
    %v1875 = vadd.f32 0.0, %v1874
    %v1876 = vpop.f32.mrb[0].mxu0
    %v1877 = vadd.f32 0.0, %v1876
    %v1878 = vpop.f32.mrb[0].mxu0
    %v1879 = vadd.f32 0.0, %v1878
    %v1880 = vpop.f32.mrb[0].mxu0
    %v1881 = vadd.f32 0.0, %v1880
    %1882 = vdwg.mxu0
    %1883 = vmatprep.subr.bf16.mxu0 %v1639
    %1884 = vmatpush1.bf16.msra.mxu0 %v1638
    %1885 = vmatprep.subr.bf16.mxu0 %v1645
    %1886 = vmatpush1.bf16.msra.mxu0 %v1644
    %1887 = vmatprep.subr.bf16.mxu0 %v1651
    %1888 = vmatpush1.bf16.msra.mxu0 %v1650
    %1889 = vmatprep.subr.bf16.mxu0 %v1657
    %1890 = vmatpush1.bf16.msra.mxu0 %v1656
    %1891 = vmatprep.subr.bf16.mxu0 %v1663
    %1892 = vmatpush1.bf16.msra.mxu0 %v1662
    %1893 = vmatprep.subr.bf16.mxu0 %v1669
    %1894 = vmatpush1.bf16.msra.mxu0 %v1668
    %1895 = vmatprep.subr.bf16.mxu0 %v1675
    %1896 = vmatpush1.bf16.msra.mxu0 %v1674
    %1897 = vmatprep.subr.bf16.mxu0 %v1681
    %1898 = vmatpush1.bf16.msra.mxu0 %v1680
    %1899 = vmatprep.subr.bf16.mxu0 0
    %1900 = vmatpush1.bf16.msra.mxu0 0
    %1901 = vmatprep.subr.bf16.mxu0 0
    %1902 = vmatpush1.bf16.msra.mxu0 0
    %1903 = vmatprep.subr.bf16.mxu0 0
    %1904 = vmatpush1.bf16.msra.mxu0 0
    %1905 = vmatprep.subr.bf16.mxu0 0
    %1906 = vmatpush1.bf16.msra.mxu0 0
    %1907 = vmatprep.subr.bf16.mxu0 0
    %1908 = vmatpush1.bf16.msra.mxu0 0
    %1909 = vmatprep.subr.bf16.mxu0 0
    %1910 = vmatpush1.bf16.msra.mxu0 0
    %1911 = vmatprep.subr.bf16.mxu0 0
    %1912 = vmatpush1.bf16.msra.mxu0 0
    %1913 = vmatprep.subr.bf16.mxu0 0
    %1914 = vmatpush1.bf16.msra.mxu0 0
    %1915 = vmatprep.mubr.bf16.mxu0 0
    %1916 = vmatmul.mubr.bf16.gmra.mrb[0].mxu0 %v195
    %v1917 = vpop.f32.mrb[0].mxu0
    %v1918 = vadd.f32 %v1865, %v1917
    %v1919 = vpop.f32.mrb[0].mxu0
    %v1920 = vadd.f32 %v1867, %v1919
    %v1921 = vpop.f32.mrb[0].mxu0
    %v1922 = vadd.f32 %v1869, %v1921
    %v1923 = vpop.f32.mrb[0].mxu0
    %v1924 = vadd.f32 %v1871, %v1923
    %1925 = vmatprep.mubr.bf16.mxu0 0
    %1926 = vmatmul.mubr.bf16.gmra.mrb[0].mxu0 %v198
    %v1927 = vpop.f32.mrb[0].mxu0
    %v1928 = vadd.f32 %v1875, %v1927
    %v1929 = vpop.f32.mrb[0].mxu0
    %v1930 = vadd.f32 %v1877, %v1929
    %v1931 = vpop.f32.mrb[0].mxu0
    %v1932 = vadd.f32 %v1879, %v1931
    %v1933 = vpop.f32.mrb[0].mxu0
    %v1934 = vadd.f32 %v1881, %v1933
    %1935 = vdwg.mxu0
    %1936 = vmatprep.subr.bf16.mxu0 %v1545
    %1937 = vmatpush1.bf16.msra.mxu0 %v1544
    %1938 = vmatprep.subr.bf16.mxu0 %v1551
    %1939 = vmatpush1.bf16.msra.mxu0 %v1550
    %1940 = vmatprep.subr.bf16.mxu0 %v1557
    %1941 = vmatpush1.bf16.msra.mxu0 %v1556
    %1942 = vmatprep.subr.bf16.mxu0 %v1563
    %1943 = vmatpush1.bf16.msra.mxu0 %v1562
    %1944 = vmatprep.subr.bf16.mxu0 %v1569
    %1945 = vmatpush1.bf16.msra.mxu0 %v1568
    %1946 = vmatprep.subr.bf16.mxu0 %v1575
    %1947 = vmatpush1.bf16.msra.mxu0 %v1574
    %1948 = vmatprep.subr.bf16.mxu0 %v1581
    %1949 = vmatpush1.bf16.msra.mxu0 %v1580
    %1950 = vmatprep.subr.bf16.mxu0 %v1587
    %1951 = vmatpush1.bf16.msra.mxu0 %v1586
    %1952 = vmatprep.subr.bf16.mxu0 %v1593
    %1953 = vmatpush1.bf16.msra.mxu0 %v1592
    %1954 = vmatprep.subr.bf16.mxu0 %v1599
    %1955 = vmatpush1.bf16.msra.mxu0 %v1598
    %1956 = vmatprep.subr.bf16.mxu0 %v1605
    %1957 = vmatpush1.bf16.msra.mxu0 %v1604
    %1958 = vmatprep.subr.bf16.mxu0 %v1611
    %1959 = vmatpush1.bf16.msra.mxu0 %v1610
    %1960 = vmatprep.subr.bf16.mxu0 %v1617
    %1961 = vmatpush1.bf16.msra.mxu0 %v1616
    %1962 = vmatprep.subr.bf16.mxu0 %v1623
    %1963 = vmatpush1.bf16.msra.mxu0 %v1622
    %1964 = vmatprep.subr.bf16.mxu0 %v1629
    %1965 = vmatpush1.bf16.msra.mxu0 %v1628
    %1966 = vmatprep.subr.bf16.mxu0 %v1635
    %1967 = vmatpush1.bf16.msra.mxu0 %v1634
    %1968 = vmatprep.mubr.bf16.mxu0 %v194
    %1969 = vmatmul.mubr.bf16.gmra.mrb[0].mxu0 %v193
    %v1970 = vpop.f32.mrb[0].mxu0
    %v1971 = vadd.f32 0.0, %v1970
    %v1972 = vpop.f32.mrb[0].mxu0
    %v1973 = vadd.f32 0.0, %v1972
    %v1974 = vpop.f32.mrb[0].mxu0
    %v1975 = vadd.f32 0.0, %v1974
    %v1976 = vpop.f32.mrb[0].mxu0
    %v1977 = vadd.f32 0.0, %v1976
    %1978 = vmatprep.mubr.bf16.mxu0 %v197
    %1979 = vmatmul.mubr.bf16.gmra.mrb[0].mxu0 %v196
    %v1980 = vpop.f32.mrb[0].mxu0
    %v1981 = vadd.f32 0.0, %v1980
    %v1982 = vpop.f32.mrb[0].mxu0
    %v1983 = vadd.f32 0.0, %v1982
    %v1984 = vpop.f32.mrb[0].mxu0
    %v1985 = vadd.f32 0.0, %v1984
    %v1986 = vpop.f32.mrb[0].mxu0
    %v1987 = vadd.f32 0.0, %v1986
    %1988 = vdwg.mxu0
    %1989 = vmatprep.subr.bf16.mxu0 %v1641
    %1990 = vmatpush1.bf16.msra.mxu0 %v1640
    %1991 = vmatprep.subr.bf16.mxu0 %v1647
    %1992 = vmatpush1.bf16.msra.mxu0 %v1646
    %1993 = vmatprep.subr.bf16.mxu0 %v1653
    %1994 = vmatpush1.bf16.msra.mxu0 %v1652
    %1995 = vmatprep.subr.bf16.mxu0 %v1659
    %1996 = vmatpush1.bf16.msra.mxu0 %v1658
    %1997 = vmatprep.subr.bf16.mxu0 %v1665
    %1998 = vmatpush1.bf16.msra.mxu0 %v1664
    %1999 = vmatprep.subr.bf16.mxu0 %v1671
    %2000 = vmatpush1.bf16.msra.mxu0 %v1670
    %2001 = vmatprep.subr.bf16.mxu0 %v1677
    %2002 = vmatpush1.bf16.msra.mxu0 %v1676
    %2003 = vmatprep.subr.bf16.mxu0 %v1683
    %2004 = vmatpush1.bf16.msra.mxu0 %v1682
    %2005 = vmatprep.subr.bf16.mxu0 0
    %2006 = vmatpush1.bf16.msra.mxu0 0
    %2007 = vmatprep.subr.bf16.mxu0 0
    %2008 = vmatpush1.bf16.msra.mxu0 0
    %2009 = vmatprep.subr.bf16.mxu0 0
    %2010 = vmatpush1.bf16.msra.mxu0 0
    %2011 = vmatprep.subr.bf16.mxu0 0
    %2012 = vmatpush1.bf16.msra.mxu0 0
    %2013 = vmatprep.subr.bf16.mxu0 0
    %2014 = vmatpush1.bf16.msra.mxu0 0
    %2015 = vmatprep.subr.bf16.mxu0 0
    %2016 = vmatpush1.bf16.msra.mxu0 0
    %2017 = vmatprep.subr.bf16.mxu0 0
    %2018 = vmatpush1.bf16.msra.mxu0 0
    %2019 = vmatprep.subr.bf16.mxu0 0
    %2020 = vmatpush1.bf16.msra.mxu0 0
    %2021 = vmatprep.mubr.bf16.mxu0 0
    %2022 = vmatmul.mubr.bf16.gmra.mrb[0].mxu0 %v195
    %v2023 = vpop.f32.mrb[0].mxu0
    %v2024 = vadd.f32 %v1971, %v2023
    %v2025 = vpop.f32.mrb[0].mxu0
    %v2026 = vadd.f32 %v1973, %v2025
    %v2027 = vpop.f32.mrb[0].mxu0
    %v2028 = vadd.f32 %v1975, %v2027
    %v2029 = vpop.f32.mrb[0].mxu0
    %v2030 = vadd.f32 %v1977, %v2029
    %2031 = vmatprep.mubr.bf16.mxu0 0
    %2032 = vmatmul.mubr.bf16.gmra.mrb[0].mxu0 %v198
    %v2033 = vpop.f32.mrb[0].mxu0
    %v2034 = vadd.f32 %v1981, %v2033
    %v2035 = vpop.f32.mrb[0].mxu0
    %v2036 = vadd.f32 %v1983, %v2035
    %v2037 = vpop.f32.mrb[0].mxu0
    %v2038 = vadd.f32 %v1985, %v2037
    %v2039 = vpop.f32.mrb[0].mxu0
    %v2040 = vadd.f32 %v1987, %v2039
    %2041 = vdwg.mxu0
    %2042 = vmatprep.subr.bf16.mxu0 %v1547
    %2043 = vmatpush1.bf16.msra.mxu0 %v1546
    %2044 = vmatprep.subr.bf16.mxu0 %v1553
    %2045 = vmatpush1.bf16.msra.mxu0 %v1552
    %2046 = vmatprep.subr.bf16.mxu0 %v1559
    %2047 = vmatpush1.bf16.msra.mxu0 %v1558
    %2048 = vmatprep.subr.bf16.mxu0 %v1565
    %2049 = vmatpush1.bf16.msra.mxu0 %v1564
    %2050 = vmatprep.subr.bf16.mxu0 %v1571
    %2051 = vmatpush1.bf16.msra.mxu0 %v1570
    %2052 = vmatprep.subr.bf16.mxu0 %v1577
    %2053 = vmatpush1.bf16.msra.mxu0 %v1576
    %2054 = vmatprep.subr.bf16.mxu0 %v1583
    %2055 = vmatpush1.bf16.msra.mxu0 %v1582
    %2056 = vmatprep.subr.bf16.mxu0 %v1589
    %2057 = vmatpush1.bf16.msra.mxu0 %v1588
    %2058 = vmatprep.subr.bf16.mxu0 %v1595
    %2059 = vmatpush1.bf16.msra.mxu0 %v1594
    %2060 = vmatprep.subr.bf16.mxu0 %v1601
    %2061 = vmatpush1.bf16.msra.mxu0 %v1600
    %2062 = vmatprep.subr.bf16.mxu0 %v1607
    %2063 = vmatpush1.bf16.msra.mxu0 %v1606
    %2064 = vmatprep.subr.bf16.mxu0 %v1613
    %2065 = vmatpush1.bf16.msra.mxu0 %v1612
    %2066 = vmatprep.subr.bf16.mxu0 %v1619
    %2067 = vmatpush1.bf16.msra.mxu0 %v1618
    %2068 = vmatprep.subr.bf16.mxu0 %v1625
    %2069 = vmatpush1.bf16.msra.mxu0 %v1624
    %2070 = vmatprep.subr.bf16.mxu0 %v1631
    %2071 = vmatpush1.bf16.msra.mxu0 %v1630
    %2072 = vmatprep.subr.bf16.mxu0 %v1637
    %2073 = vmatpush1.bf16.msra.mxu0 %v1636
    %2074 = vmatprep.mubr.bf16.mxu0 %v194
    %2075 = vmatmul.mubr.bf16.gmra.mrb[0].mxu0 %v193
    %v2076 = vpop.f32.mrb[0].mxu0
    %v2077 = vadd.f32 0.0, %v2076
    %v2078 = vpop.f32.mrb[0].mxu0
    %v2079 = vadd.f32 0.0, %v2078
    %v2080 = vpop.f32.mrb[0].mxu0
    %v2081 = vadd.f32 0.0, %v2080
    %v2082 = vpop.f32.mrb[0].mxu0
    %v2083 = vadd.f32 0.0, %v2082
    %2084 = vmatprep.mubr.bf16.mxu0 %v197
    %2085 = vmatmul.mubr.bf16.gmra.mrb[0].mxu0 %v196
    %v2086 = vpop.f32.mrb[0].mxu0
    %v2087 = vadd.f32 0.0, %v2086
    %v2088 = vpop.f32.mrb[0].mxu0
    %v2089 = vadd.f32 0.0, %v2088
    %v2090 = vpop.f32.mrb[0].mxu0
    %v2091 = vadd.f32 0.0, %v2090
    %v2092 = vpop.f32.mrb[0].mxu0
    %v2093 = vadd.f32 0.0, %v2092
    %2094 = vdwg.mxu0
    %2095 = vmatprep.subr.bf16.mxu0 %v1643
    %2096 = vmatpush1.bf16.msra.mxu0 %v1642
    %2097 = vmatprep.subr.bf16.mxu0 %v1649
    %2098 = vmatpush1.bf16.msra.mxu0 %v1648
    %2099 = vmatprep.subr.bf16.mxu0 %v1655
    %2100 = vmatpush1.bf16.msra.mxu0 %v1654
    %2101 = vmatprep.subr.bf16.mxu0 %v1661
    %2102 = vmatpush1.bf16.msra.mxu0 %v1660
    %2103 = vmatprep.subr.bf16.mxu0 %v1667
    %2104 = vmatpush1.bf16.msra.mxu0 %v1666
    %2105 = vmatprep.subr.bf16.mxu0 %v1673
    %2106 = vmatpush1.bf16.msra.mxu0 %v1672
    %2107 = vmatprep.subr.bf16.mxu0 %v1679
    %2108 = vmatpush1.bf16.msra.mxu0 %v1678
    %2109 = vmatprep.subr.bf16.mxu0 %v1685
    %2110 = vmatpush1.bf16.msra.mxu0 %v1684
    %2111 = vmatprep.subr.bf16.mxu0 0
    %2112 = vmatpush1.bf16.msra.mxu0 0
    %2113 = vmatprep.subr.bf16.mxu0 0
    %2114 = vmatpush1.bf16.msra.mxu0 0
    %2115 = vmatprep.subr.bf16.mxu0 0
    %2116 = vmatpush1.bf16.msra.mxu0 0
    %2117 = vmatprep.subr.bf16.mxu0 0
    %2118 = vmatpush1.bf16.msra.mxu0 0
    %2119 = vmatprep.subr.bf16.mxu0 0
    %2120 = vmatpush1.bf16.msra.mxu0 0
    %2121 = vmatprep.subr.bf16.mxu0 0
    %2122 = vmatpush1.bf16.msra.mxu0 0
    %2123 = vmatprep.subr.bf16.mxu0 0
    %2124 = vmatpush1.bf16.msra.mxu0 0
    %2125 = vmatprep.subr.bf16.mxu0 0
    %2126 = vmatpush1.bf16.msra.mxu0 0
    %2127 = vmatprep.mubr.bf16.mxu0 0
    %2128 = vmatmul.mubr.bf16.gmra.mrb[0].mxu0 %v195
    %v2129 = vpop.f32.mrb[0].mxu0
    %v2130 = vadd.f32 %v2077, %v2129
    %v2131 = vpop.f32.mrb[0].mxu0
    %v2132 = vadd.f32 %v2079, %v2131
    %v2133 = vpop.f32.mrb[0].mxu0
    %v2134 = vadd.f32 %v2081, %v2133
    %v2135 = vpop.f32.mrb[0].mxu0
    %v2136 = vadd.f32 %v2083, %v2135
    %2137 = vmatprep.mubr.bf16.mxu0 0
    %2138 = vmatmul.mubr.bf16.gmra.mrb[0].mxu0 %v198
    %v2139 = vpop.f32.mrb[0].mxu0
    %v2140 = vadd.f32 %v2087, %v2139
    %v2141 = vpop.f32.mrb[0].mxu0
    %v2142 = vadd.f32 %v2089, %v2141
    %v2143 = vpop.f32.mrb[0].mxu0
    %v2144 = vadd.f32 %v2091, %v2143
    %v2145 = vpop.f32.mrb[0].mxu0
    %v2146 = vadd.f32 %v2093, %v2145
    %2147 = vdwg.mxu0
    %v2156 = vrot.slane %v2024, 1
    %v2157 = vrot.slane %v2028, 1
    %v2158 = vsel %vm905, %v2156, %v2157
    %v2159 = vrot.slane %v2026, 1
    %v2160 = vrot.slane %v2030, 1
    %v2161 = vsel %vm905, %v2159, %v2160
    %v2162 = vrot.slane %v2034, 1
    %v2163 = vrot.slane %v2038, 1
    %v2164 = vsel %vm905, %v2162, %v2163
    %v2165 = vrot.slane %v2036, 1
    %v2166 = vrot.slane %v2040, 1
    %v2167 = vsel %vm905, %v2165, %v2166
    %v2176 = vadd.f32 %v1918, %v2158
    %v2177 = vadd.f32 %v1920, %v2161
    %v2178 = vadd.f32 %v1922, %v2157
    %v2179 = vadd.f32 %v1924, %v2160
    %v2180 = vadd.f32 %v1928, %v2164
    %v2181 = vadd.f32 %v1930, %v2167
    %v2182 = vadd.f32 %v1932, %v2163
    %v2183 = vadd.f32 %v1934, %v2166
    %vm2192 = vcmask 1045504
    %v2193 = vrot.slane %v2130, 2
    %v2194 = vrot.slane %v2134, 2
    %v2195 = vsel %vm2192, %v2193, %v2194
    %v2196 = vrot.slane %v2132, 2
    %v2197 = vrot.slane %v2136, 2
    %v2198 = vsel %vm2192, %v2196, %v2197
    %v2199 = vrot.slane %v2140, 2
    %v2200 = vrot.slane %v2144, 2
    %v2201 = vsel %vm2192, %v2199, %v2200
    %v2202 = vrot.slane %v2142, 2
    %v2203 = vrot.slane %v2146, 2
    %v2204 = vsel %vm2192, %v2202, %v2203
    %v2213 = vadd.f32 %v2176, %v2195
    %v2214 = vadd.f32 %v2177, %v2198
    %v2215 = vadd.f32 %v2178, %v2194
    %v2216 = vadd.f32 %v2179, %v2197
    %v2217 = vadd.f32 %v2180, %v2201
    %v2218 = vadd.f32 %v2181, %v2204
    %v2219 = vadd.f32 %v2182, %v2200
    %v2220 = vadd.f32 %v2183, %v2203
    %v2221 = vsel %vm2192, %v2215, -inf
    %v2222 = vmax.f32 %v2213, %v2221
    %v2223 = vrot.slane %v2222, 4
    %v2224 = vmax.f32 %v2222, %v2223
    %v2225 = vrot.slane %v2224, 2
    %v2226 = vmax.f32 %v2224, %v2225
    %v2227 = vrot.slane %v2226, 1
    %v2228 = vmax.f32 %v2226, %v2227
    %v2229 = vsel %vm2192, %v2216, -inf
    %v2230 = vmax.f32 %v2214, %v2229
    %v2231 = vrot.slane %v2230, 4
    %v2232 = vmax.f32 %v2230, %v2231
    %v2233 = vrot.slane %v2232, 2
    %v2234 = vmax.f32 %v2232, %v2233
    %v2235 = vrot.slane %v2234, 1
    %v2236 = vmax.f32 %v2234, %v2235
    %v2237 = vsel %vm2192, %v2219, -inf
    %v2238 = vmax.f32 %v2217, %v2237
    %v2239 = vrot.slane %v2238, 4
    %v2240 = vmax.f32 %v2238, %v2239
    %v2241 = vrot.slane %v2240, 2
    %v2242 = vmax.f32 %v2240, %v2241
    %v2243 = vrot.slane %v2242, 1
    %v2244 = vmax.f32 %v2242, %v2243
    %v2245 = vsel %vm2192, %v2220, -inf
    %v2246 = vmax.f32 %v2218, %v2245
    %v2247 = vrot.slane %v2246, 4
    %v2248 = vmax.f32 %v2246, %v2247
    %v2249 = vrot.slane %v2248, 2
    %v2250 = vmax.f32 %v2248, %v2249
    %v2251 = vrot.slane %v2250, 1
    %v2252 = vmax.f32 %v2250, %v2251
    %v2253 = vld [vmem:[#allocation7] sm:$0xff]
    %v2254 = vld [vmem:[#allocation7 + $0x8] sm:$0xff]
    %v2255 = vld [vmem:[#allocation7 + $0x10] sm:$0xff]
    %v2256 = vld [vmem:[#allocation7 + $0x18] sm:$0xff]
    %v2257 = vld [vmem:[#allocation7 + $0x20] sm:$0xff]
    %v2258 = vld [vmem:[#allocation7 + $0x28] sm:$0xff]
    %v2259 = vld [vmem:[#allocation7 + $0x30] sm:$0xff]
    %v2260 = vld [vmem:[#allocation7 + $0x38] sm:$0xff]
    %v2261 = vld [vmem:[#allocation7 + $0x40] sm:$0xff]
    %v2262 = vld [vmem:[#allocation7 + $0x48] sm:$0xff]
    %v2263 = vld [vmem:[#allocation7 + $0x50] sm:$0xff]
    %v2264 = vld [vmem:[#allocation7 + $0x58] sm:$0xff]
    %v2265 = vld [vmem:[#allocation7 + $0x60] sm:$0xff]
    %v2266 = vld [vmem:[#allocation7 + $0x68] sm:$0xff]
    %v2267 = vld [vmem:[#allocation7 + $0x70] sm:$0xff]
    %v2268 = vld [vmem:[#allocation7 + $0x78] sm:$0xff]
    %v2269 = vld [vmem:[#allocation7 + $0x80] sm:$0xff]
    %v2270 = vld [vmem:[#allocation7 + $0x88] sm:$0xff]
    %v2271 = vld [vmem:[#allocation7 + $0x90] sm:$0xff]
    %v2272 = vld [vmem:[#allocation7 + $0x98] sm:$0xff]
    %v2273 = vld [vmem:[#allocation7 + $0xa0] sm:$0xff]
    %v2274 = vld [vmem:[#allocation7 + $0xa8] sm:$0xff]
    %v2275 = vld [vmem:[#allocation7 + $0xb0] sm:$0xff]
    %v2276 = vld [vmem:[#allocation7 + $0xb8] sm:$0xff]
    %v2277 = vld [vmem:[#allocation7 + $0xc0] sm:$0xff]
    %v2278 = vld [vmem:[#allocation7 + $0xc8] sm:$0xff]
    %v2279 = vld [vmem:[#allocation7 + $0xd0] sm:$0xff]
    %v2280 = vld [vmem:[#allocation7 + $0xd8] sm:$0xff]
    %v2281 = vld [vmem:[#allocation7 + $0xe0] sm:$0xff]
    %v2282 = vld [vmem:[#allocation7 + $0xe8] sm:$0xff]
    %v2283 = vld [vmem:[#allocation7 + $0xf0] sm:$0xff]
    %v2284 = vld [vmem:[#allocation7 + $0xf8] sm:$0xff]
    %v2285 = vld [vmem:[#allocation7 + $0x100] sm:$0xff]
    %v2286 = vld [vmem:[#allocation7 + $0x108] sm:$0xff]
    %v2287 = vld [vmem:[#allocation7 + $0x110] sm:$0xff]
    %v2288 = vld [vmem:[#allocation7 + $0x118] sm:$0xff]
    %v2289 = vld [vmem:[#allocation7 + $0x120] sm:$0xff]
    %v2290 = vld [vmem:[#allocation7 + $0x128] sm:$0xff]
    %v2291 = vld [vmem:[#allocation7 + $0x130] sm:$0xff]
    %v2292 = vld [vmem:[#allocation7 + $0x138] sm:$0xff]
    %v2293 = vld [vmem:[#allocation7 + $0x140] sm:$0xff]
    %v2294 = vld [vmem:[#allocation7 + $0x148] sm:$0xff]
    %v2295 = vld [vmem:[#allocation7 + $0x150] sm:$0xff]
    %v2296 = vld [vmem:[#allocation7 + $0x158] sm:$0xff]
    %v2297 = vld [vmem:[#allocation7 + $0x160] sm:$0xff]
    %v2298 = vld [vmem:[#allocation7 + $0x168] sm:$0xff]
    %v2299 = vld [vmem:[#allocation7 + $0x170] sm:$0xff]
    %v2300 = vld [vmem:[#allocation7 + $0x178] sm:$0xff]
    %v2301 = vld [vmem:[#allocation7 + $0x180] sm:$0xff]
    %v2302 = vld [vmem:[#allocation7 + $0x188] sm:$0xff]
    %v2303 = vld [vmem:[#allocation7 + $0x190] sm:$0xff]
    %v2304 = vld [vmem:[#allocation7 + $0x198] sm:$0xff]
    %v2305 = vld [vmem:[#allocation7 + $0x1a0] sm:$0xff]
    %v2306 = vld [vmem:[#allocation7 + $0x1a8] sm:$0xff]
    %v2307 = vld [vmem:[#allocation7 + $0x1b0] sm:$0xff]
    %v2308 = vld [vmem:[#allocation7 + $0x1b8] sm:$0xff]
    %v2309 = vld [vmem:[#allocation7 + $0x1c0] sm:$0xff]
    %v2310 = vld [vmem:[#allocation7 + $0x1c8] sm:$0xff]
    %v2311 = vld [vmem:[#allocation7 + $0x1d0] sm:$0xff]
    %v2312 = vld [vmem:[#allocation7 + $0x1d8] sm:$0xff]
    %v2313 = vld [vmem:[#allocation7 + $0x1e0] sm:$0xff]
    %v2314 = vld [vmem:[#allocation7 + $0x1e8] sm:$0xff]
    %v2315 = vld [vmem:[#allocation7 + $0x1f0] sm:$0xff]
    %v2316 = vld [vmem:[#allocation7 + $0x1f8] sm:$0xff]
    %v2317 = vld [vmem:[#allocation7 + $0x200] sm:$0xff]
    %v2318 = vld [vmem:[#allocation7 + $0x208] sm:$0xff]
    %v2319 = vld [vmem:[#allocation7 + $0x210] sm:$0xff]
    %v2320 = vld [vmem:[#allocation7 + $0x218] sm:$0xff]
    %v2321 = vld [vmem:[#allocation7 + $0x220] sm:$0xff]
    %v2322 = vld [vmem:[#allocation7 + $0x228] sm:$0xff]
    %v2323 = vld [vmem:[#allocation7 + $0x230] sm:$0xff]
    %v2324 = vld [vmem:[#allocation7 + $0x238] sm:$0xff]
    %v2325 = vld [vmem:[#allocation7 + $0x240] sm:$0xff]
    %v2326 = vld [vmem:[#allocation7 + $0x248] sm:$0xff]
    %v2327 = vld [vmem:[#allocation7 + $0x250] sm:$0xff]
    %v2328 = vld [vmem:[#allocation7 + $0x258] sm:$0xff]
    %v2329 = vld [vmem:[#allocation7 + $0x260] sm:$0xff]
    %v2330 = vld [vmem:[#allocation7 + $0x268] sm:$0xff]
    %v2331 = vld [vmem:[#allocation7 + $0x270] sm:$0xff]
    %v2332 = vld [vmem:[#allocation7 + $0x278] sm:$0xff]
    %v2333 = vld [vmem:[#allocation7 + $0x280] sm:$0xff]
    %v2334 = vld [vmem:[#allocation7 + $0x288] sm:$0xff]
    %v2335 = vld [vmem:[#allocation7 + $0x290] sm:$0xff]
    %v2336 = vld [vmem:[#allocation7 + $0x298] sm:$0xff]
    %v2337 = vld [vmem:[#allocation7 + $0x2a0] sm:$0xff]
    %v2338 = vld [vmem:[#allocation7 + $0x2a8] sm:$0xff]
    %v2339 = vld [vmem:[#allocation7 + $0x2b0] sm:$0xff]
    %v2340 = vld [vmem:[#allocation7 + $0x2b8] sm:$0xff]
    %v2341 = vld [vmem:[#allocation7 + $0x2c0] sm:$0xff]
    %v2342 = vld [vmem:[#allocation7 + $0x2c8] sm:$0xff]
    %v2343 = vld [vmem:[#allocation7 + $0x2d0] sm:$0xff]
    %v2344 = vld [vmem:[#allocation7 + $0x2d8] sm:$0xff]
    %v2345 = vld [vmem:[#allocation7 + $0x2e0] sm:$0xff]
    %v2346 = vld [vmem:[#allocation7 + $0x2e8] sm:$0xff]
    %v2347 = vld [vmem:[#allocation7 + $0x2f0] sm:$0xff]
    %v2348 = vld [vmem:[#allocation7 + $0x2f8] sm:$0xff]
    %v2349 = vld [vmem:[#allocation7 + $0x300] sm:$0xff]
    %v2350 = vld [vmem:[#allocation7 + $0x308] sm:$0xff]
    %v2351 = vld [vmem:[#allocation7 + $0x310] sm:$0xff]
    %v2352 = vld [vmem:[#allocation7 + $0x318] sm:$0xff]
    %v2353 = vld [vmem:[#allocation7 + $0x320] sm:$0xff]
    %v2354 = vld [vmem:[#allocation7 + $0x328] sm:$0xff]
    %v2355 = vld [vmem:[#allocation7 + $0x330] sm:$0xff]
    %v2356 = vld [vmem:[#allocation7 + $0x338] sm:$0xff]
    %v2357 = vld [vmem:[#allocation7 + $0x340] sm:$0xff]
    %v2358 = vld [vmem:[#allocation7 + $0x348] sm:$0xff]
    %v2359 = vld [vmem:[#allocation7 + $0x350] sm:$0xff]
    %v2360 = vld [vmem:[#allocation7 + $0x358] sm:$0xff]
    %v2361 = vld [vmem:[#allocation7 + $0x360] sm:$0xff]
    %v2362 = vld [vmem:[#allocation7 + $0x368] sm:$0xff]
    %v2363 = vld [vmem:[#allocation7 + $0x370] sm:$0xff]
    %v2364 = vld [vmem:[#allocation7 + $0x378] sm:$0xff]
    %v2365 = vld [vmem:[#allocation7 + $0x380] sm:$0xff]
    %v2366 = vld [vmem:[#allocation7 + $0x388] sm:$0xff]
    %v2367 = vld [vmem:[#allocation7 + $0x390] sm:$0xff]
    %v2368 = vld [vmem:[#allocation7 + $0x398] sm:$0xff]
    %v2369 = vld [vmem:[#allocation7 + $0x3a0] sm:$0xff]
    %v2370 = vld [vmem:[#allocation7 + $0x3a8] sm:$0xff]
    %v2371 = vld [vmem:[#allocation7 + $0x3b0] sm:$0xff]
    %v2372 = vld [vmem:[#allocation7 + $0x3b8] sm:$0xff]
    %v2373 = vld [vmem:[#allocation7 + $0x3c0] sm:$0xff]
    %v2374 = vld [vmem:[#allocation7 + $0x3c8] sm:$0xff]
    %v2375 = vld [vmem:[#allocation7 + $0x3d0] sm:$0xff]
    %v2376 = vld [vmem:[#allocation7 + $0x3d8] sm:$0xff]
    %v2377 = vld [vmem:[#allocation7 + $0x3e0] sm:$0xff]
    %v2378 = vld [vmem:[#allocation7 + $0x3e8] sm:$0xff]
    %v2379 = vld [vmem:[#allocation7 + $0x3f0] sm:$0xff]
    %v2380 = vld [vmem:[#allocation7 + $0x3f8] sm:$0xff]
    %v2381 = vld [vmem:[#allocation7 + $0x400] sm:$0xff]
    %v2382 = vld [vmem:[#allocation7 + $0x408] sm:$0xff]
    %v2383 = vld [vmem:[#allocation7 + $0x410] sm:$0xff]
    %v2384 = vld [vmem:[#allocation7 + $0x418] sm:$0xff]
    %v2385 = vld [vmem:[#allocation7 + $0x420] sm:$0xff]
    %v2386 = vld [vmem:[#allocation7 + $0x428] sm:$0xff]
    %v2387 = vld [vmem:[#allocation7 + $0x430] sm:$0xff]
    %v2388 = vld [vmem:[#allocation7 + $0x438] sm:$0xff]
    %v2389 = vld [vmem:[#allocation7 + $0x440] sm:$0xff]
    %v2390 = vld [vmem:[#allocation7 + $0x448] sm:$0xff]
    %v2391 = vld [vmem:[#allocation7 + $0x450] sm:$0xff]
    %v2392 = vld [vmem:[#allocation7 + $0x458] sm:$0xff]
    %v2393 = vld [vmem:[#allocation7 + $0x460] sm:$0xff]
    %v2394 = vld [vmem:[#allocation7 + $0x468] sm:$0xff]
    %v2395 = vld [vmem:[#allocation7 + $0x470] sm:$0xff]
    %v2396 = vld [vmem:[#allocation7 + $0x478] sm:$0xff]
    %v2397 = vld [vmem:[#allocation7 + $0x480] sm:$0xff]
    %v2398 = vld [vmem:[#allocation7 + $0x488] sm:$0xff]
    %v2399 = vld [vmem:[#allocation7 + $0x490] sm:$0xff]
    %v2400 = vld [vmem:[#allocation7 + $0x498] sm:$0xff]
    %v2401 = vld [vmem:[#allocation7 + $0x4a0] sm:$0xff]
    %v2402 = vld [vmem:[#allocation7 + $0x4a8] sm:$0xff]
    %v2403 = vld [vmem:[#allocation7 + $0x4b0] sm:$0xff]
    %v2404 = vld [vmem:[#allocation7 + $0x4b8] sm:$0xff]
    %v2405 = vld [vmem:[#allocation7 + $0x4c0] sm:$0xff]
    %v2406 = vld [vmem:[#allocation7 + $0x4c8] sm:$0xff]
    %v2407 = vld [vmem:[#allocation7 + $0x4d0] sm:$0xff]
    %v2408 = vld [vmem:[#allocation7 + $0x4d8] sm:$0xff]
    %v2409 = vld [vmem:[#allocation7 + $0x4e0] sm:$0xff]
    %v2410 = vld [vmem:[#allocation7 + $0x4e8] sm:$0xff]
    %v2411 = vld [vmem:[#allocation7 + $0x4f0] sm:$0xff]
    %v2412 = vld [vmem:[#allocation7 + $0x4f8] sm:$0xff]
    %v2413 = vld [vmem:[#allocation7 + $0x500] sm:$0xff]
    %v2414 = vld [vmem:[#allocation7 + $0x508] sm:$0xff]
    %v2415 = vld [vmem:[#allocation7 + $0x510] sm:$0xff]
    %v2416 = vld [vmem:[#allocation7 + $0x518] sm:$0xff]
    %v2417 = vld [vmem:[#allocation7 + $0x520] sm:$0xff]
    %v2418 = vld [vmem:[#allocation7 + $0x528] sm:$0xff]
    %v2419 = vld [vmem:[#allocation7 + $0x530] sm:$0xff]
    %v2420 = vld [vmem:[#allocation7 + $0x538] sm:$0xff]
    %v2421 = vld [vmem:[#allocation7 + $0x540] sm:$0xff]
    %v2422 = vld [vmem:[#allocation7 + $0x548] sm:$0xff]
    %v2423 = vld [vmem:[#allocation7 + $0x550] sm:$0xff]
    %v2424 = vld [vmem:[#allocation7 + $0x558] sm:$0xff]
    %v2425 = vld [vmem:[#allocation7 + $0x560] sm:$0xff]
    %v2426 = vld [vmem:[#allocation7 + $0x568] sm:$0xff]
    %v2427 = vld [vmem:[#allocation7 + $0x570] sm:$0xff]
    %v2428 = vld [vmem:[#allocation7 + $0x578] sm:$0xff]
    %v2429 = vld [vmem:[#allocation7 + $0x580] sm:$0xff]
    %v2430 = vld [vmem:[#allocation7 + $0x588] sm:$0xff]
    %v2431 = vld [vmem:[#allocation7 + $0x590] sm:$0xff]
    %v2432 = vld [vmem:[#allocation7 + $0x598] sm:$0xff]
    %v2433 = vld [vmem:[#allocation7 + $0x5a0] sm:$0xff]
    %v2434 = vld [vmem:[#allocation7 + $0x5a8] sm:$0xff]
    %v2435 = vld [vmem:[#allocation7 + $0x5b0] sm:$0xff]
    %v2436 = vld [vmem:[#allocation7 + $0x5b8] sm:$0xff]
    %v2437 = vld [vmem:[#allocation7 + $0x5c0] sm:$0xff]
    %v2438 = vld [vmem:[#allocation7 + $0x5c8] sm:$0xff]
    %v2439 = vld [vmem:[#allocation7 + $0x5d0] sm:$0xff]
    %v2440 = vld [vmem:[#allocation7 + $0x5d8] sm:$0xff]
    %v2441 = vld [vmem:[#allocation7 + $0x5e0] sm:$0xff]
    %v2442 = vld [vmem:[#allocation7 + $0x5e8] sm:$0xff]
    %v2443 = vld [vmem:[#allocation7 + $0x5f0] sm:$0xff]
    %v2444 = vld [vmem:[#allocation7 + $0x5f8] sm:$0xff]
    %v2637 = vunpack.c.l.b16 %v2253
    %v2638 = vunpack.c.h.b16 %v2253
    %v2639 = vunpack.c.l.b16 %v2254
    %v2640 = vunpack.c.h.b16 %v2254
    %v2641 = vunpack.c.l.b16 %v2255
    %v2642 = vunpack.c.h.b16 %v2255
    %v2643 = vunpack.c.l.b16 %v2256
    %v2644 = vunpack.c.h.b16 %v2256
    %v2645 = vunpack.c.l.b16 %v2257
    %v2646 = vunpack.c.h.b16 %v2257
    %v2647 = vunpack.c.l.b16 %v2258
    %v2648 = vunpack.c.h.b16 %v2258
    %v2649 = vunpack.c.l.b16 %v2259
    %v2650 = vunpack.c.h.b16 %v2259
    %v2651 = vunpack.c.l.b16 %v2260
    %v2652 = vunpack.c.h.b16 %v2260
    %v2653 = vunpack.c.l.b16 %v2261
    %v2654 = vunpack.c.h.b16 %v2261
    %v2655 = vunpack.c.l.b16 %v2262
    %v2656 = vunpack.c.h.b16 %v2262
    %v2657 = vunpack.c.l.b16 %v2263
    %v2658 = vunpack.c.h.b16 %v2263
    %v2659 = vunpack.c.l.b16 %v2264
    %v2660 = vunpack.c.h.b16 %v2264
    %v2661 = vunpack.c.l.b16 %v2265
    %v2662 = vunpack.c.h.b16 %v2265
    %v2663 = vunpack.c.l.b16 %v2266
    %v2664 = vunpack.c.h.b16 %v2266
    %v2665 = vunpack.c.l.b16 %v2267
    %v2666 = vunpack.c.h.b16 %v2267
    %v2667 = vunpack.c.l.b16 %v2268
    %v2668 = vunpack.c.h.b16 %v2268
    %v2669 = vunpack.c.l.b16 %v2269
    %v2670 = vunpack.c.h.b16 %v2269
    %v2671 = vunpack.c.l.b16 %v2270
    %v2672 = vunpack.c.h.b16 %v2270
    %v2673 = vunpack.c.l.b16 %v2271
    %v2674 = vunpack.c.h.b16 %v2271
    %v2675 = vunpack.c.l.b16 %v2272
    %v2676 = vunpack.c.h.b16 %v2272
    %v2677 = vunpack.c.l.b16 %v2273
    %v2678 = vunpack.c.h.b16 %v2273
    %v2679 = vunpack.c.l.b16 %v2274
    %v2680 = vunpack.c.h.b16 %v2274
    %v2681 = vunpack.c.l.b16 %v2275
    %v2682 = vunpack.c.h.b16 %v2275
    %v2683 = vunpack.c.l.b16 %v2276
    %v2684 = vunpack.c.h.b16 %v2276
    %v2685 = vunpack.c.l.b16 %v2277
    %v2686 = vunpack.c.h.b16 %v2277
    %v2687 = vunpack.c.l.b16 %v2278
    %v2688 = vunpack.c.h.b16 %v2278
    %v2689 = vunpack.c.l.b16 %v2279
    %v2690 = vunpack.c.h.b16 %v2279
    %v2691 = vunpack.c.l.b16 %v2280
    %v2692 = vunpack.c.h.b16 %v2280
    %v2693 = vunpack.c.l.b16 %v2281
    %v2694 = vunpack.c.h.b16 %v2281
    %v2695 = vunpack.c.l.b16 %v2282
    %v2696 = vunpack.c.h.b16 %v2282
    %v2697 = vunpack.c.l.b16 %v2283
    %v2698 = vunpack.c.h.b16 %v2283
    %v2699 = vunpack.c.l.b16 %v2284
    %v2700 = vunpack.c.h.b16 %v2284
    %v2701 = vunpack.c.l.b16 %v2285
    %v2702 = vunpack.c.h.b16 %v2285
    %v2703 = vunpack.c.l.b16 %v2286
    %v2704 = vunpack.c.h.b16 %v2286
    %v2705 = vunpack.c.l.b16 %v2287
    %v2706 = vunpack.c.h.b16 %v2287
    %v2707 = vunpack.c.l.b16 %v2288
    %v2708 = vunpack.c.h.b16 %v2288
    %v2709 = vunpack.c.l.b16 %v2289
    %v2710 = vunpack.c.h.b16 %v2289
    %v2711 = vunpack.c.l.b16 %v2290
    %v2712 = vunpack.c.h.b16 %v2290
    %v2713 = vunpack.c.l.b16 %v2291
    %v2714 = vunpack.c.h.b16 %v2291
    %v2715 = vunpack.c.l.b16 %v2292
    %v2716 = vunpack.c.h.b16 %v2292
    %v2717 = vunpack.c.l.b16 %v2293
    %v2718 = vunpack.c.h.b16 %v2293
    %v2719 = vunpack.c.l.b16 %v2294
    %v2720 = vunpack.c.h.b16 %v2294
    %v2721 = vunpack.c.l.b16 %v2295
    %v2722 = vunpack.c.h.b16 %v2295
    %v2723 = vunpack.c.l.b16 %v2296
    %v2724 = vunpack.c.h.b16 %v2296
    %v2725 = vunpack.c.l.b16 %v2297
    %v2726 = vunpack.c.h.b16 %v2297
    %v2727 = vunpack.c.l.b16 %v2298
    %v2728 = vunpack.c.h.b16 %v2298
    %v2729 = vunpack.c.l.b16 %v2299
    %v2730 = vunpack.c.h.b16 %v2299
    %v2731 = vunpack.c.l.b16 %v2300
    %v2732 = vunpack.c.h.b16 %v2300
    %v2733 = vunpack.c.l.b16 %v2301
    %v2734 = vunpack.c.h.b16 %v2301
    %v2735 = vunpack.c.l.b16 %v2302
    %v2736 = vunpack.c.h.b16 %v2302
    %v2737 = vunpack.c.l.b16 %v2303
    %v2738 = vunpack.c.h.b16 %v2303
    %v2739 = vunpack.c.l.b16 %v2304
    %v2740 = vunpack.c.h.b16 %v2304
    %v2741 = vunpack.c.l.b16 %v2305
    %v2742 = vunpack.c.h.b16 %v2305
    %v2743 = vunpack.c.l.b16 %v2306
    %v2744 = vunpack.c.h.b16 %v2306
    %v2745 = vunpack.c.l.b16 %v2307
    %v2746 = vunpack.c.h.b16 %v2307
    %v2747 = vunpack.c.l.b16 %v2308
    %v2748 = vunpack.c.h.b16 %v2308
    %v2749 = vunpack.c.l.b16 %v2309
    %v2750 = vunpack.c.h.b16 %v2309
    %v2751 = vunpack.c.l.b16 %v2310
    %v2752 = vunpack.c.h.b16 %v2310
    %v2753 = vunpack.c.l.b16 %v2311
    %v2754 = vunpack.c.h.b16 %v2311
    %v2755 = vunpack.c.l.b16 %v2312
    %v2756 = vunpack.c.h.b16 %v2312
    %v2757 = vunpack.c.l.b16 %v2313
    %v2758 = vunpack.c.h.b16 %v2313
    %v2759 = vunpack.c.l.b16 %v2314
    %v2760 = vunpack.c.h.b16 %v2314
    %v2761 = vunpack.c.l.b16 %v2315
    %v2762 = vunpack.c.h.b16 %v2315
    %v2763 = vunpack.c.l.b16 %v2316
    %v2764 = vunpack.c.h.b16 %v2316
    %v2765 = vunpack.c.l.b16 %v2317
    %v2766 = vunpack.c.h.b16 %v2317
    %v2767 = vunpack.c.l.b16 %v2318
    %v2768 = vunpack.c.h.b16 %v2318
    %v2769 = vunpack.c.l.b16 %v2319
    %v2770 = vunpack.c.h.b16 %v2319
    %v2771 = vunpack.c.l.b16 %v2320
    %v2772 = vunpack.c.h.b16 %v2320
    %v2773 = vunpack.c.l.b16 %v2321
    %v2774 = vunpack.c.h.b16 %v2321
    %v2775 = vunpack.c.l.b16 %v2322
    %v2776 = vunpack.c.h.b16 %v2322
    %v2777 = vunpack.c.l.b16 %v2323
    %v2778 = vunpack.c.h.b16 %v2323
    %v2779 = vunpack.c.l.b16 %v2324
    %v2780 = vunpack.c.h.b16 %v2324
    %v2781 = vunpack.c.l.b16 %v2325
    %v2782 = vunpack.c.h.b16 %v2325
    %v2783 = vunpack.c.l.b16 %v2326
    %v2784 = vunpack.c.h.b16 %v2326
    %v2785 = vunpack.c.l.b16 %v2327
    %v2786 = vunpack.c.h.b16 %v2327
    %v2787 = vunpack.c.l.b16 %v2328
    %v2788 = vunpack.c.h.b16 %v2328
    %v2789 = vunpack.c.l.b16 %v2329
    %v2790 = vunpack.c.h.b16 %v2329
    %v2791 = vunpack.c.l.b16 %v2330
    %v2792 = vunpack.c.h.b16 %v2330
    %v2793 = vunpack.c.l.b16 %v2331
    %v2794 = vunpack.c.h.b16 %v2331
    %v2795 = vunpack.c.l.b16 %v2332
    %v2796 = vunpack.c.h.b16 %v2332
    %v2797 = vunpack.c.l.b16 %v2333
    %v2798 = vunpack.c.h.b16 %v2333
    %v2799 = vunpack.c.l.b16 %v2334
    %v2800 = vunpack.c.h.b16 %v2334
    %v2801 = vunpack.c.l.b16 %v2335
    %v2802 = vunpack.c.h.b16 %v2335
    %v2803 = vunpack.c.l.b16 %v2336
    %v2804 = vunpack.c.h.b16 %v2336
    %v2805 = vunpack.c.l.b16 %v2337
    %v2806 = vunpack.c.h.b16 %v2337
    %v2807 = vunpack.c.l.b16 %v2338
    %v2808 = vunpack.c.h.b16 %v2338
    %v2809 = vunpack.c.l.b16 %v2339
    %v2810 = vunpack.c.h.b16 %v2339
    %v2811 = vunpack.c.l.b16 %v2340
    %v2812 = vunpack.c.h.b16 %v2340
    %v2813 = vunpack.c.l.b16 %v2341
    %v2814 = vunpack.c.h.b16 %v2341
    %v2815 = vunpack.c.l.b16 %v2342
    %v2816 = vunpack.c.h.b16 %v2342
    %v2817 = vunpack.c.l.b16 %v2343
    %v2818 = vunpack.c.h.b16 %v2343
    %v2819 = vunpack.c.l.b16 %v2344
    %v2820 = vunpack.c.h.b16 %v2344
    %v2821 = vunpack.c.l.b16 %v2345
    %v2822 = vunpack.c.h.b16 %v2345
    %v2823 = vunpack.c.l.b16 %v2346
    %v2824 = vunpack.c.h.b16 %v2346
    %v2825 = vunpack.c.l.b16 %v2347
    %v2826 = vunpack.c.h.b16 %v2347
    %v2827 = vunpack.c.l.b16 %v2348
    %v2828 = vunpack.c.h.b16 %v2348
    %v2829 = vunpack.c.l.b16 %v2349
    %v2830 = vunpack.c.h.b16 %v2349
    %v2831 = vunpack.c.l.b16 %v2350
    %v2832 = vunpack.c.h.b16 %v2350
    %v2833 = vunpack.c.l.b16 %v2351
    %v2834 = vunpack.c.h.b16 %v2351
    %v2835 = vunpack.c.l.b16 %v2352
    %v2836 = vunpack.c.h.b16 %v2352
    %v2837 = vunpack.c.l.b16 %v2353
    %v2838 = vunpack.c.h.b16 %v2353
    %v2839 = vunpack.c.l.b16 %v2354
    %v2840 = vunpack.c.h.b16 %v2354
    %v2841 = vunpack.c.l.b16 %v2355
    %v2842 = vunpack.c.h.b16 %v2355
    %v2843 = vunpack.c.l.b16 %v2356
    %v2844 = vunpack.c.h.b16 %v2356
    %v2845 = vunpack.c.l.b16 %v2357
    %v2846 = vunpack.c.h.b16 %v2357
    %v2847 = vunpack.c.l.b16 %v2358
    %v2848 = vunpack.c.h.b16 %v2358
    %v2849 = vunpack.c.l.b16 %v2359
    %v2850 = vunpack.c.h.b16 %v2359
    %v2851 = vunpack.c.l.b16 %v2360
    %v2852 = vunpack.c.h.b16 %v2360
    %v2853 = vunpack.c.l.b16 %v2361
    %v2854 = vunpack.c.h.b16 %v2361
    %v2855 = vunpack.c.l.b16 %v2362
    %v2856 = vunpack.c.h.b16 %v2362
    %v2857 = vunpack.c.l.b16 %v2363
    %v2858 = vunpack.c.h.b16 %v2363
    %v2859 = vunpack.c.l.b16 %v2364
    %v2860 = vunpack.c.h.b16 %v2364
    %v2861 = vunpack.c.l.b16 %v2365
    %v2862 = vunpack.c.h.b16 %v2365
    %v2863 = vunpack.c.l.b16 %v2366
    %v2864 = vunpack.c.h.b16 %v2366
    %v2865 = vunpack.c.l.b16 %v2367
    %v2866 = vunpack.c.h.b16 %v2367
    %v2867 = vunpack.c.l.b16 %v2368
    %v2868 = vunpack.c.h.b16 %v2368
    %v2869 = vunpack.c.l.b16 %v2369
    %v2870 = vunpack.c.h.b16 %v2369
    %v2871 = vunpack.c.l.b16 %v2370
    %v2872 = vunpack.c.h.b16 %v2370
    %v2873 = vunpack.c.l.b16 %v2371
    %v2874 = vunpack.c.h.b16 %v2371
    %v2875 = vunpack.c.l.b16 %v2372
    %v2876 = vunpack.c.h.b16 %v2372
    %v2877 = vunpack.c.l.b16 %v2373
    %v2878 = vunpack.c.h.b16 %v2373
    %v2879 = vunpack.c.l.b16 %v2374
    %v2880 = vunpack.c.h.b16 %v2374
    %v2881 = vunpack.c.l.b16 %v2375
    %v2882 = vunpack.c.h.b16 %v2375
    %v2883 = vunpack.c.l.b16 %v2376
    %v2884 = vunpack.c.h.b16 %v2376
    %v2885 = vunpack.c.l.b16 %v2377
    %v2886 = vunpack.c.h.b16 %v2377
    %v2887 = vunpack.c.l.b16 %v2378
    %v2888 = vunpack.c.h.b16 %v2378
    %v2889 = vunpack.c.l.b16 %v2379
    %v2890 = vunpack.c.h.b16 %v2379
    %v2891 = vunpack.c.l.b16 %v2380
    %v2892 = vunpack.c.h.b16 %v2380
    %v2893 = vunpack.c.l.b16 %v2381
    %v2894 = vunpack.c.h.b16 %v2381
    %v2895 = vunpack.c.l.b16 %v2382
    %v2896 = vunpack.c.h.b16 %v2382
    %v2897 = vunpack.c.l.b16 %v2383
    %v2898 = vunpack.c.h.b16 %v2383
    %v2899 = vunpack.c.l.b16 %v2384
    %v2900 = vunpack.c.h.b16 %v2384
    %v2901 = vunpack.c.l.b16 %v2385
    %v2902 = vunpack.c.h.b16 %v2385
    %v2903 = vunpack.c.l.b16 %v2386
    %v2904 = vunpack.c.h.b16 %v2386
    %v2905 = vunpack.c.l.b16 %v2387
    %v2906 = vunpack.c.h.b16 %v2387
    %v2907 = vunpack.c.l.b16 %v2388
    %v2908 = vunpack.c.h.b16 %v2388
    %v2909 = vunpack.c.l.b16 %v2389
    %v2910 = vunpack.c.h.b16 %v2389
    %v2911 = vunpack.c.l.b16 %v2390
    %v2912 = vunpack.c.h.b16 %v2390
    %v2913 = vunpack.c.l.b16 %v2391
    %v2914 = vunpack.c.h.b16 %v2391
    %v2915 = vunpack.c.l.b16 %v2392
    %v2916 = vunpack.c.h.b16 %v2392
    %v2917 = vunpack.c.l.b16 %v2393
    %v2918 = vunpack.c.h.b16 %v2393
    %v2919 = vunpack.c.l.b16 %v2394
    %v2920 = vunpack.c.h.b16 %v2394
    %v2921 = vunpack.c.l.b16 %v2395
    %v2922 = vunpack.c.h.b16 %v2395
    %v2923 = vunpack.c.l.b16 %v2396
    %v2924 = vunpack.c.h.b16 %v2396
    %v2925 = vunpack.c.l.b16 %v2397
    %v2926 = vunpack.c.h.b16 %v2397
    %v2927 = vunpack.c.l.b16 %v2398
    %v2928 = vunpack.c.h.b16 %v2398
    %v2929 = vunpack.c.l.b16 %v2399
    %v2930 = vunpack.c.h.b16 %v2399
    %v2931 = vunpack.c.l.b16 %v2400
    %v2932 = vunpack.c.h.b16 %v2400
    %v2933 = vunpack.c.l.b16 %v2401
    %v2934 = vunpack.c.h.b16 %v2401
    %v2935 = vunpack.c.l.b16 %v2402
    %v2936 = vunpack.c.h.b16 %v2402
    %v2937 = vunpack.c.l.b16 %v2403
    %v2938 = vunpack.c.h.b16 %v2403
    %v2939 = vunpack.c.l.b16 %v2404
    %v2940 = vunpack.c.h.b16 %v2404
    %v2941 = vunpack.c.l.b16 %v2405
    %v2942 = vunpack.c.h.b16 %v2405
    %v2943 = vunpack.c.l.b16 %v2406
    %v2944 = vunpack.c.h.b16 %v2406
    %v2945 = vunpack.c.l.b16 %v2407
    %v2946 = vunpack.c.h.b16 %v2407
    %v2947 = vunpack.c.l.b16 %v2408
    %v2948 = vunpack.c.h.b16 %v2408
    %v2949 = vunpack.c.l.b16 %v2409
    %v2950 = vunpack.c.h.b16 %v2409
    %v2951 = vunpack.c.l.b16 %v2410
    %v2952 = vunpack.c.h.b16 %v2410
    %v2953 = vunpack.c.l.b16 %v2411
    %v2954 = vunpack.c.h.b16 %v2411
    %v2955 = vunpack.c.l.b16 %v2412
    %v2956 = vunpack.c.h.b16 %v2412
    %v2957 = vunpack.c.l.b16 %v2413
    %v2958 = vunpack.c.h.b16 %v2413
    %v2959 = vunpack.c.l.b16 %v2414
    %v2960 = vunpack.c.h.b16 %v2414
    %v2961 = vunpack.c.l.b16 %v2415
    %v2962 = vunpack.c.h.b16 %v2415
    %v2963 = vunpack.c.l.b16 %v2416
    %v2964 = vunpack.c.h.b16 %v2416
    %v2965 = vunpack.c.l.b16 %v2417
    %v2966 = vunpack.c.h.b16 %v2417
    %v2967 = vunpack.c.l.b16 %v2418
    %v2968 = vunpack.c.h.b16 %v2418
    %v2969 = vunpack.c.l.b16 %v2419
    %v2970 = vunpack.c.h.b16 %v2419
    %v2971 = vunpack.c.l.b16 %v2420
    %v2972 = vunpack.c.h.b16 %v2420
    %v2973 = vunpack.c.l.b16 %v2421
    %v2974 = vunpack.c.h.b16 %v2421
    %v2975 = vunpack.c.l.b16 %v2422
    %v2976 = vunpack.c.h.b16 %v2422
    %v2977 = vunpack.c.l.b16 %v2423
    %v2978 = vunpack.c.h.b16 %v2423
    %v2979 = vunpack.c.l.b16 %v2424
    %v2980 = vunpack.c.h.b16 %v2424
    %v2981 = vunpack.c.l.b16 %v2425
    %v2982 = vunpack.c.h.b16 %v2425
    %v2983 = vunpack.c.l.b16 %v2426
    %v2984 = vunpack.c.h.b16 %v2426
    %v2985 = vunpack.c.l.b16 %v2427
    %v2986 = vunpack.c.h.b16 %v2427
    %v2987 = vunpack.c.l.b16 %v2428
    %v2988 = vunpack.c.h.b16 %v2428
    %v2989 = vunpack.c.l.b16 %v2429
    %v2990 = vunpack.c.h.b16 %v2429
    %v2991 = vunpack.c.l.b16 %v2430
    %v2992 = vunpack.c.h.b16 %v2430
    %v2993 = vunpack.c.l.b16 %v2431
    %v2994 = vunpack.c.h.b16 %v2431
    %v2995 = vunpack.c.l.b16 %v2432
    %v2996 = vunpack.c.h.b16 %v2432
    %v2997 = vunpack.c.l.b16 %v2433
    %v2998 = vunpack.c.h.b16 %v2433
    %v2999 = vunpack.c.l.b16 %v2434
    %v3000 = vunpack.c.h.b16 %v2434
    %v3001 = vunpack.c.l.b16 %v2435
    %v3002 = vunpack.c.h.b16 %v2435
    %v3003 = vunpack.c.l.b16 %v2436
    %v3004 = vunpack.c.h.b16 %v2436
    %v3005 = vunpack.c.l.b16 %v2437
    %v3006 = vunpack.c.h.b16 %v2437
    %v3007 = vunpack.c.l.b16 %v2438
    %v3008 = vunpack.c.h.b16 %v2438
    %v3009 = vunpack.c.l.b16 %v2439
    %v3010 = vunpack.c.h.b16 %v2439
    %v3011 = vunpack.c.l.b16 %v2440
    %v3012 = vunpack.c.h.b16 %v2440
    %v3013 = vunpack.c.l.b16 %v2441
    %v3014 = vunpack.c.h.b16 %v2441
    %v3015 = vunpack.c.l.b16 %v2442
    %v3016 = vunpack.c.h.b16 %v2442
    %v3017 = vunpack.c.l.b16 %v2443
    %v3018 = vunpack.c.h.b16 %v2443
    %v3019 = vunpack.c.l.b16 %v2444
    %v3020 = vunpack.c.h.b16 %v2444
    %v3021 = vpack.c.b16 %v2645, %v2637
    %v3022 = vpack.c.b16 %v2646, %v2638
    %v3023 = vpack.c.b16 %v2647, %v2639
    %v3024 = vpack.c.b16 %v2648, %v2640
    %v3025 = vpack.c.b16 %v2649, %v2641
    %v3026 = vpack.c.b16 %v2650, %v2642
    %v3027 = vpack.c.b16 %v2651, %v2643
    %v3028 = vpack.c.b16 %v2652, %v2644
    %v3029 = vpack.c.b16 %v2661, %v2653
    %v3030 = vpack.c.b16 %v2662, %v2654
    %v3031 = vpack.c.b16 %v2663, %v2655
    %v3032 = vpack.c.b16 %v2664, %v2656
    %v3033 = vpack.c.b16 %v2665, %v2657
    %v3034 = vpack.c.b16 %v2666, %v2658
    %v3035 = vpack.c.b16 %v2667, %v2659
    %v3036 = vpack.c.b16 %v2668, %v2660
    %v3037 = vpack.c.b16 %v2677, %v2669
    %v3038 = vpack.c.b16 %v2678, %v2670
    %v3039 = vpack.c.b16 %v2679, %v2671
    %v3040 = vpack.c.b16 %v2680, %v2672
    %v3041 = vpack.c.b16 %v2681, %v2673
    %v3042 = vpack.c.b16 %v2682, %v2674
    %v3043 = vpack.c.b16 %v2683, %v2675
    %v3044 = vpack.c.b16 %v2684, %v2676
    %v3045 = vpack.c.b16 %v2693, %v2685
    %v3046 = vpack.c.b16 %v2694, %v2686
    %v3047 = vpack.c.b16 %v2695, %v2687
    %v3048 = vpack.c.b16 %v2696, %v2688
    %v3049 = vpack.c.b16 %v2697, %v2689
    %v3050 = vpack.c.b16 %v2698, %v2690
    %v3051 = vpack.c.b16 %v2699, %v2691
    %v3052 = vpack.c.b16 %v2700, %v2692
    %v3053 = vpack.c.b16 %v2709, %v2701
    %v3054 = vpack.c.b16 %v2710, %v2702
    %v3055 = vpack.c.b16 %v2711, %v2703
    %v3056 = vpack.c.b16 %v2712, %v2704
    %v3057 = vpack.c.b16 %v2713, %v2705
    %v3058 = vpack.c.b16 %v2714, %v2706
    %v3059 = vpack.c.b16 %v2715, %v2707
    %v3060 = vpack.c.b16 %v2716, %v2708
    %v3061 = vpack.c.b16 %v2725, %v2717
    %v3062 = vpack.c.b16 %v2726, %v2718
    %v3063 = vpack.c.b16 %v2727, %v2719
    %v3064 = vpack.c.b16 %v2728, %v2720
    %v3065 = vpack.c.b16 %v2729, %v2721
    %v3066 = vpack.c.b16 %v2730, %v2722
    %v3067 = vpack.c.b16 %v2731, %v2723
    %v3068 = vpack.c.b16 %v2732, %v2724
    %v3069 = vpack.c.b16 %v2741, %v2733
    %v3070 = vpack.c.b16 %v2742, %v2734
    %v3071 = vpack.c.b16 %v2743, %v2735
    %v3072 = vpack.c.b16 %v2744, %v2736
    %v3073 = vpack.c.b16 %v2745, %v2737
    %v3074 = vpack.c.b16 %v2746, %v2738
    %v3075 = vpack.c.b16 %v2747, %v2739
    %v3076 = vpack.c.b16 %v2748, %v2740
    %v3077 = vpack.c.b16 %v2757, %v2749
    %v3078 = vpack.c.b16 %v2758, %v2750
    %v3079 = vpack.c.b16 %v2759, %v2751
    %v3080 = vpack.c.b16 %v2760, %v2752
    %v3081 = vpack.c.b16 %v2761, %v2753
    %v3082 = vpack.c.b16 %v2762, %v2754
    %v3083 = vpack.c.b16 %v2763, %v2755
    %v3084 = vpack.c.b16 %v2764, %v2756
    %v3085 = vpack.c.b16 %v2773, %v2765
    %v3086 = vpack.c.b16 %v2774, %v2766
    %v3087 = vpack.c.b16 %v2775, %v2767
    %v3088 = vpack.c.b16 %v2776, %v2768
    %v3089 = vpack.c.b16 %v2777, %v2769
    %v3090 = vpack.c.b16 %v2778, %v2770
    %v3091 = vpack.c.b16 %v2779, %v2771
    %v3092 = vpack.c.b16 %v2780, %v2772
    %v3093 = vpack.c.b16 %v2789, %v2781
    %v3094 = vpack.c.b16 %v2790, %v2782
    %v3095 = vpack.c.b16 %v2791, %v2783
    %v3096 = vpack.c.b16 %v2792, %v2784
    %v3097 = vpack.c.b16 %v2793, %v2785
    %v3098 = vpack.c.b16 %v2794, %v2786
    %v3099 = vpack.c.b16 %v2795, %v2787
    %v3100 = vpack.c.b16 %v2796, %v2788
    %v3101 = vpack.c.b16 %v2805, %v2797
    %v3102 = vpack.c.b16 %v2806, %v2798
    %v3103 = vpack.c.b16 %v2807, %v2799
    %v3104 = vpack.c.b16 %v2808, %v2800
    %v3105 = vpack.c.b16 %v2809, %v2801
    %v3106 = vpack.c.b16 %v2810, %v2802
    %v3107 = vpack.c.b16 %v2811, %v2803
    %v3108 = vpack.c.b16 %v2812, %v2804
    %v3109 = vpack.c.b16 %v2821, %v2813
    %v3110 = vpack.c.b16 %v2822, %v2814
    %v3111 = vpack.c.b16 %v2823, %v2815
    %v3112 = vpack.c.b16 %v2824, %v2816
    %v3113 = vpack.c.b16 %v2825, %v2817
    %v3114 = vpack.c.b16 %v2826, %v2818
    %v3115 = vpack.c.b16 %v2827, %v2819
    %v3116 = vpack.c.b16 %v2828, %v2820
    %v3117 = vpack.c.b16 %v2837, %v2829
    %v3118 = vpack.c.b16 %v2838, %v2830
    %v3119 = vpack.c.b16 %v2839, %v2831
    %v3120 = vpack.c.b16 %v2840, %v2832
    %v3121 = vpack.c.b16 %v2841, %v2833
    %v3122 = vpack.c.b16 %v2842, %v2834
    %v3123 = vpack.c.b16 %v2843, %v2835
    %v3124 = vpack.c.b16 %v2844, %v2836
    %v3125 = vpack.c.b16 %v2853, %v2845
    %v3126 = vpack.c.b16 %v2854, %v2846
    %v3127 = vpack.c.b16 %v2855, %v2847
    %v3128 = vpack.c.b16 %v2856, %v2848
    %v3129 = vpack.c.b16 %v2857, %v2849
    %v3130 = vpack.c.b16 %v2858, %v2850
    %v3131 = vpack.c.b16 %v2859, %v2851
    %v3132 = vpack.c.b16 %v2860, %v2852
    %v3133 = vpack.c.b16 %v2869, %v2861
    %v3134 = vpack.c.b16 %v2870, %v2862
    %v3135 = vpack.c.b16 %v2871, %v2863
    %v3136 = vpack.c.b16 %v2872, %v2864
    %v3137 = vpack.c.b16 %v2873, %v2865
    %v3138 = vpack.c.b16 %v2874, %v2866
    %v3139 = vpack.c.b16 %v2875, %v2867
    %v3140 = vpack.c.b16 %v2876, %v2868
    %v3141 = vpack.c.b16 %v2885, %v2877
    %v3142 = vpack.c.b16 %v2886, %v2878
    %v3143 = vpack.c.b16 %v2887, %v2879
    %v3144 = vpack.c.b16 %v2888, %v2880
    %v3145 = vpack.c.b16 %v2889, %v2881
    %v3146 = vpack.c.b16 %v2890, %v2882
    %v3147 = vpack.c.b16 %v2891, %v2883
    %v3148 = vpack.c.b16 %v2892, %v2884
    %v3149 = vpack.c.b16 %v2901, %v2893
    %v3150 = vpack.c.b16 %v2902, %v2894
    %v3151 = vpack.c.b16 %v2903, %v2895
    %v3152 = vpack.c.b16 %v2904, %v2896
    %v3153 = vpack.c.b16 %v2905, %v2897
    %v3154 = vpack.c.b16 %v2906, %v2898
    %v3155 = vpack.c.b16 %v2907, %v2899
    %v3156 = vpack.c.b16 %v2908, %v2900
    %v3157 = vpack.c.b16 %v2917, %v2909
    %v3158 = vpack.c.b16 %v2918, %v2910
    %v3159 = vpack.c.b16 %v2919, %v2911
    %v3160 = vpack.c.b16 %v2920, %v2912
    %v3161 = vpack.c.b16 %v2921, %v2913
    %v3162 = vpack.c.b16 %v2922, %v2914
    %v3163 = vpack.c.b16 %v2923, %v2915
    %v3164 = vpack.c.b16 %v2924, %v2916
    %v3165 = vpack.c.b16 %v2933, %v2925
    %v3166 = vpack.c.b16 %v2934, %v2926
    %v3167 = vpack.c.b16 %v2935, %v2927
    %v3168 = vpack.c.b16 %v2936, %v2928
    %v3169 = vpack.c.b16 %v2937, %v2929
    %v3170 = vpack.c.b16 %v2938, %v2930
    %v3171 = vpack.c.b16 %v2939, %v2931
    %v3172 = vpack.c.b16 %v2940, %v2932
    %v3173 = vpack.c.b16 %v2949, %v2941
    %v3174 = vpack.c.b16 %v2950, %v2942
    %v3175 = vpack.c.b16 %v2951, %v2943
    %v3176 = vpack.c.b16 %v2952, %v2944
    %v3177 = vpack.c.b16 %v2953, %v2945
    %v3178 = vpack.c.b16 %v2954, %v2946
    %v3179 = vpack.c.b16 %v2955, %v2947
    %v3180 = vpack.c.b16 %v2956, %v2948
    %v3181 = vpack.c.b16 %v2965, %v2957
    %v3182 = vpack.c.b16 %v2966, %v2958
    %v3183 = vpack.c.b16 %v2967, %v2959
    %v3184 = vpack.c.b16 %v2968, %v2960
    %v3185 = vpack.c.b16 %v2969, %v2961
    %v3186 = vpack.c.b16 %v2970, %v2962
    %v3187 = vpack.c.b16 %v2971, %v2963
    %v3188 = vpack.c.b16 %v2972, %v2964
    %v3189 = vpack.c.b16 %v2981, %v2973
    %v3190 = vpack.c.b16 %v2982, %v2974
    %v3191 = vpack.c.b16 %v2983, %v2975
    %v3192 = vpack.c.b16 %v2984, %v2976
    %v3193 = vpack.c.b16 %v2985, %v2977
    %v3194 = vpack.c.b16 %v2986, %v2978
    %v3195 = vpack.c.b16 %v2987, %v2979
    %v3196 = vpack.c.b16 %v2988, %v2980
    %v3197 = vpack.c.b16 %v2997, %v2989
    %v3198 = vpack.c.b16 %v2998, %v2990
    %v3199 = vpack.c.b16 %v2999, %v2991
    %v3200 = vpack.c.b16 %v3000, %v2992
    %v3201 = vpack.c.b16 %v3001, %v2993
    %v3202 = vpack.c.b16 %v3002, %v2994
    %v3203 = vpack.c.b16 %v3003, %v2995
    %v3204 = vpack.c.b16 %v3004, %v2996
    %v3205 = vpack.c.b16 %v3013, %v3005
    %v3206 = vpack.c.b16 %v3014, %v3006
    %v3207 = vpack.c.b16 %v3015, %v3007
    %v3208 = vpack.c.b16 %v3016, %v3008
    %v3209 = vpack.c.b16 %v3017, %v3009
    %v3210 = vpack.c.b16 %v3018, %v3010
    %v3211 = vpack.c.b16 %v3019, %v3011
    %v3212 = vpack.c.b16 %v3020, %v3012
    %3405 = vmatprep.subr.bf16.mxu0 %v3022
    %3406 = vmatpush1.bf16.msra.mxu0 %v3021
    %3407 = vmatprep.subr.bf16.mxu0 %v3030
    %3408 = vmatpush1.bf16.msra.mxu0 %v3029
    %3409 = vmatprep.subr.bf16.mxu0 %v3038
    %3410 = vmatpush1.bf16.msra.mxu0 %v3037
    %3411 = vmatprep.subr.bf16.mxu0 %v3046
    %3412 = vmatpush1.bf16.msra.mxu0 %v3045
    %3413 = vmatprep.subr.bf16.mxu0 %v3054
    %3414 = vmatpush1.bf16.msra.mxu0 %v3053
    %3415 = vmatprep.subr.bf16.mxu0 %v3062
    %3416 = vmatpush1.bf16.msra.mxu0 %v3061
    %3417 = vmatprep.subr.bf16.mxu0 %v3070
    %3418 = vmatpush1.bf16.msra.mxu0 %v3069
    %3419 = vmatprep.subr.bf16.mxu0 %v3078
    %3420 = vmatpush1.bf16.msra.mxu0 %v3077
    %3421 = vmatprep.subr.bf16.mxu0 %v3086
    %3422 = vmatpush1.bf16.msra.mxu0 %v3085
    %3423 = vmatprep.subr.bf16.mxu0 %v3094
    %3424 = vmatpush1.bf16.msra.mxu0 %v3093
    %3425 = vmatprep.subr.bf16.mxu0 %v3102
    %3426 = vmatpush1.bf16.msra.mxu0 %v3101
    %3427 = vmatprep.subr.bf16.mxu0 %v3110
    %3428 = vmatpush1.bf16.msra.mxu0 %v3109
    %3429 = vmatprep.subr.bf16.mxu0 %v3118
    %3430 = vmatpush1.bf16.msra.mxu0 %v3117
    %3431 = vmatprep.subr.bf16.mxu0 %v3126
    %3432 = vmatpush1.bf16.msra.mxu0 %v3125
    %3433 = vmatprep.subr.bf16.mxu0 %v3134
    %3434 = vmatpush1.bf16.msra.mxu0 %v3133
    %3435 = vmatprep.subr.bf16.mxu0 %v3142
    %3436 = vmatpush1.bf16.msra.mxu0 %v3141
    %3437 = vmatprep.mubr.bf16.mxu0 %v194
    %3438 = vmatmul.mubr.bf16.gmra.mrb[0].mxu0 %v193
    %v3439 = vpop.f32.mrb[0].mxu0
    %v3440 = vadd.f32 0.0, %v3439
    %v3441 = vpop.f32.mrb[0].mxu0
    %v3442 = vadd.f32 0.0, %v3441
    %v3443 = vpop.f32.mrb[0].mxu0
    %v3444 = vadd.f32 0.0, %v3443
    %v3445 = vpop.f32.mrb[0].mxu0
    %v3446 = vadd.f32 0.0, %v3445
    %3447 = vmatprep.mubr.bf16.mxu0 %v197
    %3448 = vmatmul.mubr.bf16.gmra.mrb[0].mxu0 %v196
    %v3449 = vpop.f32.mrb[0].mxu0
    %v3450 = vadd.f32 0.0, %v3449
    %v3451 = vpop.f32.mrb[0].mxu0
    %v3452 = vadd.f32 0.0, %v3451
    %v3453 = vpop.f32.mrb[0].mxu0
    %v3454 = vadd.f32 0.0, %v3453
    %v3455 = vpop.f32.mrb[0].mxu0
    %v3456 = vadd.f32 0.0, %v3455
    %3457 = vdwg.mxu0
    %3458 = vmatprep.subr.bf16.mxu0 %v3150
    %3459 = vmatpush1.bf16.msra.mxu0 %v3149
    %3460 = vmatprep.subr.bf16.mxu0 %v3158
    %3461 = vmatpush1.bf16.msra.mxu0 %v3157
    %3462 = vmatprep.subr.bf16.mxu0 %v3166
    %3463 = vmatpush1.bf16.msra.mxu0 %v3165
    %3464 = vmatprep.subr.bf16.mxu0 %v3174
    %3465 = vmatpush1.bf16.msra.mxu0 %v3173
    %3466 = vmatprep.subr.bf16.mxu0 %v3182
    %3467 = vmatpush1.bf16.msra.mxu0 %v3181
    %3468 = vmatprep.subr.bf16.mxu0 %v3190
    %3469 = vmatpush1.bf16.msra.mxu0 %v3189
    %3470 = vmatprep.subr.bf16.mxu0 %v3198
    %3471 = vmatpush1.bf16.msra.mxu0 %v3197
    %3472 = vmatprep.subr.bf16.mxu0 %v3206
    %3473 = vmatpush1.bf16.msra.mxu0 %v3205
    %3474 = vmatprep.subr.bf16.mxu0 0
    %3475 = vmatpush1.bf16.msra.mxu0 0
    %3476 = vmatprep.subr.bf16.mxu0 0
    %3477 = vmatpush1.bf16.msra.mxu0 0
    %3478 = vmatprep.subr.bf16.mxu0 0
    %3479 = vmatpush1.bf16.msra.mxu0 0
    %3480 = vmatprep.subr.bf16.mxu0 0
    %3481 = vmatpush1.bf16.msra.mxu0 0
    %3482 = vmatprep.subr.bf16.mxu0 0
    %3483 = vmatpush1.bf16.msra.mxu0 0
    %3484 = vmatprep.subr.bf16.mxu0 0
    %3485 = vmatpush1.bf16.msra.mxu0 0
    %3486 = vmatprep.subr.bf16.mxu0 0
    %3487 = vmatpush1.bf16.msra.mxu0 0
    %3488 = vmatprep.subr.bf16.mxu0 0
    %3489 = vmatpush1.bf16.msra.mxu0 0
    %3490 = vmatprep.mubr.bf16.mxu0 0
    %3491 = vmatmul.mubr.bf16.gmra.mrb[0].mxu0 %v195
    %v3492 = vpop.f32.mrb[0].mxu0
    %v3493 = vadd.f32 %v3440, %v3492
    %v3494 = vpop.f32.mrb[0].mxu0
    %v3495 = vadd.f32 %v3442, %v3494
    %v3496 = vpop.f32.mrb[0].mxu0
    %v3497 = vadd.f32 %v3444, %v3496
    %v3498 = vpop.f32.mrb[0].mxu0
    %v3499 = vadd.f32 %v3446, %v3498
    %3500 = vmatprep.mubr.bf16.mxu0 0
    %3501 = vmatmul.mubr.bf16.gmra.mrb[0].mxu0 %v198
    %v3502 = vpop.f32.mrb[0].mxu0
    %v3503 = vadd.f32 %v3450, %v3502
    %v3504 = vpop.f32.mrb[0].mxu0
    %v3505 = vadd.f32 %v3452, %v3504
    %v3506 = vpop.f32.mrb[0].mxu0
    %v3507 = vadd.f32 %v3454, %v3506
    %v3508 = vpop.f32.mrb[0].mxu0
    %v3509 = vadd.f32 %v3456, %v3508
    %3510 = vdwg.mxu0
    %3511 = vmatprep.subr.bf16.mxu0 %v3024
    %3512 = vmatpush1.bf16.msra.mxu0 %v3023
    %3513 = vmatprep.subr.bf16.mxu0 %v3032
    %3514 = vmatpush1.bf16.msra.mxu0 %v3031
    %3515 = vmatprep.subr.bf16.mxu0 %v3040
    %3516 = vmatpush1.bf16.msra.mxu0 %v3039
    %3517 = vmatprep.subr.bf16.mxu0 %v3048
    %3518 = vmatpush1.bf16.msra.mxu0 %v3047
    %3519 = vmatprep.subr.bf16.mxu0 %v3056
    %3520 = vmatpush1.bf16.msra.mxu0 %v3055
    %3521 = vmatprep.subr.bf16.mxu0 %v3064
    %3522 = vmatpush1.bf16.msra.mxu0 %v3063
    %3523 = vmatprep.subr.bf16.mxu0 %v3072
    %3524 = vmatpush1.bf16.msra.mxu0 %v3071
    %3525 = vmatprep.subr.bf16.mxu0 %v3080
    %3526 = vmatpush1.bf16.msra.mxu0 %v3079
    %3527 = vmatprep.subr.bf16.mxu0 %v3088
    %3528 = vmatpush1.bf16.msra.mxu0 %v3087
    %3529 = vmatprep.subr.bf16.mxu0 %v3096
    %3530 = vmatpush1.bf16.msra.mxu0 %v3095
    %3531 = vmatprep.subr.bf16.mxu0 %v3104
    %3532 = vmatpush1.bf16.msra.mxu0 %v3103
    %3533 = vmatprep.subr.bf16.mxu0 %v3112
    %3534 = vmatpush1.bf16.msra.mxu0 %v3111
    %3535 = vmatprep.subr.bf16.mxu0 %v3120
    %3536 = vmatpush1.bf16.msra.mxu0 %v3119
    %3537 = vmatprep.subr.bf16.mxu0 %v3128
    %3538 = vmatpush1.bf16.msra.mxu0 %v3127
    %3539 = vmatprep.subr.bf16.mxu0 %v3136
    %3540 = vmatpush1.bf16.msra.mxu0 %v3135
    %3541 = vmatprep.subr.bf16.mxu0 %v3144
    %3542 = vmatpush1.bf16.msra.mxu0 %v3143
    %3543 = vmatprep.mubr.bf16.mxu0 %v194
    %3544 = vmatmul.mubr.bf16.gmra.mrb[0].mxu0 %v193
    %v3545 = vpop.f32.mrb[0].mxu0
    %v3546 = vadd.f32 0.0, %v3545
    %v3547 = vpop.f32.mrb[0].mxu0
    %v3548 = vadd.f32 0.0, %v3547
    %v3549 = vpop.f32.mrb[0].mxu0
    %v3550 = vadd.f32 0.0, %v3549
    %v3551 = vpop.f32.mrb[0].mxu0
    %v3552 = vadd.f32 0.0, %v3551
    %3553 = vmatprep.mubr.bf16.mxu0 %v197
    %3554 = vmatmul.mubr.bf16.gmra.mrb[0].mxu0 %v196
    %v3555 = vpop.f32.mrb[0].mxu0
    %v3556 = vadd.f32 0.0, %v3555
    %v3557 = vpop.f32.mrb[0].mxu0
    %v3558 = vadd.f32 0.0, %v3557
    %v3559 = vpop.f32.mrb[0].mxu0
    %v3560 = vadd.f32 0.0, %v3559
    %v3561 = vpop.f32.mrb[0].mxu0
    %v3562 = vadd.f32 0.0, %v3561
    %3563 = vdwg.mxu0
    %3564 = vmatprep.subr.bf16.mxu0 %v3152
    %3565 = vmatpush1.bf16.msra.mxu0 %v3151
    %3566 = vmatprep.subr.bf16.mxu0 %v3160
    %3567 = vmatpush1.bf16.msra.mxu0 %v3159
    %3568 = vmatprep.subr.bf16.mxu0 %v3168
    %3569 = vmatpush1.bf16.msra.mxu0 %v3167
    %3570 = vmatprep.subr.bf16.mxu0 %v3176
    %3571 = vmatpush1.bf16.msra.mxu0 %v3175
    %3572 = vmatprep.subr.bf16.mxu0 %v3184
    %3573 = vmatpush1.bf16.msra.mxu0 %v3183
    %3574 = vmatprep.subr.bf16.mxu0 %v3192
    %3575 = vmatpush1.bf16.msra.mxu0 %v3191
    %3576 = vmatprep.subr.bf16.mxu0 %v3200
    %3577 = vmatpush1.bf16.msra.mxu0 %v3199
    %3578 = vmatprep.subr.bf16.mxu0 %v3208
    %3579 = vmatpush1.bf16.msra.mxu0 %v3207
    %3580 = vmatprep.subr.bf16.mxu0 0
    %3581 = vmatpush1.bf16.msra.mxu0 0
    %3582 = vmatprep.subr.bf16.mxu0 0
    %3583 = vmatpush1.bf16.msra.mxu0 0
    %3584 = vmatprep.subr.bf16.mxu0 0
    %3585 = vmatpush1.bf16.msra.mxu0 0
    %3586 = vmatprep.subr.bf16.mxu0 0
    %3587 = vmatpush1.bf16.msra.mxu0 0
    %3588 = vmatprep.subr.bf16.mxu0 0
    %3589 = vmatpush1.bf16.msra.mxu0 0
    %3590 = vmatprep.subr.bf16.mxu0 0
    %3591 = vmatpush1.bf16.msra.mxu0 0
    %3592 = vmatprep.subr.bf16.mxu0 0
    %3593 = vmatpush1.bf16.msra.mxu0 0
    %3594 = vmatprep.subr.bf16.mxu0 0
    %3595 = vmatpush1.bf16.msra.mxu0 0
    %3596 = vmatprep.mubr.bf16.mxu0 0
    %3597 = vmatmul.mubr.bf16.gmra.mrb[0].mxu0 %v195
    %v3598 = vpop.f32.mrb[0].mxu0
    %v3599 = vadd.f32 %v3546, %v3598
    %v3600 = vpop.f32.mrb[0].mxu0
    %v3601 = vadd.f32 %v3548, %v3600
    %v3602 = vpop.f32.mrb[0].mxu0
    %v3603 = vadd.f32 %v3550, %v3602
    %v3604 = vpop.f32.mrb[0].mxu0
    %v3605 = vadd.f32 %v3552, %v3604
    %3606 = vmatprep.mubr.bf16.mxu0 0
    %3607 = vmatmul.mubr.bf16.gmra.mrb[0].mxu0 %v198
    %v3608 = vpop.f32.mrb[0].mxu0
    %v3609 = vadd.f32 %v3556, %v3608
    %v3610 = vpop.f32.mrb[0].mxu0
    %v3611 = vadd.f32 %v3558, %v3610
    %v3612 = vpop.f32.mrb[0].mxu0
    %v3613 = vadd.f32 %v3560, %v3612
    %v3614 = vpop.f32.mrb[0].mxu0
    %v3615 = vadd.f32 %v3562, %v3614
    %3616 = vdwg.mxu0
    %3617 = vmatprep.subr.bf16.mxu0 %v3026
    %3618 = vmatpush1.bf16.msra.mxu0 %v3025
    %3619 = vmatprep.subr.bf16.mxu0 %v3034
    %3620 = vmatpush1.bf16.msra.mxu0 %v3033
    %3621 = vmatprep.subr.bf16.mxu0 %v3042
    %3622 = vmatpush1.bf16.msra.mxu0 %v3041
    %3623 = vmatprep.subr.bf16.mxu0 %v3050
    %3624 = vmatpush1.bf16.msra.mxu0 %v3049
    %3625 = vmatprep.subr.bf16.mxu0 %v3058
    %3626 = vmatpush1.bf16.msra.mxu0 %v3057
    %3627 = vmatprep.subr.bf16.mxu0 %v3066
    %3628 = vmatpush1.bf16.msra.mxu0 %v3065
    %3629 = vmatprep.subr.bf16.mxu0 %v3074
    %3630 = vmatpush1.bf16.msra.mxu0 %v3073
    %3631 = vmatprep.subr.bf16.mxu0 %v3082
    %3632 = vmatpush1.bf16.msra.mxu0 %v3081
    %3633 = vmatprep.subr.bf16.mxu0 %v3090
    %3634 = vmatpush1.bf16.msra.mxu0 %v3089
    %3635 = vmatprep.subr.bf16.mxu0 %v3098
    %3636 = vmatpush1.bf16.msra.mxu0 %v3097
    %3637 = vmatprep.subr.bf16.mxu0 %v3106
    %3638 = vmatpush1.bf16.msra.mxu0 %v3105
    %3639 = vmatprep.subr.bf16.mxu0 %v3114
    %3640 = vmatpush1.bf16.msra.mxu0 %v3113
    %3641 = vmatprep.subr.bf16.mxu0 %v3122
    %3642 = vmatpush1.bf16.msra.mxu0 %v3121
    %3643 = vmatprep.subr.bf16.mxu0 %v3130
    %3644 = vmatpush1.bf16.msra.mxu0 %v3129
    %3645 = vmatprep.subr.bf16.mxu0 %v3138
    %3646 = vmatpush1.bf16.msra.mxu0 %v3137
    %3647 = vmatprep.subr.bf16.mxu0 %v3146
    %3648 = vmatpush1.bf16.msra.mxu0 %v3145
    %3649 = vmatprep.mubr.bf16.mxu0 %v194
    %3650 = vmatmul.mubr.bf16.gmra.mrb[0].mxu0 %v193
    %v3651 = vpop.f32.mrb[0].mxu0
    %v3652 = vadd.f32 0.0, %v3651
    %v3653 = vpop.f32.mrb[0].mxu0
    %v3654 = vadd.f32 0.0, %v3653
    %v3655 = vpop.f32.mrb[0].mxu0
    %v3656 = vadd.f32 0.0, %v3655
    %v3657 = vpop.f32.mrb[0].mxu0
    %v3658 = vadd.f32 0.0, %v3657
    %3659 = vmatprep.mubr.bf16.mxu0 %v197
    %3660 = vmatmul.mubr.bf16.gmra.mrb[0].mxu0 %v196
    %v3661 = vpop.f32.mrb[0].mxu0
    %v3662 = vadd.f32 0.0, %v3661
    %v3663 = vpop.f32.mrb[0].mxu0
    %v3664 = vadd.f32 0.0, %v3663
    %v3665 = vpop.f32.mrb[0].mxu0
    %v3666 = vadd.f32 0.0, %v3665
    %v3667 = vpop.f32.mrb[0].mxu0
    %v3668 = vadd.f32 0.0, %v3667
    %3669 = vdwg.mxu0
    %3670 = vmatprep.subr.bf16.mxu0 %v3154
    %3671 = vmatpush1.bf16.msra.mxu0 %v3153
    %3672 = vmatprep.subr.bf16.mxu0 %v3162
    %3673 = vmatpush1.bf16.msra.mxu0 %v3161
    %3674 = vmatprep.subr.bf16.mxu0 %v3170
    %3675 = vmatpush1.bf16.msra.mxu0 %v3169
    %3676 = vmatprep.subr.bf16.mxu0 %v3178
    %3677 = vmatpush1.bf16.msra.mxu0 %v3177
    %3678 = vmatprep.subr.bf16.mxu0 %v3186
    %3679 = vmatpush1.bf16.msra.mxu0 %v3185
    %3680 = vmatprep.subr.bf16.mxu0 %v3194
    %3681 = vmatpush1.bf16.msra.mxu0 %v3193
    %3682 = vmatprep.subr.bf16.mxu0 %v3202
    %3683 = vmatpush1.bf16.msra.mxu0 %v3201
    %3684 = vmatprep.subr.bf16.mxu0 %v3210
    %3685 = vmatpush1.bf16.msra.mxu0 %v3209
    %3686 = vmatprep.subr.bf16.mxu0 0
    %3687 = vmatpush1.bf16.msra.mxu0 0
    %3688 = vmatprep.subr.bf16.mxu0 0
    %3689 = vmatpush1.bf16.msra.mxu0 0
    %3690 = vmatprep.subr.bf16.mxu0 0
    %3691 = vmatpush1.bf16.msra.mxu0 0
    %3692 = vmatprep.subr.bf16.mxu0 0
    %3693 = vmatpush1.bf16.msra.mxu0 0
    %3694 = vmatprep.subr.bf16.mxu0 0
    %3695 = vmatpush1.bf16.msra.mxu0 0
    %3696 = vmatprep.subr.bf16.mxu0 0
    %3697 = vmatpush1.bf16.msra.mxu0 0
    %3698 = vmatprep.subr.bf16.mxu0 0
    %3699 = vmatpush1.bf16.msra.mxu0 0
    %3700 = vmatprep.subr.bf16.mxu0 0
    %3701 = vmatpush1.bf16.msra.mxu0 0
    %3702 = vmatprep.mubr.bf16.mxu0 0
    %3703 = vmatmul.mubr.bf16.gmra.mrb[0].mxu0 %v195
    %v3704 = vpop.f32.mrb[0].mxu0
    %v3705 = vadd.f32 %v3652, %v3704
    %v3706 = vpop.f32.mrb[0].mxu0
    %v3707 = vadd.f32 %v3654, %v3706
    %v3708 = vpop.f32.mrb[0].mxu0
    %v3709 = vadd.f32 %v3656, %v3708
    %v3710 = vpop.f32.mrb[0].mxu0
    %v3711 = vadd.f32 %v3658, %v3710
    %3712 = vmatprep.mubr.bf16.mxu0 0
    %3713 = vmatmul.mubr.bf16.gmra.mrb[0].mxu0 %v198
    %v3714 = vpop.f32.mrb[0].mxu0
    %v3715 = vadd.f32 %v3662, %v3714
    %v3716 = vpop.f32.mrb[0].mxu0
    %v3717 = vadd.f32 %v3664, %v3716
    %v3718 = vpop.f32.mrb[0].mxu0
    %v3719 = vadd.f32 %v3666, %v3718
    %v3720 = vpop.f32.mrb[0].mxu0
    %v3721 = vadd.f32 %v3668, %v3720
    %3722 = vdwg.mxu0
    %3723 = vmatprep.subr.bf16.mxu0 %v3028
    %3724 = vmatpush1.bf16.msra.mxu0 %v3027
    %3725 = vmatprep.subr.bf16.mxu0 %v3036
    %3726 = vmatpush1.bf16.msra.mxu0 %v3035
    %3727 = vmatprep.subr.bf16.mxu0 %v3044
    %3728 = vmatpush1.bf16.msra.mxu0 %v3043
    %3729 = vmatprep.subr.bf16.mxu0 %v3052
    %3730 = vmatpush1.bf16.msra.mxu0 %v3051
    %3731 = vmatprep.subr.bf16.mxu0 %v3060
    %3732 = vmatpush1.bf16.msra.mxu0 %v3059
    %3733 = vmatprep.subr.bf16.mxu0 %v3068
    %3734 = vmatpush1.bf16.msra.mxu0 %v3067
    %3735 = vmatprep.subr.bf16.mxu0 %v3076
    %3736 = vmatpush1.bf16.msra.mxu0 %v3075
    %3737 = vmatprep.subr.bf16.mxu0 %v3084
    %3738 = vmatpush1.bf16.msra.mxu0 %v3083
    %3739 = vmatprep.subr.bf16.mxu0 %v3092
    %3740 = vmatpush1.bf16.msra.mxu0 %v3091
    %3741 = vmatprep.subr.bf16.mxu0 %v3100
    %3742 = vmatpush1.bf16.msra.mxu0 %v3099
    %3743 = vmatprep.subr.bf16.mxu0 %v3108
    %3744 = vmatpush1.bf16.msra.mxu0 %v3107
    %3745 = vmatprep.subr.bf16.mxu0 %v3116
    %3746 = vmatpush1.bf16.msra.mxu0 %v3115
    %3747 = vmatprep.subr.bf16.mxu0 %v3124
    %3748 = vmatpush1.bf16.msra.mxu0 %v3123
    %3749 = vmatprep.subr.bf16.mxu0 %v3132
    %3750 = vmatpush1.bf16.msra.mxu0 %v3131
    %3751 = vmatprep.subr.bf16.mxu0 %v3140
    %3752 = vmatpush1.bf16.msra.mxu0 %v3139
    %3753 = vmatprep.subr.bf16.mxu0 %v3148
    %3754 = vmatpush1.bf16.msra.mxu0 %v3147
    %3755 = vmatprep.mubr.bf16.mxu0 %v194
    %3756 = vmatmul.mubr.bf16.gmra.mrb[0].mxu0 %v193
    %v3757 = vpop.f32.mrb[0].mxu0
    %v3758 = vadd.f32 0.0, %v3757
    %v3759 = vpop.f32.mrb[0].mxu0
    %v3760 = vadd.f32 0.0, %v3759
    %v3761 = vpop.f32.mrb[0].mxu0
    %v3762 = vadd.f32 0.0, %v3761
    %v3763 = vpop.f32.mrb[0].mxu0
    %v3764 = vadd.f32 0.0, %v3763
    %3765 = vmatprep.mubr.bf16.mxu0 %v197
    %3766 = vmatmul.mubr.bf16.gmra.mrb[0].mxu0 %v196
    %v3767 = vpop.f32.mrb[0].mxu0
    %v3768 = vadd.f32 0.0, %v3767
    %v3769 = vpop.f32.mrb[0].mxu0
    %v3770 = vadd.f32 0.0, %v3769
    %v3771 = vpop.f32.mrb[0].mxu0
    %v3772 = vadd.f32 0.0, %v3771
    %v3773 = vpop.f32.mrb[0].mxu0
    %v3774 = vadd.f32 0.0, %v3773
    %3775 = vdwg.mxu0
    %3776 = vmatprep.subr.bf16.mxu0 %v3156
    %3777 = vmatpush1.bf16.msra.mxu0 %v3155
    %3778 = vmatprep.subr.bf16.mxu0 %v3164
    %3779 = vmatpush1.bf16.msra.mxu0 %v3163
    %3780 = vmatprep.subr.bf16.mxu0 %v3172
    %3781 = vmatpush1.bf16.msra.mxu0 %v3171
    %3782 = vmatprep.subr.bf16.mxu0 %v3180
    %3783 = vmatpush1.bf16.msra.mxu0 %v3179
    %3784 = vmatprep.subr.bf16.mxu0 %v3188
    %3785 = vmatpush1.bf16.msra.mxu0 %v3187
    %3786 = vmatprep.subr.bf16.mxu0 %v3196
    %3787 = vmatpush1.bf16.msra.mxu0 %v3195
    %3788 = vmatprep.subr.bf16.mxu0 %v3204
    %3789 = vmatpush1.bf16.msra.mxu0 %v3203
    %3790 = vmatprep.subr.bf16.mxu0 %v3212
    %3791 = vmatpush1.bf16.msra.mxu0 %v3211
    %3792 = vmatprep.subr.bf16.mxu0 0
    %3793 = vmatpush1.bf16.msra.mxu0 0
    %3794 = vmatprep.subr.bf16.mxu0 0
    %3795 = vmatpush1.bf16.msra.mxu0 0
    %3796 = vmatprep.subr.bf16.mxu0 0
    %3797 = vmatpush1.bf16.msra.mxu0 0
    %3798 = vmatprep.subr.bf16.mxu0 0
    %3799 = vmatpush1.bf16.msra.mxu0 0
    %3800 = vmatprep.subr.bf16.mxu0 0
    %3801 = vmatpush1.bf16.msra.mxu0 0
    %3802 = vmatprep.subr.bf16.mxu0 0
    %3803 = vmatpush1.bf16.msra.mxu0 0
    %3804 = vmatprep.subr.bf16.mxu0 0
    %3805 = vmatpush1.bf16.msra.mxu0 0
    %3806 = vmatprep.subr.bf16.mxu0 0
    %3807 = vmatpush1.bf16.msra.mxu0 0
    %3808 = vmatprep.mubr.bf16.mxu0 0
    %3809 = vmatmul.mubr.bf16.gmra.mrb[0].mxu0 %v195
    %v3810 = vpop.f32.mrb[0].mxu0
    %v3811 = vadd.f32 %v3758, %v3810
    %v3812 = vpop.f32.mrb[0].mxu0
    %v3813 = vadd.f32 %v3760, %v3812
    %v3814 = vpop.f32.mrb[0].mxu0
    %v3815 = vadd.f32 %v3762, %v3814
    %v3816 = vpop.f32.mrb[0].mxu0
    %v3817 = vadd.f32 %v3764, %v3816
    %3818 = vmatprep.mubr.bf16.mxu0 0
    %3819 = vmatmul.mubr.bf16.gmra.mrb[0].mxu0 %v198
    %v3820 = vpop.f32.mrb[0].mxu0
    %v3821 = vadd.f32 %v3768, %v3820
    %v3822 = vpop.f32.mrb[0].mxu0
    %v3823 = vadd.f32 %v3770, %v3822
    %v3824 = vpop.f32.mrb[0].mxu0
    %v3825 = vadd.f32 %v3772, %v3824
    %v3826 = vpop.f32.mrb[0].mxu0
    %v3827 = vadd.f32 %v3774, %v3826
    %3828 = vdwg.mxu0
    %v3837 = vrot.slane %v3599, 1
    %v3838 = vrot.slane %v3603, 1
    %v3839 = vsel %vm905, %v3837, %v3838
    %v3840 = vrot.slane %v3601, 1
    %v3841 = vrot.slane %v3605, 1
    %v3842 = vsel %vm905, %v3840, %v3841
    %v3843 = vrot.slane %v3609, 1
    %v3844 = vrot.slane %v3613, 1
    %v3845 = vsel %vm905, %v3843, %v3844
    %v3846 = vrot.slane %v3611, 1
    %v3847 = vrot.slane %v3615, 1
    %v3848 = vsel %vm905, %v3846, %v3847
    %v3857 = vadd.f32 %v3493, %v3839
    %v3858 = vadd.f32 %v3495, %v3842
    %v3859 = vadd.f32 %v3497, %v3838
    %v3860 = vadd.f32 %v3499, %v3841
    %v3861 = vadd.f32 %v3503, %v3845
    %v3862 = vadd.f32 %v3505, %v3848
    %v3863 = vadd.f32 %v3507, %v3844
    %v3864 = vadd.f32 %v3509, %v3847
    %v3873 = vrot.slane %v3705, 2
    %v3874 = vrot.slane %v3709, 2
    %v3875 = vsel %vm2192, %v3873, %v3874
    %v3876 = vrot.slane %v3707, 2
    %v3877 = vrot.slane %v3711, 2
    %v3878 = vsel %vm2192, %v3876, %v3877
    %v3879 = vrot.slane %v3715, 2
    %v3880 = vrot.slane %v3719, 2
    %v3881 = vsel %vm2192, %v3879, %v3880
    %v3882 = vrot.slane %v3717, 2
    %v3883 = vrot.slane %v3721, 2
    %v3884 = vsel %vm2192, %v3882, %v3883
    %v3893 = vadd.f32 %v3857, %v3875
    %v3894 = vadd.f32 %v3858, %v3878
    %v3895 = vadd.f32 %v3859, %v3874
    %v3896 = vadd.f32 %v3860, %v3877
    %v3897 = vadd.f32 %v3861, %v3881
    %v3898 = vadd.f32 %v3862, %v3884
    %v3899 = vadd.f32 %v3863, %v3880
    %v3900 = vadd.f32 %v3864, %v3883
    %vm3909 = vcmask 1044480
    %v3910 = vrot.slane %v3811, 3
    %v3911 = vrot.slane %v3815, 3
    %v3912 = vsel %vm3909, %v3910, %v3911
    %v3913 = vrot.slane %v3813, 3
    %v3914 = vrot.slane %v3817, 3
    %v3915 = vsel %vm3909, %v3913, %v3914
    %v3916 = vrot.slane %v3821, 3
    %v3917 = vrot.slane %v3825, 3
    %v3918 = vsel %vm3909, %v3916, %v3917
    %v3919 = vrot.slane %v3823, 3
    %v3920 = vrot.slane %v3827, 3
    %v3921 = vsel %vm3909, %v3919, %v3920
    %v3930 = vadd.f32 %v3893, %v3912
    %v3931 = vadd.f32 %v3894, %v3915
    %v3932 = vadd.f32 %v3895, %v3911
    %v3933 = vadd.f32 %v3896, %v3914
    %v3934 = vadd.f32 %v3897, %v3918
    %v3935 = vadd.f32 %v3898, %v3921
    %v3936 = vadd.f32 %v3899, %v3917
    %v3937 = vadd.f32 %v3900, %v3920
    %v3938 = vsel %vm3909, %v3932, -inf
    %v3939 = vmax.f32 %v3930, %v3938
    %v3940 = vrot.slane %v3939, 4
    %v3941 = vmax.f32 %v3939, %v3940
    %v3942 = vrot.slane %v3941, 2
    %v3943 = vmax.f32 %v3941, %v3942
    %v3944 = vrot.slane %v3943, 1
    %v3945 = vmax.f32 %v3943, %v3944
    %v3946 = vsel %vm3909, %v3933, -inf
    %v3947 = vmax.f32 %v3931, %v3946
    %v3948 = vrot.slane %v3947, 4
    %v3949 = vmax.f32 %v3947, %v3948
    %v3950 = vrot.slane %v3949, 2
    %v3951 = vmax.f32 %v3949, %v3950
    %v3952 = vrot.slane %v3951, 1
    %v3953 = vmax.f32 %v3951, %v3952
    %v3954 = vsel %vm3909, %v3936, -inf
    %v3955 = vmax.f32 %v3934, %v3954
    %v3956 = vrot.slane %v3955, 4
    %v3957 = vmax.f32 %v3955, %v3956
    %v3958 = vrot.slane %v3957, 2
    %v3959 = vmax.f32 %v3957, %v3958
    %v3960 = vrot.slane %v3959, 1
    %v3961 = vmax.f32 %v3959, %v3960
    %v3962 = vsel %vm3909, %v3937, -inf
    %v3963 = vmax.f32 %v3935, %v3962
    %v3964 = vrot.slane %v3963, 4
    %v3965 = vmax.f32 %v3963, %v3964
    %v3966 = vrot.slane %v3965, 2
    %v3967 = vmax.f32 %v3965, %v3966
    %v3968 = vrot.slane %v3967, 1
    %v3969 = vmax.f32 %v3967, %v3968
    %vm3974 = vcmask 1041409
    %v3975 = vsel %vm3974, %v957, %v941
    %v3976 = vsel %vm3974, %v965, %v949
    %v3983 = vsel %vm3974, %v2244, %v2228
    %v3984 = vsel %vm3974, %v2252, %v2236
    %v3991 = vsel %vm3974, %v3961, %v3945
    %v3992 = vsel %vm3974, %v3969, %v3953
    %v3995 = vld [vmem:[%s4] sm:$0x3f]
    %v3997 = vlaneseq
    %v3998 = vshrl.u32 %v3997, 7
    %v3999 = vsub.s32 0, %v3998
    %v4000 = vrot.slane %v3995, %v3999
    %v4001 = vlaneseq
    %v4002 = vshrl.u32 %v4001, 7
    %v4003 = vsub.s32 1, %v4002
    %v4004 = vrot.slane %v3995, %v4003
    %v4005 = vlaneseq
    %v4006 = vshrl.u32 %v4005, 7
    %v4007 = vsub.s32 2, %v4006
    %v4008 = vrot.slane %v3995, %v4007
    %v4009 = vlaneseq
    %v4010 = vshrl.u32 %v4009, 7
    %v4011 = vsub.s32 3, %v4010
    %v4012 = vrot.slane %v3995, %v4011
    %v4013 = vlaneseq
    %v4014 = vshrl.u32 %v4013, 7
    %v4015 = vsub.s32 4, %v4014
    %v4016 = vrot.slane %v3995, %v4015
    %v4017 = vlaneseq
    %v4018 = vshrl.u32 %v4017, 7
    %v4019 = vsub.s32 5, %v4018
    %v4020 = vrot.slane %v3995, %v4019
    %v4027 = vadd.f32 %v3975, %v4000
    %v4028 = vadd.f32 %v3976, %v4004
    %v4029 = vadd.f32 %v3983, %v4008
    %v4030 = vadd.f32 %v3984, %v4012
    %v4031 = vadd.f32 %v3991, %v4016
    %v4032 = vadd.f32 %v3992, %v4020
    %v4033 = vmax.f32 %v4027, 0.0
    %v4034 = vmax.f32 %v4028, 0.0
    %v4035 = vmax.f32 %v4029, 0.0
    %v4036 = vmax.f32 %v4030, 0.0
    %v4037 = vmax.f32 %v4031, 0.0
    %v4038 = vmax.f32 %v4032, 0.0
    %v4039 = vpack.c.bf16 %v4033, %v4033
    %v4040 = vpack.c.bf16 %v4034, %v4034
    %v4041 = vpack.c.bf16 %v4035, %v4035
    %v4042 = vpack.c.bf16 %v4036, %v4036
    %v4043 = vpack.c.bf16 %v4037, %v4037
    %v4044 = vpack.c.bf16 %v4038, %v4038
    %v4045 = vld [vmem:[%s5] sm:$0xf]
    %v4046 = vld [vmem:[%s5 + $0x4] sm:$0xf]
    %v4047 = vld [vmem:[%s5 + $0x8] sm:$0xf]
    %v4048 = vld [vmem:[%s5 + $0xc] sm:$0xf]
    %v4049 = vld [vmem:[%s5 + $0x10] sm:$0xf]
    %v4050 = vld [vmem:[%s5 + $0x14] sm:$0xf]
    %v4051 = vld [vmem:[%s5 + $0x18] sm:$0xf]
    %v4052 = vld [vmem:[%s5 + $0x1c] sm:$0xf]
    %v4053 = vld [vmem:[%s5 + $0x20] sm:$0xf]
    %v4054 = vld [vmem:[%s5 + $0x24] sm:$0xf]
    %v4055 = vld [vmem:[%s5 + $0x28] sm:$0xf]
    %v4056 = vld [vmem:[%s5 + $0x2c] sm:$0xf]
    %v4057 = vld [vmem:[%s5 + $0x30] sm:$0xf]
    %v4058 = vld [vmem:[%s5 + $0x34] sm:$0xf]
    %v4059 = vld [vmem:[%s5 + $0x38] sm:$0xf]
    %v4060 = vld [vmem:[%s5 + $0x3c] sm:$0xf]
    %v4061 = vld [vmem:[%s5 + $0x40] sm:$0xf]
    %v4062 = vld [vmem:[%s5 + $0x44] sm:$0xf]
    %v4063 = vld [vmem:[%s5 + $0x48] sm:$0xf]
    %v4064 = vld [vmem:[%s5 + $0x4c] sm:$0xf]
    %v4065 = vld [vmem:[%s5 + $0x50] sm:$0xf]
    %v4066 = vld [vmem:[%s5 + $0x54] sm:$0xf]
    %v4067 = vld [vmem:[%s5 + $0x58] sm:$0xf]
    %v4068 = vld [vmem:[%s5 + $0x5c] sm:$0xf]
    %v4069 = vld [vmem:[%s5 + $0x60] sm:$0xf]
    %v4070 = vld [vmem:[%s5 + $0x64] sm:$0xf]
    %v4071 = vld [vmem:[%s5 + $0x68] sm:$0xf]
    %v4072 = vld [vmem:[%s5 + $0x6c] sm:$0xf]
    %v4073 = vld [vmem:[%s5 + $0x70] sm:$0xf]
    %v4074 = vld [vmem:[%s5 + $0x74] sm:$0xf]
    %v4075 = vld [vmem:[%s5 + $0x78] sm:$0xf]
    %v4076 = vld [vmem:[%s5 + $0x7c] sm:$0xf]
    %v4077 = vld [vmem:[%s5 + $0x80] sm:$0xf]
    %v4078 = vld [vmem:[%s5 + $0x84] sm:$0xf]
    %v4079 = vld [vmem:[%s5 + $0x88] sm:$0xf]
    %v4080 = vld [vmem:[%s5 + $0x8c] sm:$0xf]
    %v4081 = vld [vmem:[%s5 + $0x90] sm:$0xf]
    %v4082 = vld [vmem:[%s5 + $0x94] sm:$0xf]
    %v4083 = vld [vmem:[%s5 + $0x98] sm:$0xf]
    %v4084 = vld [vmem:[%s5 + $0x9c] sm:$0xf]
    %v4085 = vld [vmem:[%s5 + $0xa0] sm:$0xf]
    %v4086 = vld [vmem:[%s5 + $0xa4] sm:$0xf]
    %v4087 = vld [vmem:[%s5 + $0xa8] sm:$0xf]
    %v4088 = vld [vmem:[%s5 + $0xac] sm:$0xf]
    %v4089 = vld [vmem:[%s5 + $0xb0] sm:$0xf]
    %v4090 = vld [vmem:[%s5 + $0xb4] sm:$0xf]
    %v4091 = vld [vmem:[%s5 + $0xb8] sm:$0xf]
    %v4092 = vld [vmem:[%s5 + $0xbc] sm:$0xf]
    %v4093 = vld [vmem:[%s5 + $0xc0] sm:$0xf]
    %v4094 = vld [vmem:[%s5 + $0xc4] sm:$0xf]
    %v4095 = vld [vmem:[%s5 + $0xc8] sm:$0xf]
    %v4096 = vld [vmem:[%s5 + $0xcc] sm:$0xf]
    %v4097 = vld [vmem:[%s5 + $0xd0] sm:$0xf]
    %v4098 = vld [vmem:[%s5 + $0xd4] sm:$0xf]
    %v4099 = vld [vmem:[%s5 + $0xd8] sm:$0xf]
    %v4100 = vld [vmem:[%s5 + $0xdc] sm:$0xf]
    %v4101 = vld [vmem:[%s5 + $0xe0] sm:$0xf]
    %v4102 = vld [vmem:[%s5 + $0xe4] sm:$0xf]
    %v4103 = vld [vmem:[%s5 + $0xe8] sm:$0xf]
    %v4104 = vld [vmem:[%s5 + $0xec] sm:$0xf]
    %v4105 = vld [vmem:[%s5 + $0xf0] sm:$0xf]
    %v4106 = vld [vmem:[%s5 + $0xf4] sm:$0xf]
    %v4107 = vld [vmem:[%s5 + $0xf8] sm:$0xf]
    %v4108 = vld [vmem:[%s5 + $0xfc] sm:$0xf]
    %v4109 = vld [vmem:[%s5 + $0x100] sm:$0xf]
    %v4110 = vld [vmem:[%s5 + $0x104] sm:$0xf]
    %v4111 = vld [vmem:[%s5 + $0x108] sm:$0xf]
    %v4112 = vld [vmem:[%s5 + $0x10c] sm:$0xf]
    %v4113 = vld [vmem:[%s5 + $0x110] sm:$0xf]
    %v4114 = vld [vmem:[%s5 + $0x114] sm:$0xf]
    %v4115 = vld [vmem:[%s5 + $0x118] sm:$0xf]
    %v4116 = vld [vmem:[%s5 + $0x11c] sm:$0xf]
    %v4117 = vld [vmem:[%s5 + $0x120] sm:$0xf]
    %v4118 = vld [vmem:[%s5 + $0x124] sm:$0xf]
    %v4119 = vld [vmem:[%s5 + $0x128] sm:$0xf]
    %v4120 = vld [vmem:[%s5 + $0x12c] sm:$0xf]
    %v4121 = vld [vmem:[%s5 + $0x130] sm:$0xf]
    %v4122 = vld [vmem:[%s5 + $0x134] sm:$0xf]
    %v4123 = vld [vmem:[%s5 + $0x138] sm:$0xf]
    %v4124 = vld [vmem:[%s5 + $0x13c] sm:$0xf]
    %v4125 = vld [vmem:[%s5 + $0x140] sm:$0xf]
    %v4126 = vld [vmem:[%s5 + $0x144] sm:$0xf]
    %v4127 = vld [vmem:[%s5 + $0x148] sm:$0xf]
    %v4128 = vld [vmem:[%s5 + $0x14c] sm:$0xf]
    %v4129 = vld [vmem:[%s5 + $0x150] sm:$0xf]
    %v4130 = vld [vmem:[%s5 + $0x154] sm:$0xf]
    %v4131 = vld [vmem:[%s5 + $0x158] sm:$0xf]
    %v4132 = vld [vmem:[%s5 + $0x15c] sm:$0xf]
    %v4133 = vld [vmem:[%s5 + $0x160] sm:$0xf]
    %v4134 = vld [vmem:[%s5 + $0x164] sm:$0xf]
    %v4135 = vld [vmem:[%s5 + $0x168] sm:$0xf]
    %v4136 = vld [vmem:[%s5 + $0x16c] sm:$0xf]
    %v4137 = vld [vmem:[%s5 + $0x170] sm:$0xf]
    %v4138 = vld [vmem:[%s5 + $0x174] sm:$0xf]
    %v4139 = vld [vmem:[%s5 + $0x178] sm:$0xf]
    %v4140 = vld [vmem:[%s5 + $0x17c] sm:$0xf]
    %v4141 = vld [vmem:[%s6] sm:$0x1]
    %v4143 = vlaneseq
    %v4144 = vshrl.u32 %v4143, 7
    %v4145 = vsub.s32 0, %v4144
    %v4146 = vrot.slane %v4141, %v4145
    %v4244 = vunpack.c.l.b16 %v4045
    %v4245 = vunpack.c.l.b16 %v4046
    %v4246 = vunpack.c.l.b16 %v4047
    %v4247 = vunpack.c.l.b16 %v4048
    %v4248 = vunpack.c.l.b16 %v4049
    %v4249 = vunpack.c.l.b16 %v4050
    %v4250 = vunpack.c.l.b16 %v4051
    %v4251 = vunpack.c.l.b16 %v4052
    %v4252 = vunpack.c.l.b16 %v4053
    %v4253 = vunpack.c.l.b16 %v4054
    %v4254 = vunpack.c.l.b16 %v4055
    %v4255 = vunpack.c.l.b16 %v4056
    %v4256 = vunpack.c.l.b16 %v4057
    %v4257 = vunpack.c.l.b16 %v4058
    %v4258 = vunpack.c.l.b16 %v4059
    %v4259 = vunpack.c.l.b16 %v4060
    %v4260 = vunpack.c.l.b16 %v4061
    %v4261 = vunpack.c.l.b16 %v4062
    %v4262 = vunpack.c.l.b16 %v4063
    %v4263 = vunpack.c.l.b16 %v4064
    %v4264 = vunpack.c.l.b16 %v4065
    %v4265 = vunpack.c.l.b16 %v4066
    %v4266 = vunpack.c.l.b16 %v4067
    %v4267 = vunpack.c.l.b16 %v4068
    %v4268 = vunpack.c.l.b16 %v4069
    %v4269 = vunpack.c.l.b16 %v4070
    %v4270 = vunpack.c.l.b16 %v4071
    %v4271 = vunpack.c.l.b16 %v4072
    %v4272 = vunpack.c.l.b16 %v4073
    %v4273 = vunpack.c.l.b16 %v4074
    %v4274 = vunpack.c.l.b16 %v4075
    %v4275 = vunpack.c.l.b16 %v4076
    %v4276 = vunpack.c.l.b16 %v4077
    %v4277 = vunpack.c.l.b16 %v4078
    %v4278 = vunpack.c.l.b16 %v4079
    %v4279 = vunpack.c.l.b16 %v4080
    %v4280 = vunpack.c.l.b16 %v4081
    %v4281 = vunpack.c.l.b16 %v4082
    %v4282 = vunpack.c.l.b16 %v4083
    %v4283 = vunpack.c.l.b16 %v4084
    %v4284 = vunpack.c.l.b16 %v4085
    %v4285 = vunpack.c.l.b16 %v4086
    %v4286 = vunpack.c.l.b16 %v4087
    %v4287 = vunpack.c.l.b16 %v4088
    %v4288 = vunpack.c.l.b16 %v4089
    %v4289 = vunpack.c.l.b16 %v4090
    %v4290 = vunpack.c.l.b16 %v4091
    %v4291 = vunpack.c.l.b16 %v4092
    %v4292 = vunpack.c.l.b16 %v4093
    %v4293 = vunpack.c.l.b16 %v4094
    %v4294 = vunpack.c.l.b16 %v4095
    %v4295 = vunpack.c.l.b16 %v4096
    %v4296 = vunpack.c.l.b16 %v4097
    %v4297 = vunpack.c.l.b16 %v4098
    %v4298 = vunpack.c.l.b16 %v4099
    %v4299 = vunpack.c.l.b16 %v4100
    %v4300 = vunpack.c.l.b16 %v4101
    %v4301 = vunpack.c.l.b16 %v4102
    %v4302 = vunpack.c.l.b16 %v4103
    %v4303 = vunpack.c.l.b16 %v4104
    %v4304 = vunpack.c.l.b16 %v4105
    %v4305 = vunpack.c.l.b16 %v4106
    %v4306 = vunpack.c.l.b16 %v4107
    %v4307 = vunpack.c.l.b16 %v4108
    %v4308 = vunpack.c.l.b16 %v4109
    %v4309 = vunpack.c.l.b16 %v4110
    %v4310 = vunpack.c.l.b16 %v4111
    %v4311 = vunpack.c.l.b16 %v4112
    %v4312 = vunpack.c.l.b16 %v4113
    %v4313 = vunpack.c.l.b16 %v4114
    %v4314 = vunpack.c.l.b16 %v4115
    %v4315 = vunpack.c.l.b16 %v4116
    %v4316 = vunpack.c.l.b16 %v4117
    %v4317 = vunpack.c.l.b16 %v4118
    %v4318 = vunpack.c.l.b16 %v4119
    %v4319 = vunpack.c.l.b16 %v4120
    %v4320 = vunpack.c.l.b16 %v4121
    %v4321 = vunpack.c.l.b16 %v4122
    %v4322 = vunpack.c.l.b16 %v4123
    %v4323 = vunpack.c.l.b16 %v4124
    %v4324 = vunpack.c.l.b16 %v4125
    %v4325 = vunpack.c.l.b16 %v4126
    %v4326 = vunpack.c.l.b16 %v4127
    %v4327 = vunpack.c.l.b16 %v4128
    %v4328 = vunpack.c.l.b16 %v4129
    %v4329 = vunpack.c.l.b16 %v4130
    %v4330 = vunpack.c.l.b16 %v4131
    %v4331 = vunpack.c.l.b16 %v4132
    %v4332 = vunpack.c.l.b16 %v4133
    %v4333 = vunpack.c.l.b16 %v4134
    %v4334 = vunpack.c.l.b16 %v4135
    %v4335 = vunpack.c.l.b16 %v4136
    %v4336 = vunpack.c.l.b16 %v4137
    %v4337 = vunpack.c.l.b16 %v4138
    %v4338 = vunpack.c.l.b16 %v4139
    %v4339 = vunpack.c.l.b16 %v4140
    %v4340 = vpack.c.b16 %v4245, %v4244
    %v4341 = vpack.c.b16 %v4247, %v4246
    %v4342 = vpack.c.b16 %v4249, %v4248
    %v4343 = vpack.c.b16 %v4251, %v4250
    %v4344 = vpack.c.b16 %v4253, %v4252
    %v4345 = vpack.c.b16 %v4255, %v4254
    %v4346 = vpack.c.b16 %v4257, %v4256
    %v4347 = vpack.c.b16 %v4259, %v4258
    %v4348 = vpack.c.b16 %v4261, %v4260
    %v4349 = vpack.c.b16 %v4263, %v4262
    %v4350 = vpack.c.b16 %v4265, %v4264
    %v4351 = vpack.c.b16 %v4267, %v4266
    %v4352 = vpack.c.b16 %v4269, %v4268
    %v4353 = vpack.c.b16 %v4271, %v4270
    %v4354 = vpack.c.b16 %v4273, %v4272
    %v4355 = vpack.c.b16 %v4275, %v4274
    %v4356 = vpack.c.b16 %v4277, %v4276
    %v4357 = vpack.c.b16 %v4279, %v4278
    %v4358 = vpack.c.b16 %v4281, %v4280
    %v4359 = vpack.c.b16 %v4283, %v4282
    %v4360 = vpack.c.b16 %v4285, %v4284
    %v4361 = vpack.c.b16 %v4287, %v4286
    %v4362 = vpack.c.b16 %v4289, %v4288
    %v4363 = vpack.c.b16 %v4291, %v4290
    %v4364 = vpack.c.b16 %v4293, %v4292
    %v4365 = vpack.c.b16 %v4295, %v4294
    %v4366 = vpack.c.b16 %v4297, %v4296
    %v4367 = vpack.c.b16 %v4299, %v4298
    %v4368 = vpack.c.b16 %v4301, %v4300
    %v4369 = vpack.c.b16 %v4303, %v4302
    %v4370 = vpack.c.b16 %v4305, %v4304
    %v4371 = vpack.c.b16 %v4307, %v4306
    %v4372 = vpack.c.b16 %v4309, %v4308
    %v4373 = vpack.c.b16 %v4311, %v4310
    %v4374 = vpack.c.b16 %v4313, %v4312
    %v4375 = vpack.c.b16 %v4315, %v4314
    %v4376 = vpack.c.b16 %v4317, %v4316
    %v4377 = vpack.c.b16 %v4319, %v4318
    %v4378 = vpack.c.b16 %v4321, %v4320
    %v4379 = vpack.c.b16 %v4323, %v4322
    %v4380 = vpack.c.b16 %v4325, %v4324
    %v4381 = vpack.c.b16 %v4327, %v4326
    %v4382 = vpack.c.b16 %v4329, %v4328
    %v4383 = vpack.c.b16 %v4331, %v4330
    %v4384 = vpack.c.b16 %v4333, %v4332
    %v4385 = vpack.c.b16 %v4335, %v4334
    %v4386 = vpack.c.b16 %v4337, %v4336
    %v4387 = vpack.c.b16 %v4339, %v4338
    %4436 = vmatprep.subr.bf16.mxu0 0
    %4437 = vmatpush1.bf16.msra.mxu0 %v4340
    %4438 = vmatprep.subr.bf16.mxu0 0
    %4439 = vmatpush1.bf16.msra.mxu0 %v4341
    %4440 = vmatprep.subr.bf16.mxu0 0
    %4441 = vmatpush1.bf16.msra.mxu0 %v4342
    %4442 = vmatprep.subr.bf16.mxu0 0
    %4443 = vmatpush1.bf16.msra.mxu0 %v4343
    %4444 = vmatprep.subr.bf16.mxu0 0
    %4445 = vmatpush1.bf16.msra.mxu0 %v4344
    %4446 = vmatprep.subr.bf16.mxu0 0
    %4447 = vmatpush1.bf16.msra.mxu0 %v4345
    %4448 = vmatprep.subr.bf16.mxu0 0
    %4449 = vmatpush1.bf16.msra.mxu0 %v4346
    %4450 = vmatprep.subr.bf16.mxu0 0
    %4451 = vmatpush1.bf16.msra.mxu0 %v4347
    %4452 = vmatprep.subr.bf16.mxu0 0
    %4453 = vmatpush1.bf16.msra.mxu0 %v4348
    %4454 = vmatprep.subr.bf16.mxu0 0
    %4455 = vmatpush1.bf16.msra.mxu0 %v4349
    %4456 = vmatprep.subr.bf16.mxu0 0
    %4457 = vmatpush1.bf16.msra.mxu0 %v4350
    %4458 = vmatprep.subr.bf16.mxu0 0
    %4459 = vmatpush1.bf16.msra.mxu0 %v4351
    %4460 = vmatprep.subr.bf16.mxu0 0
    %4461 = vmatpush1.bf16.msra.mxu0 %v4352
    %4462 = vmatprep.subr.bf16.mxu0 0
    %4463 = vmatpush1.bf16.msra.mxu0 %v4353
    %4464 = vmatprep.subr.bf16.mxu0 0
    %4465 = vmatpush1.bf16.msra.mxu0 %v4354
    %4466 = vmatprep.subr.bf16.mxu0 0
    %4467 = vmatpush1.bf16.msra.mxu0 %v4355
    %4468 = vmatprep.mubr.bf16.mxu0 %v4040
    %4469 = vmatmul.mubr.bf16.gmra.mrb[0].mxu0 %v4039
    %v4470 = vpop.f32.mrb[0].mxu0
    %v4471 = vadd.f32 %v4146, %v4470
    %v4472 = vpop.f32.mrb[0].mxu0
    %v4473 = vpop.f32.mrb[0].mxu0
    %v4474 = vpop.f32.mrb[0].mxu0
    %4475 = vdwg.mxu0
    %4476 = vmatprep.subr.bf16.mxu0 0
    %4477 = vmatpush1.bf16.msra.mxu0 %v4356
    %4478 = vmatprep.subr.bf16.mxu0 0
    %4479 = vmatpush1.bf16.msra.mxu0 %v4357
    %4480 = vmatprep.subr.bf16.mxu0 0
    %4481 = vmatpush1.bf16.msra.mxu0 %v4358
    %4482 = vmatprep.subr.bf16.mxu0 0
    %4483 = vmatpush1.bf16.msra.mxu0 %v4359
    %4484 = vmatprep.subr.bf16.mxu0 0
    %4485 = vmatpush1.bf16.msra.mxu0 %v4360
    %4486 = vmatprep.subr.bf16.mxu0 0
    %4487 = vmatpush1.bf16.msra.mxu0 %v4361
    %4488 = vmatprep.subr.bf16.mxu0 0
    %4489 = vmatpush1.bf16.msra.mxu0 %v4362
    %4490 = vmatprep.subr.bf16.mxu0 0
    %4491 = vmatpush1.bf16.msra.mxu0 %v4363
    %4492 = vmatprep.subr.bf16.mxu0 0
    %4493 = vmatpush1.bf16.msra.mxu0 %v4364
    %4494 = vmatprep.subr.bf16.mxu0 0
    %4495 = vmatpush1.bf16.msra.mxu0 %v4365
    %4496 = vmatprep.subr.bf16.mxu0 0
    %4497 = vmatpush1.bf16.msra.mxu0 %v4366
    %4498 = vmatprep.subr.bf16.mxu0 0
    %4499 = vmatpush1.bf16.msra.mxu0 %v4367
    %4500 = vmatprep.subr.bf16.mxu0 0
    %4501 = vmatpush1.bf16.msra.mxu0 %v4368
    %4502 = vmatprep.subr.bf16.mxu0 0
    %4503 = vmatpush1.bf16.msra.mxu0 %v4369
    %4504 = vmatprep.subr.bf16.mxu0 0
    %4505 = vmatpush1.bf16.msra.mxu0 %v4370
    %4506 = vmatprep.subr.bf16.mxu0 0
    %4507 = vmatpush1.bf16.msra.mxu0 %v4371
    %4508 = vmatprep.mubr.bf16.mxu0 %v4042
    %4509 = vmatmul.mubr.bf16.gmra.mrb[0].mxu0 %v4041
    %v4510 = vpop.f32.mrb[0].mxu0
    %v4511 = vadd.f32 %v4471, %v4510
    %v4512 = vpop.f32.mrb[0].mxu0
    %v4513 = vpop.f32.mrb[0].mxu0
    %v4514 = vpop.f32.mrb[0].mxu0
    %4515 = vdwg.mxu0
    %4516 = vmatprep.subr.bf16.mxu0 0
    %4517 = vmatpush1.bf16.msra.mxu0 %v4372
    %4518 = vmatprep.subr.bf16.mxu0 0
    %4519 = vmatpush1.bf16.msra.mxu0 %v4373
    %4520 = vmatprep.subr.bf16.mxu0 0
    %4521 = vmatpush1.bf16.msra.mxu0 %v4374
    %4522 = vmatprep.subr.bf16.mxu0 0
    %4523 = vmatpush1.bf16.msra.mxu0 %v4375
    %4524 = vmatprep.subr.bf16.mxu0 0
    %4525 = vmatpush1.bf16.msra.mxu0 %v4376
    %4526 = vmatprep.subr.bf16.mxu0 0
    %4527 = vmatpush1.bf16.msra.mxu0 %v4377
    %4528 = vmatprep.subr.bf16.mxu0 0
    %4529 = vmatpush1.bf16.msra.mxu0 %v4378
    %4530 = vmatprep.subr.bf16.mxu0 0
    %4531 = vmatpush1.bf16.msra.mxu0 %v4379
    %4532 = vmatprep.subr.bf16.mxu0 0
    %4533 = vmatpush1.bf16.msra.mxu0 %v4380
    %4534 = vmatprep.subr.bf16.mxu0 0
    %4535 = vmatpush1.bf16.msra.mxu0 %v4381
    %4536 = vmatprep.subr.bf16.mxu0 0
    %4537 = vmatpush1.bf16.msra.mxu0 %v4382
    %4538 = vmatprep.subr.bf16.mxu0 0
    %4539 = vmatpush1.bf16.msra.mxu0 %v4383
    %4540 = vmatprep.subr.bf16.mxu0 0
    %4541 = vmatpush1.bf16.msra.mxu0 %v4384
    %4542 = vmatprep.subr.bf16.mxu0 0
    %4543 = vmatpush1.bf16.msra.mxu0 %v4385
    %4544 = vmatprep.subr.bf16.mxu0 0
    %4545 = vmatpush1.bf16.msra.mxu0 %v4386
    %4546 = vmatprep.subr.bf16.mxu0 0
    %4547 = vmatpush1.bf16.msra.mxu0 %v4387
    %4548 = vmatprep.mubr.bf16.mxu0 %v4044
    %4549 = vmatmul.mubr.bf16.gmra.mrb[0].mxu0 %v4043
    %v4550 = vpop.f32.mrb[0].mxu0
    %v4551 = vadd.f32 %v4511, %v4550
    %v4552 = vpop.f32.mrb[0].mxu0
    %v4553 = vpop.f32.mrb[0].mxu0
    %v4554 = vpop.f32.mrb[0].mxu0
    %4555 = vdwg.mxu0
    %4556 = vst [vmem:[#allocation8] sm:$0x3] %v4551
    // Predicated region
    $region42: #{textcnn_forward.1} parent=1 // pred_check
      _
    $region43: #{textcnn_forward.1} parent=1 // pred_check_branch
      %4558 = sbr.rel (0) target = $region45
    $region44: #{textcnn_forward.1} parent=1 // pred_region
      %s4560 = ssub.s32 32, 32
      %4561 = vsyncadd [#allocation4], %s4560
      %s4563 = sshll.u32 [#allocation8], 4
      %s4564 = int_to_ptr.vmem [resolvable:$true] %s4563
      %4566 = dma.vmem_to_hbm [thread:$0]  %s4564, 32, %s7, [#allocation4]
    $region45: #{textcnn_forward.1} parent=1 // pred_fallthru
      _
    // Predicated region
    $region46: #{textcnn_forward.1} parent=1 // pred_check
      _
    $region47: #{textcnn_forward.1} parent=1 // pred_check_branch
      %4568 = sbr.rel (0) target = $region49
    $region48: #{textcnn_forward.1} parent=1 // pred_region
      %4569 = dma.done [#allocation4], 32
    $region49: #{textcnn_forward.1} parent=1 // pred_fallthru
      _
    %4570 = vsyncpa [#allocation3], 1
    %4571 = vsyncpa [#allocation6], 1
    %4572 = vsyncpa [#allocation4], 1

</llo_original>
